<compile_context>
chip_gen: v6e
topology: v6e:2x2x1
jax: 0.10.0
libtpu: 0.0.40
codegen_flags: <defaults>
</compile_context>

<pallas_src>
import collections
import functools
import math

import jax
import jax.numpy as jnp
from jax.experimental import pallas as pl
from jax.experimental.pallas import tpu as pltpu


LayerSpec = collections.namedtuple(
    "LayerSpec", ["K", "cin", "cout", "crow", "row", "b", "s", "h", "elu"])


# ---------------------------------------------------------------------------
# In-kernel helpers
# ---------------------------------------------------------------------------
def _elu(x):
    # ELU(alpha=1): x for x>0 else exp(x)-1 (clamp arg so the unselected
    # branch of the where cannot overflow).
    return jnp.where(x > 0, x, jnp.exp(jnp.minimum(x, 0.0)) - 1.0)


def _seq2seq_kernel(tidx_ref, x_ref, wtab_ref, vec_ref, o_ref, *,
                    L, layers, matmul_dtype):
    """Whole forward pass on one (C, N=TB*L) channels-major tile."""
    N = x_ref.shape[-1]
    tidx = tidx_ref[...]                      # (1, N) int32, value = n mod L
    y = x_ref[...].astype(jnp.float32)        # (Cin0, N)

    # Boundary masks, shared across layers (shift s reads y[:, n + s]; lanes
    # whose time index t = n mod L leaves [0, L) must read zero).
    max_p = max((spec.K - 1) // 2 for spec in layers)
    masks = {}
    for s in range(-max_p, max_p + 1):
        if s > 0:
            masks[s] = tidx < (L - s)
        elif s < 0:
            masks[s] = tidx >= (-s)

    def conv_layer(y, spec):
        K, cin, cout = spec.K, spec.cin, spec.cout
        P = (K - 1) // 2
        zp = jnp.zeros((cin, P), jnp.float32)
        yp = jnp.concatenate([zp, y, zp], axis=1)          # (cin, N + 2P)
        acc = None
        for k in range(K):                                  # K thin matmuls
            s = k - P
            xk = yp[:, k:k + N]                             # == y[:, n + s]
            if s != 0:
                xk = jnp.where(masks[s], xk, 0.0)           # batch boundaries
            r0 = spec.row + k * spec.crow
            wk = wtab_ref[r0:r0 + cout, 0:cin]              # (cout, cin)
            term = jnp.dot(wk.astype(matmul_dtype), xk.astype(matmul_dtype),
                           preferred_element_type=jnp.float32)
            acc = term if acc is None else acc + term
        bias = vec_ref[0:cout, spec.b:spec.b + 1]           # (cout, 1)
        return acc + bias

    for spec in layers:
        y = conv_layer(y, spec)
        if spec.elu:
            y = _elu(y)
        if spec.s >= 0:                                     # eval-mode BN1d
            sc = vec_ref[0:spec.cout, spec.s:spec.s + 1]
            sh = vec_ref[0:spec.cout, spec.h:spec.h + 1]
            y = y * sc + sh
    o_ref[...] = y.astype(o_ref.dtype)


# ---------------------------------------------------------------------------
# Wrapper
# ---------------------------------------------------------------------------
def trajectory_seq2seq(x_ncl, wtab, vec_tab, layers, *, block_b=None,
                       target_lanes=4096, matmul_dtype=jnp.float32):
    """x_ncl: (B, embedding_size, L) -> (B, n_classes, L), matching PyTorch."""
    B, E, L = x_ncl.shape
    assert layers[0].cin == E, (layers[0].cin, E)
    n_classes = layers[-1].cout

    x_ncl = x_ncl.astype(jnp.float32)

    # --- batch tile: N = TB*L lane-dense (multiple of 128), ~target_lanes ---
    tb_unit = 128 // math.gcd(128, L)          # smallest TB with TB*L % 128 == 0
    if block_b is None:
        cap = max(tb_unit, (target_lanes // max(L, 1)) // tb_unit * tb_unit)
        tb = min(pl.cdiv(B, tb_unit) * tb_unit, cap)
        # v7x has two TensorCores: prefer >= 2 grid steps when batch allows.
        if pl.cdiv(B, tb) == 1 and tb > tb_unit:
            half = max(tb_unit, pl.cdiv(pl.cdiv(B, 2), tb_unit) * tb_unit)
            if pl.cdiv(B, half) >= 2:
                tb = half
    else:
        tb = pl.cdiv(max(block_b, 1), tb_unit) * tb_unit
    N = tb * L
    Bpad = pl.cdiv(B, tb) * tb
    nblk = Bpad // tb

    if Bpad != B:
        x_ncl = jnp.pad(x_ncl, ((0, Bpad - B), (0, 0), (0, 0)))

    # Channels-major with batch*time flattened onto lanes.  One XLA transpose
    # (the reshape is free); everything inside the kernel is then lane-dense.
    x_cm = jnp.transpose(x_ncl, (1, 0, 2)).reshape(E, Bpad * L)
    tidx = (jnp.arange(N, dtype=jnp.int32) % L).reshape(1, N)

    kernel = functools.partial(_seq2seq_kernel, L=L, layers=layers,
                               matmul_dtype=matmul_dtype)
    out_cm = pl.pallas_call(
        kernel,
        grid=(nblk,),
        in_specs=[
            pl.BlockSpec((1, N), lambda b: (0, 0)),          # t = n mod L (grid-invariant)
            pl.BlockSpec((E, N), lambda b: (0, b)),          # activations
            pl.BlockSpec(wtab.shape, lambda b: (0, 0)),      # packed conv weights
            pl.BlockSpec(vec_tab.shape, lambda b: (0, 0)),   # biases + BN affine
        ],
        out_specs=pl.BlockSpec((n_classes, N), lambda b: (0, b)),
        out_shape=jax.ShapeDtypeStruct((n_classes, Bpad * L), jnp.float32),
        compiler_params=pltpu.CompilerParams(
            dimension_semantics=("parallel",),   # batch blocks are independent
            vmem_limit_bytes=48 * 1024 * 1024,   # <= v7x 64 MiB physical
        ),
    )(tidx, x_cm, wtab, vec_tab)

    out = out_cm.reshape(n_classes, Bpad, L)[:, :B, :]
    return jnp.transpose(out, (1, 0, 2))         # (B, n_classes, L)


# ---------------------------------------------------------------------------
# Parameter construction (deterministic, PyTorch-equivalent shapes)
# ---------------------------------------------------------------------------
def make_params(key, embedding_size, n_classes):
    """Raw parameters: (w(K,Cin,Cout), b(1,Cout)) x6 plus eval-mode BatchNorm
    (scale, shift) pairs after convs 1..4."""
    conv_shapes = [  # (K, Cin, Cout)
        (5, embedding_size, 32),
        (5, 32, 32),
        (5, 32, 32),
        (3, 32, 16),
        (3, 16, 8),
        (3, 8, n_classes),
    ]
    bn_channels = [None, 32, 32, 16, 8, None]
    eps = 1e-5

    params = []
    for i, (K, cin, cout) in enumerate(conv_shapes):
        key, kw, kb = jax.random.split(key, 3)
        w = 0.1 * jax.random.normal(kw, (K, cin, cout), jnp.float32)
        b = 0.01 * jax.random.normal(kb, (1, cout), jnp.float32)
        params += [w, b]
        if bn_channels[i] is not None:
            C = bn_channels[i]
            key, k1, k2, k3, k4 = jax.random.split(key, 5)
            gamma = 1.0 + 0.1 * jax.random.normal(k1, (1, C), jnp.float32)
            beta = 0.1 * jax.random.normal(k2, (1, C), jnp.float32)
            rmean = 0.1 * jax.random.normal(k3, (1, C), jnp.float32)
            rvar = 1.0 + 0.1 * jnp.abs(jax.random.normal(k4, (1, C), jnp.float32))
            scale = gamma / jnp.sqrt(rvar + eps)
            shift = beta - rmean * scale
            params += [scale, shift]
    return tuple(params)


def pack_params(raw):
    """Host-side prep.

    * Weight table: rows = [layer][tap][cout] with each tap block padded to a
      multiple of 8 rows, cols = Cin (padded to Cin_max); entry
      wtab[row+k*crow+co, ci] = w_raw[k, ci, co].
    * Vec table: one column per per-channel vector (bias / BN scale / shift),
      channel index on rows so it broadcasts over the lane (time) axis.
    """
    (w0, b0,
     w1, b1, s1, h1,
     w2, b2, s2, h2,
     w3, b3, s3, h3,
     w4, b4, s4, h4,
     w5, b5) = raw
    convs = [(w0, b0, None, None), (w1, b1, s1, h1), (w2, b2, s2, h2),
             (w3, b3, s3, h3), (w4, b4, s4, h4), (w5, b5, None, None)]

    cin_max = max(w.shape[1] for w, *_ in convs)
    cout_max = max(w.shape[2] for w, *_ in convs)

    wt_blocks, vec_cols, layers = [], [], []
    row = 0
    for i, (w, b, s, h) in enumerate(convs):
        K, cin, cout = w.shape
        crow = ((cout + 7) // 8) * 8                    # 8-aligned tap blocks
        blk = jnp.zeros((K * crow, cin_max), jnp.float32)
        wt = jnp.transpose(w, (0, 2, 1))                # (K, cout, cin)
        for k in range(K):
            blk = blk.at[k * crow:k * crow + cout, :cin].set(wt[k])
        wt_blocks.append(blk)

        def add_col(v):
            col = jnp.zeros((cout_max,), jnp.float32).at[:v.shape[1]].set(v[0])
            vec_cols.append(col)
            return len(vec_cols) - 1

        b_col = add_col(b)
        s_col = add_col(s) if s is not None else -1
        h_col = add_col(h) if h is not None else -1
        layers.append(LayerSpec(K=K, cin=cin, cout=cout, crow=crow, row=row,
                                b=b_col, s=s_col, h=h_col,
                                elu=(i < len(convs) - 1)))
        row += K * crow

    wtab = jnp.concatenate(wt_blocks, axis=0)           # (sum K*crow, cin_max)
    vec_tab = jnp.stack(vec_cols, axis=1)               # (cout_max, n_vecs)
    return wtab, vec_tab, tuple(layers)


# ---------------------------------------------------------------------------
# Pure-JAX reference on the raw (un-packed) params
# ---------------------------------------------------------------------------
def _conv1d_same_ref(x, w, b):
    K = w.shape[0]
    P = (K - 1) // 2
    L = x.shape[0]
    zpad = jnp.zeros((P, x.shape[1]), x.dtype)
    xp = jnp.concatenate([zpad, x, zpad], axis=0)
    out = jnp.zeros((L, w.shape[2]), jnp.float32)
    for k in range(K):
        out = out + jnp.dot(xp[k:k + L, :], w[k],
                            preferred_element_type=jnp.float32)
    return out + b


def _forward_single_ref(x, raw):
    (w0, b0,
     w1, b1, s1, h1,
     w2, b2, s2, h2,
     w3, b3, s3, h3,
     w4, b4, s4, h4,
     w5, b5) = raw
    y = _elu(_conv1d_same_ref(x, w0, b0))
    y = _elu(_conv1d_same_ref(y, w1, b1))
    y = y * s1 + h1
    y = _elu(_conv1d_same_ref(y, w2, b2))
    y = y * s2 + h2
    y = _elu(_conv1d_same_ref(y, w3, b3))
    y = y * s3 + h3
    y = _elu(_conv1d_same_ref(y, w4, b4))
    y = y * s4 + h4
    return _conv1d_same_ref(y, w5, b5)


if __name__ == "__main__":
    batch = 2
    embedding_size = 8
    sequence_size = 16
    n_classes = 4

    key = jax.random.PRNGKey(0)
    key, kx, kp = jax.random.split(key, 3)
    x = jax.random.normal(kx, (batch, embedding_size, sequence_size), jnp.float32)
    raw = make_params(kp, embedding_size, n_classes)
    wtab, vec_tab, layers = pack_params(raw)

    out = trajectory_seq2seq(x, wtab, vec_tab, layers)   # f32 matmuls (exact path)
    out = jax.block_until_ready(out)
    assert out.shape == (batch, n_classes, sequence_size), out.shape

    # Independent pure-JAX reference on the raw (un-packed) params.
    x_blc = jnp.transpose(x, (0, 2, 1))
    ref = jax.vmap(lambda xi: _forward_single_ref(xi, raw))(x_blc)
    ref = jnp.transpose(ref, (0, 2, 1))
    assert jnp.allclose(out, ref, rtol=1e-4, atol=1e-4), float(
        jnp.max(jnp.abs(out - ref))
    )

    print("KERNEL_OK")
</pallas_src>

<mosaic_0001>
module attributes {stable_mosaic.version = 11 : i64} {
  func.func @_seq2seq_kernel(%arg0: i32, %arg1: memref<1x128xi32, #tpu.memory_space<vmem>>, %arg2: memref<8x128xf32, #tpu.memory_space<vmem>>, %arg3: memref<576x32xf32, #tpu.memory_space<vmem>>, %arg4: memref<32x14xf32, #tpu.memory_space<vmem>>, %arg5: memref<4x128xf32, #tpu.memory_space<vmem>>) attributes {dimension_semantics = [#tpu.dimension_semantics<parallel>], iteration_bounds = array<i64: 1>, scalar_prefetch = 0 : i64, scratch_operands = 0 : i64, tpu.core_type = #tpu.core_type<tc>, window_params = [{pipeline_mode = #tpu.pipeline_mode<synchronous>, transform_indices = @transform_0, window_bounds = array<i64: 1, 128>}, {transform_indices = @transform_1, window_bounds = array<i64: 8, 128>}, {pipeline_mode = #tpu.pipeline_mode<synchronous>, transform_indices = @transform_2, window_bounds = array<i64: 576, 32>}, {pipeline_mode = #tpu.pipeline_mode<synchronous>, transform_indices = @transform_3, window_bounds = array<i64: 32, 14>}, {transform_indices = @transform_4, window_bounds = array<i64: 4, 128>}]} {
    %c0 = arith.constant 0 : index
    %c0_0 = arith.constant 0 : index
    %0 = vector.load %arg1[%c0, %c0_0] : memref<1x128xi32, #tpu.memory_space<vmem>>, vector<1x128xi32>
    %c0_1 = arith.constant 0 : index
    %c0_2 = arith.constant 0 : index
    %1 = vector.load %arg2[%c0_1, %c0_2] : memref<8x128xf32, #tpu.memory_space<vmem>>, vector<8x128xf32>
    %c2_i32 = arith.constant 2 : i32
    %2 = vector.broadcast %c2_i32 : i32 to vector<1x128xi32>
    %3 = arith.cmpi sge, %0, %2 : vector<1x128xi32>
    %c1_i32 = arith.constant 1 : i32
    %4 = vector.broadcast %c1_i32 : i32 to vector<1x128xi32>
    %5 = arith.cmpi sge, %0, %4 : vector<1x128xi32>
    %c15_i32 = arith.constant 15 : i32
    %6 = vector.broadcast %c15_i32 : i32 to vector<1x128xi32>
    %7 = arith.cmpi slt, %0, %6 : vector<1x128xi32>
    %c14_i32 = arith.constant 14 : i32
    %8 = vector.broadcast %c14_i32 : i32 to vector<1x128xi32>
    %9 = arith.cmpi slt, %0, %8 : vector<1x128xi32>
    %cst = arith.constant 0.000000e+00 : f32
    %10 = vector.broadcast %cst : f32 to vector<8x2xf32>
    %11 = tpu.concatenate %10, %1, %10 in 1 : vector<8x2xf32>, vector<8x128xf32>, vector<8x2xf32> -> vector<8x132xf32>
    %12 = vector.extract_strided_slice %11 {offsets = [0, 0], sizes = [8, 128], strides = [1, 1]} : vector<8x132xf32> to vector<8x128xf32>
    %cst_3 = arith.constant 0.000000e+00 : f32
    %13 = vector.shape_cast %3 : vector<1x128xi1> to vector<1x128xi1>
    %14 = vector.broadcast %13 : vector<1x128xi1> to vector<8x128xi1>
    %15 = vector.broadcast %cst_3 : f32 to vector<8x128xf32>
    %16 = arith.select %14, %12, %15 : vector<8x128xi1>, vector<8x128xf32>
    %c0_4 = arith.constant 0 : index
    %c0_5 = arith.constant 0 : index
    %17 = vector.load %arg3[%c0_4, %c0_5] : memref<576x32xf32, #tpu.memory_space<vmem>>, vector<32x8xf32>
    %cst_6 = arith.constant dense<0.000000e+00> : vector<32x128xf32>
    %18 = tpu.matmul %17, %16, %cst_6 {dimension_numbers = #tpu.dot_dimension_numbers<[1], [0], [0], [1], [0, 0, 1, 1], [], []>} : vector<32x8xf32>, vector<8x128xf32>, vector<32x128xf32> -> vector<32x128xf32>
    %19 = vector.extract_strided_slice %11 {offsets = [0, 1], sizes = [8, 128], strides = [1, 1]} : vector<8x132xf32> to vector<8x128xf32>
    %cst_7 = arith.constant 0.000000e+00 : f32
    %20 = vector.shape_cast %5 : vector<1x128xi1> to vector<1x128xi1>
    %21 = vector.broadcast %20 : vector<1x128xi1> to vector<8x128xi1>
    %22 = vector.broadcast %cst_7 : f32 to vector<8x128xf32>
    %23 = arith.select %21, %19, %22 : vector<8x128xi1>, vector<8x128xf32>
    %c32 = arith.constant 32 : index
    %c0_8 = arith.constant 0 : index
    %24 = vector.load %arg3[%c32, %c0_8] : memref<576x32xf32, #tpu.memory_space<vmem>>, vector<32x8xf32>
    %cst_9 = arith.constant dense<0.000000e+00> : vector<32x128xf32>
    %25 = tpu.matmul %24, %23, %cst_9 {dimension_numbers = #tpu.dot_dimension_numbers<[1], [0], [0], [1], [0, 0, 1, 1], [], []>} : vector<32x8xf32>, vector<8x128xf32>, vector<32x128xf32> -> vector<32x128xf32>
    %26 = arith.addf %18, %25 : vector<32x128xf32>
    %27 = vector.extract_strided_slice %11 {offsets = [0, 2], sizes = [8, 128], strides = [1, 1]} : vector<8x132xf32> to vector<8x128xf32>
    %c64 = arith.constant 64 : index
    %c0_10 = arith.constant 0 : index
    %28 = vector.load %arg3[%c64, %c0_10] : memref<576x32xf32, #tpu.memory_space<vmem>>, vector<32x8xf32>
    %cst_11 = arith.constant dense<0.000000e+00> : vector<32x128xf32>
    %29 = tpu.matmul %28, %27, %cst_11 {dimension_numbers = #tpu.dot_dimension_numbers<[1], [0], [0], [1], [0, 0, 1, 1], [], []>} : vector<32x8xf32>, vector<8x128xf32>, vector<32x128xf32> -> vector<32x128xf32>
    %30 = arith.addf %26, %29 : vector<32x128xf32>
    %31 = vector.extract_strided_slice %11 {offsets = [0, 3], sizes = [8, 128], strides = [1, 1]} : vector<8x132xf32> to vector<8x128xf32>
    %cst_12 = arith.constant 0.000000e+00 : f32
    %32 = vector.shape_cast %7 : vector<1x128xi1> to vector<1x128xi1>
    %33 = vector.broadcast %32 : vector<1x128xi1> to vector<8x128xi1>
    %34 = vector.broadcast %cst_12 : f32 to vector<8x128xf32>
    %35 = arith.select %33, %31, %34 : vector<8x128xi1>, vector<8x128xf32>
    %c96 = arith.constant 96 : index
    %c0_13 = arith.constant 0 : index
    %36 = vector.load %arg3[%c96, %c0_13] : memref<576x32xf32, #tpu.memory_space<vmem>>, vector<32x8xf32>
    %cst_14 = arith.constant dense<0.000000e+00> : vector<32x128xf32>
    %37 = tpu.matmul %36, %35, %cst_14 {dimension_numbers = #tpu.dot_dimension_numbers<[1], [0], [0], [1], [0, 0, 1, 1], [], []>} : vector<32x8xf32>, vector<8x128xf32>, vector<32x128xf32> -> vector<32x128xf32>
    %38 = arith.addf %30, %37 : vector<32x128xf32>
    %39 = vector.extract_strided_slice %11 {offsets = [0, 4], sizes = [8, 128], strides = [1, 1]} : vector<8x132xf32> to vector<8x128xf32>
    %cst_15 = arith.constant 0.000000e+00 : f32
    %40 = vector.shape_cast %9 : vector<1x128xi1> to vector<1x128xi1>
    %41 = vector.broadcast %40 : vector<1x128xi1> to vector<8x128xi1>
    %42 = vector.broadcast %cst_15 : f32 to vector<8x128xf32>
    %43 = arith.select %41, %39, %42 : vector<8x128xi1>, vector<8x128xf32>
    %c128 = arith.constant 128 : index
    %c0_16 = arith.constant 0 : index
    %44 = vector.load %arg3[%c128, %c0_16] : memref<576x32xf32, #tpu.memory_space<vmem>>, vector<32x8xf32>
    %cst_17 = arith.constant dense<0.000000e+00> : vector<32x128xf32>
    %45 = tpu.matmul %44, %43, %cst_17 {dimension_numbers = #tpu.dot_dimension_numbers<[1], [0], [0], [1], [0, 0, 1, 1], [], []>} : vector<32x8xf32>, vector<8x128xf32>, vector<32x128xf32> -> vector<32x128xf32>
    %46 = arith.addf %38, %45 : vector<32x128xf32>
    %c0_18 = arith.constant 0 : index
    %c0_19 = arith.constant 0 : index
    %47 = vector.load %arg4[%c0_18, %c0_19] : memref<32x14xf32, #tpu.memory_space<vmem>>, vector<32x1xf32>
    %48 = vector.broadcast %47 : vector<32x1xf32> to vector<32x128xf32>
    %49 = arith.addf %46, %48 : vector<32x128xf32>
    %cst_20 = arith.constant 0.000000e+00 : f32
    %50 = vector.broadcast %cst_20 : f32 to vector<32x128xf32>
    %51 = arith.cmpf ogt, %49, %50 : vector<32x128xf32>
    %cst_21 = arith.constant 0.000000e+00 : f32
    %52 = vector.broadcast %cst_21 : f32 to vector<32x128xf32>
    %53 = arith.minimumf %49, %52 : vector<32x128xf32>
    %54 = math.exp %53 : vector<32x128xf32>
    %cst_22 = arith.constant 1.000000e+00 : f32
    %55 = vector.broadcast %cst_22 : f32 to vector<32x128xf32>
    %56 = arith.subf %54, %55 : vector<32x128xf32>
    %57 = arith.select %51, %49, %56 : vector<32x128xi1>, vector<32x128xf32>
    %cst_23 = arith.constant 0.000000e+00 : f32
    %58 = vector.broadcast %cst_23 : f32 to vector<32x2xf32>
    %59 = tpu.concatenate %58, %57, %58 in 1 : vector<32x2xf32>, vector<32x128xf32>, vector<32x2xf32> -> vector<32x132xf32>
    %60 = vector.extract_strided_slice %59 {offsets = [0, 0], sizes = [32, 128], strides = [1, 1]} : vector<32x132xf32> to vector<32x128xf32>
    %cst_24 = arith.constant 0.000000e+00 : f32
    %61 = vector.shape_cast %3 : vector<1x128xi1> to vector<1x128xi1>
    %62 = vector.broadcast %61 : vector<1x128xi1> to vector<32x128xi1>
    %63 = vector.broadcast %cst_24 : f32 to vector<32x128xf32>
    %64 = arith.select %62, %60, %63 : vector<32x128xi1>, vector<32x128xf32>
    %c160 = arith.constant 160 : index
    %c0_25 = arith.constant 0 : index
    %65 = vector.load %arg3[%c160, %c0_25] : memref<576x32xf32, #tpu.memory_space<vmem>>, vector<32x32xf32>
    %cst_26 = arith.constant dense<0.000000e+00> : vector<32x128xf32>
    %66 = tpu.matmul %65, %64, %cst_26 {dimension_numbers = #tpu.dot_dimension_numbers<[1], [0], [0], [1], [0, 0, 1, 1], [], []>} : vector<32x32xf32>, vector<32x128xf32>, vector<32x128xf32> -> vector<32x128xf32>
    %67 = vector.extract_strided_slice %59 {offsets = [0, 1], sizes = [32, 128], strides = [1, 1]} : vector<32x132xf32> to vector<32x128xf32>
    %cst_27 = arith.constant 0.000000e+00 : f32
    %68 = vector.shape_cast %5 : vector<1x128xi1> to vector<1x128xi1>
    %69 = vector.broadcast %68 : vector<1x128xi1> to vector<32x128xi1>
    %70 = vector.broadcast %cst_27 : f32 to vector<32x128xf32>
    %71 = arith.select %69, %67, %70 : vector<32x128xi1>, vector<32x128xf32>
    %c192 = arith.constant 192 : index
    %c0_28 = arith.constant 0 : index
    %72 = vector.load %arg3[%c192, %c0_28] : memref<576x32xf32, #tpu.memory_space<vmem>>, vector<32x32xf32>
    %cst_29 = arith.constant dense<0.000000e+00> : vector<32x128xf32>
    %73 = tpu.matmul %72, %71, %cst_29 {dimension_numbers = #tpu.dot_dimension_numbers<[1], [0], [0], [1], [0, 0, 1, 1], [], []>} : vector<32x32xf32>, vector<32x128xf32>, vector<32x128xf32> -> vector<32x128xf32>
    %74 = arith.addf %66, %73 : vector<32x128xf32>
    %75 = vector.extract_strided_slice %59 {offsets = [0, 2], sizes = [32, 128], strides = [1, 1]} : vector<32x132xf32> to vector<32x128xf32>
    %c224 = arith.constant 224 : index
    %c0_30 = arith.constant 0 : index
    %76 = vector.load %arg3[%c224, %c0_30] : memref<576x32xf32, #tpu.memory_space<vmem>>, vector<32x32xf32>
    %cst_31 = arith.constant dense<0.000000e+00> : vector<32x128xf32>
    %77 = tpu.matmul %76, %75, %cst_31 {dimension_numbers = #tpu.dot_dimension_numbers<[1], [0], [0], [1], [0, 0, 1, 1], [], []>} : vector<32x32xf32>, vector<32x128xf32>, vector<32x128xf32> -> vector<32x128xf32>
    %78 = arith.addf %74, %77 : vector<32x128xf32>
    %79 = vector.extract_strided_slice %59 {offsets = [0, 3], sizes = [32, 128], strides = [1, 1]} : vector<32x132xf32> to vector<32x128xf32>
    %cst_32 = arith.constant 0.000000e+00 : f32
    %80 = vector.shape_cast %7 : vector<1x128xi1> to vector<1x128xi1>
    %81 = vector.broadcast %80 : vector<1x128xi1> to vector<32x128xi1>
    %82 = vector.broadcast %cst_32 : f32 to vector<32x128xf32>
    %83 = arith.select %81, %79, %82 : vector<32x128xi1>, vector<32x128xf32>
    %c256 = arith.constant 256 : index
    %c0_33 = arith.constant 0 : index
    %84 = vector.load %arg3[%c256, %c0_33] : memref<576x32xf32, #tpu.memory_space<vmem>>, vector<32x32xf32>
    %cst_34 = arith.constant dense<0.000000e+00> : vector<32x128xf32>
    %85 = tpu.matmul %84, %83, %cst_34 {dimension_numbers = #tpu.dot_dimension_numbers<[1], [0], [0], [1], [0, 0, 1, 1], [], []>} : vector<32x32xf32>, vector<32x128xf32>, vector<32x128xf32> -> vector<32x128xf32>
    %86 = arith.addf %78, %85 : vector<32x128xf32>
    %87 = vector.extract_strided_slice %59 {offsets = [0, 4], sizes = [32, 128], strides = [1, 1]} : vector<32x132xf32> to vector<32x128xf32>
    %cst_35 = arith.constant 0.000000e+00 : f32
    %88 = vector.shape_cast %9 : vector<1x128xi1> to vector<1x128xi1>
    %89 = vector.broadcast %88 : vector<1x128xi1> to vector<32x128xi1>
    %90 = vector.broadcast %cst_35 : f32 to vector<32x128xf32>
    %91 = arith.select %89, %87, %90 : vector<32x128xi1>, vector<32x128xf32>
    %c288 = arith.constant 288 : index
    %c0_36 = arith.constant 0 : index
    %92 = vector.load %arg3[%c288, %c0_36] : memref<576x32xf32, #tpu.memory_space<vmem>>, vector<32x32xf32>
    %cst_37 = arith.constant dense<0.000000e+00> : vector<32x128xf32>
    %93 = tpu.matmul %92, %91, %cst_37 {dimension_numbers = #tpu.dot_dimension_numbers<[1], [0], [0], [1], [0, 0, 1, 1], [], []>} : vector<32x32xf32>, vector<32x128xf32>, vector<32x128xf32> -> vector<32x128xf32>
    %94 = arith.addf %86, %93 : vector<32x128xf32>
    %c0_38 = arith.constant 0 : index
    %c1 = arith.constant 1 : index
    %95 = vector.load %arg4[%c0_38, %c1] : memref<32x14xf32, #tpu.memory_space<vmem>>, vector<32x1xf32>
    %96 = vector.broadcast %95 : vector<32x1xf32> to vector<32x128xf32>
    %97 = arith.addf %94, %96 : vector<32x128xf32>
    %cst_39 = arith.constant 0.000000e+00 : f32
    %98 = vector.broadcast %cst_39 : f32 to vector<32x128xf32>
    %99 = arith.cmpf ogt, %97, %98 : vector<32x128xf32>
    %cst_40 = arith.constant 0.000000e+00 : f32
    %100 = vector.broadcast %cst_40 : f32 to vector<32x128xf32>
    %101 = arith.minimumf %97, %100 : vector<32x128xf32>
    %102 = math.exp %101 : vector<32x128xf32>
    %cst_41 = arith.constant 1.000000e+00 : f32
    %103 = vector.broadcast %cst_41 : f32 to vector<32x128xf32>
    %104 = arith.subf %102, %103 : vector<32x128xf32>
    %105 = arith.select %99, %97, %104 : vector<32x128xi1>, vector<32x128xf32>
    %c0_42 = arith.constant 0 : index
    %c2 = arith.constant 2 : index
    %106 = vector.load %arg4[%c0_42, %c2] : memref<32x14xf32, #tpu.memory_space<vmem>>, vector<32x1xf32>
    %c0_43 = arith.constant 0 : index
    %c3 = arith.constant 3 : index
    %107 = vector.load %arg4[%c0_43, %c3] : memref<32x14xf32, #tpu.memory_space<vmem>>, vector<32x1xf32>
    %108 = vector.broadcast %106 : vector<32x1xf32> to vector<32x128xf32>
    %109 = arith.mulf %105, %108 : vector<32x128xf32>
    %110 = vector.broadcast %107 : vector<32x1xf32> to vector<32x128xf32>
    %111 = arith.addf %109, %110 : vector<32x128xf32>
    %cst_44 = arith.constant 0.000000e+00 : f32
    %112 = vector.broadcast %cst_44 : f32 to vector<32x2xf32>
    %113 = tpu.concatenate %112, %111, %112 in 1 : vector<32x2xf32>, vector<32x128xf32>, vector<32x2xf32> -> vector<32x132xf32>
    %114 = vector.extract_strided_slice %113 {offsets = [0, 0], sizes = [32, 128], strides = [1, 1]} : vector<32x132xf32> to vector<32x128xf32>
    %cst_45 = arith.constant 0.000000e+00 : f32
    %115 = vector.shape_cast %3 : vector<1x128xi1> to vector<1x128xi1>
    %116 = vector.broadcast %115 : vector<1x128xi1> to vector<32x128xi1>
    %117 = vector.broadcast %cst_45 : f32 to vector<32x128xf32>
    %118 = arith.select %116, %114, %117 : vector<32x128xi1>, vector<32x128xf32>
    %c320 = arith.constant 320 : index
    %c0_46 = arith.constant 0 : index
    %119 = vector.load %arg3[%c320, %c0_46] : memref<576x32xf32, #tpu.memory_space<vmem>>, vector<32x32xf32>
    %cst_47 = arith.constant dense<0.000000e+00> : vector<32x128xf32>
    %120 = tpu.matmul %119, %118, %cst_47 {dimension_numbers = #tpu.dot_dimension_numbers<[1], [0], [0], [1], [0, 0, 1, 1], [], []>} : vector<32x32xf32>, vector<32x128xf32>, vector<32x128xf32> -> vector<32x128xf32>
    %121 = vector.extract_strided_slice %113 {offsets = [0, 1], sizes = [32, 128], strides = [1, 1]} : vector<32x132xf32> to vector<32x128xf32>
    %cst_48 = arith.constant 0.000000e+00 : f32
    %122 = vector.shape_cast %5 : vector<1x128xi1> to vector<1x128xi1>
    %123 = vector.broadcast %122 : vector<1x128xi1> to vector<32x128xi1>
    %124 = vector.broadcast %cst_48 : f32 to vector<32x128xf32>
    %125 = arith.select %123, %121, %124 : vector<32x128xi1>, vector<32x128xf32>
    %c352 = arith.constant 352 : index
    %c0_49 = arith.constant 0 : index
    %126 = vector.load %arg3[%c352, %c0_49] : memref<576x32xf32, #tpu.memory_space<vmem>>, vector<32x32xf32>
    %cst_50 = arith.constant dense<0.000000e+00> : vector<32x128xf32>
    %127 = tpu.matmul %126, %125, %cst_50 {dimension_numbers = #tpu.dot_dimension_numbers<[1], [0], [0], [1], [0, 0, 1, 1], [], []>} : vector<32x32xf32>, vector<32x128xf32>, vector<32x128xf32> -> vector<32x128xf32>
    %128 = arith.addf %120, %127 : vector<32x128xf32>
    %129 = vector.extract_strided_slice %113 {offsets = [0, 2], sizes = [32, 128], strides = [1, 1]} : vector<32x132xf32> to vector<32x128xf32>
    %c384 = arith.constant 384 : index
    %c0_51 = arith.constant 0 : index
    %130 = vector.load %arg3[%c384, %c0_51] : memref<576x32xf32, #tpu.memory_space<vmem>>, vector<32x32xf32>
    %cst_52 = arith.constant dense<0.000000e+00> : vector<32x128xf32>
    %131 = tpu.matmul %130, %129, %cst_52 {dimension_numbers = #tpu.dot_dimension_numbers<[1], [0], [0], [1], [0, 0, 1, 1], [], []>} : vector<32x32xf32>, vector<32x128xf32>, vector<32x128xf32> -> vector<32x128xf32>
    %132 = arith.addf %128, %131 : vector<32x128xf32>
    %133 = vector.extract_strided_slice %113 {offsets = [0, 3], sizes = [32, 128], strides = [1, 1]} : vector<32x132xf32> to vector<32x128xf32>
    %cst_53 = arith.constant 0.000000e+00 : f32
    %134 = vector.shape_cast %7 : vector<1x128xi1> to vector<1x128xi1>
    %135 = vector.broadcast %134 : vector<1x128xi1> to vector<32x128xi1>
    %136 = vector.broadcast %cst_53 : f32 to vector<32x128xf32>
    %137 = arith.select %135, %133, %136 : vector<32x128xi1>, vector<32x128xf32>
    %c416 = arith.constant 416 : index
    %c0_54 = arith.constant 0 : index
    %138 = vector.load %arg3[%c416, %c0_54] : memref<576x32xf32, #tpu.memory_space<vmem>>, vector<32x32xf32>
    %cst_55 = arith.constant dense<0.000000e+00> : vector<32x128xf32>
    %139 = tpu.matmul %138, %137, %cst_55 {dimension_numbers = #tpu.dot_dimension_numbers<[1], [0], [0], [1], [0, 0, 1, 1], [], []>} : vector<32x32xf32>, vector<32x128xf32>, vector<32x128xf32> -> vector<32x128xf32>
    %140 = arith.addf %132, %139 : vector<32x128xf32>
    %141 = vector.extract_strided_slice %113 {offsets = [0, 4], sizes = [32, 128], strides = [1, 1]} : vector<32x132xf32> to vector<32x128xf32>
    %cst_56 = arith.constant 0.000000e+00 : f32
    %142 = vector.shape_cast %9 : vector<1x128xi1> to vector<1x128xi1>
    %143 = vector.broadcast %142 : vector<1x128xi1> to vector<32x128xi1>
    %144 = vector.broadcast %cst_56 : f32 to vector<32x128xf32>
    %145 = arith.select %143, %141, %144 : vector<32x128xi1>, vector<32x128xf32>
    %c448 = arith.constant 448 : index
    %c0_57 = arith.constant 0 : index
    %146 = vector.load %arg3[%c448, %c0_57] : memref<576x32xf32, #tpu.memory_space<vmem>>, vector<32x32xf32>
    %cst_58 = arith.constant dense<0.000000e+00> : vector<32x128xf32>
    %147 = tpu.matmul %146, %145, %cst_58 {dimension_numbers = #tpu.dot_dimension_numbers<[1], [0], [0], [1], [0, 0, 1, 1], [], []>} : vector<32x32xf32>, vector<32x128xf32>, vector<32x128xf32> -> vector<32x128xf32>
    %148 = arith.addf %140, %147 : vector<32x128xf32>
    %c0_59 = arith.constant 0 : index
    %c4 = arith.constant 4 : index
    %149 = vector.load %arg4[%c0_59, %c4] : memref<32x14xf32, #tpu.memory_space<vmem>>, vector<32x1xf32>
    %150 = vector.broadcast %149 : vector<32x1xf32> to vector<32x128xf32>
    %151 = arith.addf %148, %150 : vector<32x128xf32>
    %cst_60 = arith.constant 0.000000e+00 : f32
    %152 = vector.broadcast %cst_60 : f32 to vector<32x128xf32>
    %153 = arith.cmpf ogt, %151, %152 : vector<32x128xf32>
    %cst_61 = arith.constant 0.000000e+00 : f32
    %154 = vector.broadcast %cst_61 : f32 to vector<32x128xf32>
    %155 = arith.minimumf %151, %154 : vector<32x128xf32>
    %156 = math.exp %155 : vector<32x128xf32>
    %cst_62 = arith.constant 1.000000e+00 : f32
    %157 = vector.broadcast %cst_62 : f32 to vector<32x128xf32>
    %158 = arith.subf %156, %157 : vector<32x128xf32>
    %159 = arith.select %153, %151, %158 : vector<32x128xi1>, vector<32x128xf32>
    %c0_63 = arith.constant 0 : index
    %c5 = arith.constant 5 : index
    %160 = vector.load %arg4[%c0_63, %c5] : memref<32x14xf32, #tpu.memory_space<vmem>>, vector<32x1xf32>
    %c0_64 = arith.constant 0 : index
    %c6 = arith.constant 6 : index
    %161 = vector.load %arg4[%c0_64, %c6] : memref<32x14xf32, #tpu.memory_space<vmem>>, vector<32x1xf32>
    %162 = vector.broadcast %160 : vector<32x1xf32> to vector<32x128xf32>
    %163 = arith.mulf %159, %162 : vector<32x128xf32>
    %164 = vector.broadcast %161 : vector<32x1xf32> to vector<32x128xf32>
    %165 = arith.addf %163, %164 : vector<32x128xf32>
    %cst_65 = arith.constant 0.000000e+00 : f32
    %166 = vector.broadcast %cst_65 : f32 to vector<32x1xf32>
    %167 = tpu.concatenate %166, %165, %166 in 1 : vector<32x1xf32>, vector<32x128xf32>, vector<32x1xf32> -> vector<32x130xf32>
    %168 = vector.extract_strided_slice %167 {offsets = [0, 0], sizes = [32, 128], strides = [1, 1]} : vector<32x130xf32> to vector<32x128xf32>
    %cst_66 = arith.constant 0.000000e+00 : f32
    %169 = vector.shape_cast %5 : vector<1x128xi1> to vector<1x128xi1>
    %170 = vector.broadcast %169 : vector<1x128xi1> to vector<32x128xi1>
    %171 = vector.broadcast %cst_66 : f32 to vector<32x128xf32>
    %172 = arith.select %170, %168, %171 : vector<32x128xi1>, vector<32x128xf32>
    %c480 = arith.constant 480 : index
    %c0_67 = arith.constant 0 : index
    %173 = vector.load %arg3[%c480, %c0_67] : memref<576x32xf32, #tpu.memory_space<vmem>>, vector<16x32xf32>
    %cst_68 = arith.constant dense<0.000000e+00> : vector<16x128xf32>
    %174 = tpu.matmul %173, %172, %cst_68 {dimension_numbers = #tpu.dot_dimension_numbers<[1], [0], [0], [1], [0, 0, 1, 1], [], []>} : vector<16x32xf32>, vector<32x128xf32>, vector<16x128xf32> -> vector<16x128xf32>
    %175 = vector.extract_strided_slice %167 {offsets = [0, 1], sizes = [32, 128], strides = [1, 1]} : vector<32x130xf32> to vector<32x128xf32>
    %c496 = arith.constant 496 : index
    %c0_69 = arith.constant 0 : index
    %176 = vector.load %arg3[%c496, %c0_69] : memref<576x32xf32, #tpu.memory_space<vmem>>, vector<16x32xf32>
    %cst_70 = arith.constant dense<0.000000e+00> : vector<16x128xf32>
    %177 = tpu.matmul %176, %175, %cst_70 {dimension_numbers = #tpu.dot_dimension_numbers<[1], [0], [0], [1], [0, 0, 1, 1], [], []>} : vector<16x32xf32>, vector<32x128xf32>, vector<16x128xf32> -> vector<16x128xf32>
    %178 = arith.addf %174, %177 : vector<16x128xf32>
    %179 = vector.extract_strided_slice %167 {offsets = [0, 2], sizes = [32, 128], strides = [1, 1]} : vector<32x130xf32> to vector<32x128xf32>
    %cst_71 = arith.constant 0.000000e+00 : f32
    %180 = vector.shape_cast %7 : vector<1x128xi1> to vector<1x128xi1>
    %181 = vector.broadcast %180 : vector<1x128xi1> to vector<32x128xi1>
    %182 = vector.broadcast %cst_71 : f32 to vector<32x128xf32>
    %183 = arith.select %181, %179, %182 : vector<32x128xi1>, vector<32x128xf32>
    %c512 = arith.constant 512 : index
    %c0_72 = arith.constant 0 : index
    %184 = vector.load %arg3[%c512, %c0_72] : memref<576x32xf32, #tpu.memory_space<vmem>>, vector<16x32xf32>
    %cst_73 = arith.constant dense<0.000000e+00> : vector<16x128xf32>
    %185 = tpu.matmul %184, %183, %cst_73 {dimension_numbers = #tpu.dot_dimension_numbers<[1], [0], [0], [1], [0, 0, 1, 1], [], []>} : vector<16x32xf32>, vector<32x128xf32>, vector<16x128xf32> -> vector<16x128xf32>
    %186 = arith.addf %178, %185 : vector<16x128xf32>
    %c0_74 = arith.constant 0 : index
    %c7 = arith.constant 7 : index
    %187 = vector.load %arg4[%c0_74, %c7] : memref<32x14xf32, #tpu.memory_space<vmem>>, vector<16x1xf32>
    %188 = vector.broadcast %187 : vector<16x1xf32> to vector<16x128xf32>
    %189 = arith.addf %186, %188 : vector<16x128xf32>
    %cst_75 = arith.constant 0.000000e+00 : f32
    %190 = vector.broadcast %cst_75 : f32 to vector<16x128xf32>
    %191 = arith.cmpf ogt, %189, %190 : vector<16x128xf32>
    %cst_76 = arith.constant 0.000000e+00 : f32
    %192 = vector.broadcast %cst_76 : f32 to vector<16x128xf32>
    %193 = arith.minimumf %189, %192 : vector<16x128xf32>
    %194 = math.exp %193 : vector<16x128xf32>
    %cst_77 = arith.constant 1.000000e+00 : f32
    %195 = vector.broadcast %cst_77 : f32 to vector<16x128xf32>
    %196 = arith.subf %194, %195 : vector<16x128xf32>
    %197 = arith.select %191, %189, %196 : vector<16x128xi1>, vector<16x128xf32>
    %c0_78 = arith.constant 0 : index
    %c8 = arith.constant 8 : index
    %198 = vector.load %arg4[%c0_78, %c8] : memref<32x14xf32, #tpu.memory_space<vmem>>, vector<16x1xf32>
    %c0_79 = arith.constant 0 : index
    %c9 = arith.constant 9 : index
    %199 = vector.load %arg4[%c0_79, %c9] : memref<32x14xf32, #tpu.memory_space<vmem>>, vector<16x1xf32>
    %200 = vector.broadcast %198 : vector<16x1xf32> to vector<16x128xf32>
    %201 = arith.mulf %197, %200 : vector<16x128xf32>
    %202 = vector.broadcast %199 : vector<16x1xf32> to vector<16x128xf32>
    %203 = arith.addf %201, %202 : vector<16x128xf32>
    %cst_80 = arith.constant 0.000000e+00 : f32
    %204 = vector.broadcast %cst_80 : f32 to vector<16x1xf32>
    %205 = tpu.concatenate %204, %203, %204 in 1 : vector<16x1xf32>, vector<16x128xf32>, vector<16x1xf32> -> vector<16x130xf32>
    %206 = vector.extract_strided_slice %205 {offsets = [0, 0], sizes = [16, 128], strides = [1, 1]} : vector<16x130xf32> to vector<16x128xf32>
    %cst_81 = arith.constant 0.000000e+00 : f32
    %207 = vector.shape_cast %5 : vector<1x128xi1> to vector<1x128xi1>
    %208 = vector.broadcast %207 : vector<1x128xi1> to vector<16x128xi1>
    %209 = vector.broadcast %cst_81 : f32 to vector<16x128xf32>
    %210 = arith.select %208, %206, %209 : vector<16x128xi1>, vector<16x128xf32>
    %c528 = arith.constant 528 : index
    %c0_82 = arith.constant 0 : index
    %211 = vector.load %arg3[%c528, %c0_82] : memref<576x32xf32, #tpu.memory_space<vmem>>, vector<8x16xf32>
    %cst_83 = arith.constant dense<0.000000e+00> : vector<8x128xf32>
    %212 = tpu.matmul %211, %210, %cst_83 {dimension_numbers = #tpu.dot_dimension_numbers<[1], [0], [0], [1], [0, 0, 1, 1], [], []>} : vector<8x16xf32>, vector<16x128xf32>, vector<8x128xf32> -> vector<8x128xf32>
    %213 = vector.extract_strided_slice %205 {offsets = [0, 1], sizes = [16, 128], strides = [1, 1]} : vector<16x130xf32> to vector<16x128xf32>
    %c536 = arith.constant 536 : index
    %c0_84 = arith.constant 0 : index
    %214 = vector.load %arg3[%c536, %c0_84] : memref<576x32xf32, #tpu.memory_space<vmem>>, vector<8x16xf32>
    %cst_85 = arith.constant dense<0.000000e+00> : vector<8x128xf32>
    %215 = tpu.matmul %214, %213, %cst_85 {dimension_numbers = #tpu.dot_dimension_numbers<[1], [0], [0], [1], [0, 0, 1, 1], [], []>} : vector<8x16xf32>, vector<16x128xf32>, vector<8x128xf32> -> vector<8x128xf32>
    %216 = arith.addf %212, %215 : vector<8x128xf32>
    %217 = vector.extract_strided_slice %205 {offsets = [0, 2], sizes = [16, 128], strides = [1, 1]} : vector<16x130xf32> to vector<16x128xf32>
    %cst_86 = arith.constant 0.000000e+00 : f32
    %218 = vector.shape_cast %7 : vector<1x128xi1> to vector<1x128xi1>
    %219 = vector.broadcast %218 : vector<1x128xi1> to vector<16x128xi1>
    %220 = vector.broadcast %cst_86 : f32 to vector<16x128xf32>
    %221 = arith.select %219, %217, %220 : vector<16x128xi1>, vector<16x128xf32>
    %c544 = arith.constant 544 : index
    %c0_87 = arith.constant 0 : index
    %222 = vector.load %arg3[%c544, %c0_87] : memref<576x32xf32, #tpu.memory_space<vmem>>, vector<8x16xf32>
    %cst_88 = arith.constant dense<0.000000e+00> : vector<8x128xf32>
    %223 = tpu.matmul %222, %221, %cst_88 {dimension_numbers = #tpu.dot_dimension_numbers<[1], [0], [0], [1], [0, 0, 1, 1], [], []>} : vector<8x16xf32>, vector<16x128xf32>, vector<8x128xf32> -> vector<8x128xf32>
    %224 = arith.addf %216, %223 : vector<8x128xf32>
    %c0_89 = arith.constant 0 : index
    %c10 = arith.constant 10 : index
    %225 = vector.load %arg4[%c0_89, %c10] : memref<32x14xf32, #tpu.memory_space<vmem>>, vector<8x1xf32>
    %226 = vector.broadcast %225 : vector<8x1xf32> to vector<8x128xf32>
    %227 = arith.addf %224, %226 : vector<8x128xf32>
    %cst_90 = arith.constant 0.000000e+00 : f32
    %228 = vector.broadcast %cst_90 : f32 to vector<8x128xf32>
    %229 = arith.cmpf ogt, %227, %228 : vector<8x128xf32>
    %cst_91 = arith.constant 0.000000e+00 : f32
    %230 = vector.broadcast %cst_91 : f32 to vector<8x128xf32>
    %231 = arith.minimumf %227, %230 : vector<8x128xf32>
    %232 = math.exp %231 : vector<8x128xf32>
    %cst_92 = arith.constant 1.000000e+00 : f32
    %233 = vector.broadcast %cst_92 : f32 to vector<8x128xf32>
    %234 = arith.subf %232, %233 : vector<8x128xf32>
    %235 = arith.select %229, %227, %234 : vector<8x128xi1>, vector<8x128xf32>
    %c0_93 = arith.constant 0 : index
    %c11 = arith.constant 11 : index
    %236 = vector.load %arg4[%c0_93, %c11] : memref<32x14xf32, #tpu.memory_space<vmem>>, vector<8x1xf32>
    %c0_94 = arith.constant 0 : index
    %c12 = arith.constant 12 : index
    %237 = vector.load %arg4[%c0_94, %c12] : memref<32x14xf32, #tpu.memory_space<vmem>>, vector<8x1xf32>
    %238 = vector.broadcast %236 : vector<8x1xf32> to vector<8x128xf32>
    %239 = arith.mulf %235, %238 : vector<8x128xf32>
    %240 = vector.broadcast %237 : vector<8x1xf32> to vector<8x128xf32>
    %241 = arith.addf %239, %240 : vector<8x128xf32>
    %cst_95 = arith.constant 0.000000e+00 : f32
    %242 = vector.broadcast %cst_95 : f32 to vector<8x1xf32>
    %243 = tpu.concatenate %242, %241, %242 in 1 : vector<8x1xf32>, vector<8x128xf32>, vector<8x1xf32> -> vector<8x130xf32>
    %244 = vector.extract_strided_slice %243 {offsets = [0, 0], sizes = [8, 128], strides = [1, 1]} : vector<8x130xf32> to vector<8x128xf32>
    %cst_96 = arith.constant 0.000000e+00 : f32
    %245 = vector.shape_cast %5 : vector<1x128xi1> to vector<1x128xi1>
    %246 = vector.broadcast %245 : vector<1x128xi1> to vector<8x128xi1>
    %247 = vector.broadcast %cst_96 : f32 to vector<8x128xf32>
    %248 = arith.select %246, %244, %247 : vector<8x128xi1>, vector<8x128xf32>
    %c552 = arith.constant 552 : index
    %c0_97 = arith.constant 0 : index
    %249 = vector.load %arg3[%c552, %c0_97] : memref<576x32xf32, #tpu.memory_space<vmem>>, vector<4x8xf32>
    %cst_98 = arith.constant dense<0.000000e+00> : vector<4x128xf32>
    %250 = tpu.matmul %249, %248, %cst_98 {dimension_numbers = #tpu.dot_dimension_numbers<[1], [0], [0], [1], [0, 0, 1, 1], [], []>} : vector<4x8xf32>, vector<8x128xf32>, vector<4x128xf32> -> vector<4x128xf32>
    %251 = vector.extract_strided_slice %243 {offsets = [0, 1], sizes = [8, 128], strides = [1, 1]} : vector<8x130xf32> to vector<8x128xf32>
    %c560 = arith.constant 560 : index
    %c0_99 = arith.constant 0 : index
    %252 = vector.load %arg3[%c560, %c0_99] : memref<576x32xf32, #tpu.memory_space<vmem>>, vector<4x8xf32>
    %cst_100 = arith.constant dense<0.000000e+00> : vector<4x128xf32>
    %253 = tpu.matmul %252, %251, %cst_100 {dimension_numbers = #tpu.dot_dimension_numbers<[1], [0], [0], [1], [0, 0, 1, 1], [], []>} : vector<4x8xf32>, vector<8x128xf32>, vector<4x128xf32> -> vector<4x128xf32>
    %254 = arith.addf %250, %253 : vector<4x128xf32>
    %255 = vector.extract_strided_slice %243 {offsets = [0, 2], sizes = [8, 128], strides = [1, 1]} : vector<8x130xf32> to vector<8x128xf32>
    %cst_101 = arith.constant 0.000000e+00 : f32
    %256 = vector.shape_cast %7 : vector<1x128xi1> to vector<1x128xi1>
    %257 = vector.broadcast %256 : vector<1x128xi1> to vector<8x128xi1>
    %258 = vector.broadcast %cst_101 : f32 to vector<8x128xf32>
    %259 = arith.select %257, %255, %258 : vector<8x128xi1>, vector<8x128xf32>
    %c568 = arith.constant 568 : index
    %c0_102 = arith.constant 0 : index
    %260 = vector.load %arg3[%c568, %c0_102] : memref<576x32xf32, #tpu.memory_space<vmem>>, vector<4x8xf32>
    %cst_103 = arith.constant dense<0.000000e+00> : vector<4x128xf32>
    %261 = tpu.matmul %260, %259, %cst_103 {dimension_numbers = #tpu.dot_dimension_numbers<[1], [0], [0], [1], [0, 0, 1, 1], [], []>} : vector<4x8xf32>, vector<8x128xf32>, vector<4x128xf32> -> vector<4x128xf32>
    %262 = arith.addf %254, %261 : vector<4x128xf32>
    %c0_104 = arith.constant 0 : index
    %c13 = arith.constant 13 : index
    %263 = vector.load %arg4[%c0_104, %c13] : memref<32x14xf32, #tpu.memory_space<vmem>>, vector<4x1xf32>
    %264 = vector.broadcast %263 : vector<4x1xf32> to vector<4x128xf32>
    %265 = arith.addf %262, %264 : vector<4x128xf32>
    %c0_105 = arith.constant 0 : index
    %c0_106 = arith.constant 0 : index
    %266 = vector.load %arg5[%c0_105, %c0_106] : memref<4x128xf32, #tpu.memory_space<vmem>>, vector<4x128xf32>
    tpu.vector_store %arg5[%c0_105, %c0_106], %265 {strides = array<i32>} : memref<4x128xf32, #tpu.memory_space<vmem>>, vector<4x128xf32>,
    return
  }
  func.func @transform_0(%arg0: i32) -> (i32, i32) {
    %c0_i32 = arith.constant 0 : i32
    %c0_i32_0 = arith.constant 0 : i32
    %c0_i32_1 = arith.constant 0 : i32
    return %c0_i32, %c0_i32_0 : i32, i32
  }
  func.func @transform_1(%arg0: i32) -> (i32, i32) {
    %c0_i32 = arith.constant 0 : i32
    %c0_i32_0 = arith.constant 0 : i32
    return %c0_i32, %arg0 : i32, i32
  }
  func.func @transform_2(%arg0: i32) -> (i32, i32) {
    %c0_i32 = arith.constant 0 : i32
    %c0_i32_0 = arith.constant 0 : i32
    %c0_i32_1 = arith.constant 0 : i32
    return %c0_i32, %c0_i32_0 : i32, i32
  }
  func.func @transform_3(%arg0: i32) -> (i32, i32) {
    %c0_i32 = arith.constant 0 : i32
    %c0_i32_0 = arith.constant 0 : i32
    %c0_i32_1 = arith.constant 0 : i32
    return %c0_i32, %c0_i32_0 : i32, i32
  }
  func.func @transform_4(%arg0: i32) -> (i32, i32) {
    %c0_i32 = arith.constant 0 : i32
    %c0_i32_0 = arith.constant 0 : i32
    return %c0_i32, %arg0 : i32, i32
  }
}

</mosaic_0001>

<llo_original>
// kernel: tpu_custom_call.1
$region0: #{tpu_custom_call.1}
  #allocation0 [shape = 'u32[]', space=smem, size = 0x4, offset = 0x4, fixed_abs, tag = 'smem constant byte address 0x4 - core index']
  #allocation1 [shape = 'u32[144,128]{1,0:T(1,128)}', space=vmem, size = 0x12000, scoped, tag = 'internal scratch']
  %s0 = inlined_call_operand.vmem [shape: s32[1,128], index: 0, kind: input, shape index: {}]
  %s1 = inlined_call_operand.vmem [shape: f32[8,128], index: 1, kind: input, shape index: {}]
  %s2 = inlined_call_operand.vmem [shape: f32[576,32], index: 2, kind: input, shape index: {}]
  %s3 = inlined_call_operand.vmem [shape: f32[32,14], index: 3, kind: input, shape index: {}]
  %s4 = inlined_call_operand.hbm [shape: f32[4,128], index: 4, kind: output, shape index: {}]
  %s5 = sld [smem:[#allocation0]]
  $region26: #{tpu_custom_call.1} parent=0
    _
  %s7 = ssub.s32 1, %s5
  %s8 = scalar_select 0, %s7, %s5
  $region1: #{tpu_custom_call.1} parent=0
    #allocation2 [shape = 'u8[2048]{0}', space=vmem, size = 0x800, scoped, tag = 'output window, operand 0, single buffered']
    #allocation3 [shape = 's32[1]{0}', space=sflag, size = 0x4, scoped, tag = 'scoped memory for tpu_custom_call.1']
    %9 = vsyncpa [#allocation3], 0
    // Predicated region
    $region2: #{tpu_custom_call.1} parent=1 // pred_check
      _
    $region3: #{tpu_custom_call.1} parent=1 // pred_check_branch
      %11 = sbr.rel (0) target = $region5
    $region4: #{tpu_custom_call.1} parent=1 // pred_region
      _
    $region5: #{tpu_custom_call.1} parent=1 // pred_fallthru
      _
    // Predicated region
    $region6: #{tpu_custom_call.1} parent=1 // pred_check
      _
    $region7: #{tpu_custom_call.1} parent=1 // pred_check_branch
      %13 = sbr.rel (0) target = $region9
    $region8: #{tpu_custom_call.1} parent=1 // pred_region
      _
    $region9: #{tpu_custom_call.1} parent=1 // pred_fallthru
      _
    // Predicated region
    $region10: #{tpu_custom_call.1} parent=1 // pred_check
      _
    $region11: #{tpu_custom_call.1} parent=1 // pred_check_branch
      %15 = sbr.rel (0) target = $region13
    $region12: #{tpu_custom_call.1} parent=1 // pred_region
      _
    $region13: #{tpu_custom_call.1} parent=1 // pred_fallthru
      _
    // Predicated region
    $region14: #{tpu_custom_call.1} parent=1 // pred_check
      _
    $region15: #{tpu_custom_call.1} parent=1 // pred_check_branch
      %17 = sbr.rel (0) target = $region17
    $region16: #{tpu_custom_call.1} parent=1 // pred_region
      _
    $region17: #{tpu_custom_call.1} parent=1 // pred_fallthru
      _
    %v18 = vld [vmem:[%s0] sm:$0x1]
    %v19 = vld [vmem:[%s1] sm:$0xff]
    %vm20 = vcmp.ge.s32.totalorder %v18, 2
    %vm21 = vcmp.ge.s32.totalorder %v18, 1
    %vm22 = vcmp.lt.s32.totalorder %v18, 15
    %vm23 = vcmp.lt.s32.totalorder %v18, 14
    %25 = vrot.lane.b32.xlu0 %v19, 2
    %v26 = vpop.permute.xlu0 %25
    %vm28 = vcmask 15360
    %v29 = vsel %vm28, 0.0, %v26
    %v30 = vsel %vm28, %v26, 0.0
    %v31 = vsel %vm20, 1, 0
    %v32 = vlaneseq
    %v33 = vshrl.u32 %v32, 7
    %v34 = vsub.s32 0, %v33
    %v35 = vrot.slane %v31, %v34
    %vm36 = vcmp.eq.s32.totalorder %v35, 1
    %v37 = vsel %vm36, %v29, 0.0
    %v38 = vld [vmem:[%s2] sm:$0xff]
    %v39 = vld [vmem:[%s2 + $0x8] sm:$0xff]
    %v40 = vld [vmem:[%s2 + $0x10] sm:$0xff]
    %v41 = vld [vmem:[%s2 + $0x18] sm:$0xff]
    %v42 = vsel %vm21, 1, 0
    %v43 = vlaneseq
    %v44 = vshrl.u32 %v43, 7
    %v45 = vsub.s32 0, %v44
    %v46 = vrot.slane %v42, %v45
    %vm47 = vcmp.eq.s32.totalorder %v46, 1
    %50 = vrot.lane.b32.xlu0 %v29, 127
    %v51 = vpop.permute.xlu0 %50
    %52 = vrot.lane.b32.xlu0 %v30, 127
    %v53 = vpop.permute.xlu0 %52
    %vm54 = vcmask 1039360
    %v55 = vsel %vm54, %v51, %v53
    %v57 = vsel %vm47, %v55, 0.0
    %v58 = vld [vmem:[%s2 + $0x20] sm:$0xff]
    %v59 = vld [vmem:[%s2 + $0x28] sm:$0xff]
    %v60 = vld [vmem:[%s2 + $0x30] sm:$0xff]
    %v61 = vld [vmem:[%s2 + $0x38] sm:$0xff]
    %vm62 = vcmask 64512
    %v64 = vsel %vm62, %v58, 0
    %v67 = vsel %vm62, %v59, 0
    %v70 = vsel %vm62, %v60, 0
    %v73 = vsel %vm62, %v61, 0
    %75 = vmatprep.subr.mxu0 0.0
    %76 = vmatpush1.msra.mxu0 0.0
    %77 = vmatprep.subr.mxu0 0.0
    %78 = vmatpush1.msra.mxu0 0.0
    %79 = vmatprep.subr.mxu0 0.0
    %80 = vmatpush1.msra.mxu0 0.0
    %81 = vmatprep.subr.mxu0 0.0
    %82 = vmatpush1.msra.mxu0 0.0
    %83 = vmatprep.subr.mxu0 0.0
    %84 = vmatpush1.msra.mxu0 0.0
    %85 = vmatprep.subr.mxu0 0.0
    %86 = vmatpush1.msra.mxu0 0.0
    %87 = vmatprep.subr.mxu0 0.0
    %88 = vmatpush1.msra.mxu0 0.0
    %89 = vmatprep.subr.mxu0 0.0
    %90 = vmatpush1.msra.mxu0 0.0
    %91 = vmatprep.subr.mxu0 0.0
    %92 = vmatpush1.msra.mxu0 0.0
    %93 = vmatprep.subr.mxu0 0.0
    %94 = vmatpush1.msra.mxu0 0.0
    %95 = vmatprep.subr.mxu0 0.0
    %96 = vmatpush1.msra.mxu0 0.0
    %97 = vmatprep.subr.mxu0 0.0
    %98 = vmatpush1.msra.mxu0 0.0
    %99 = vmatprep.subr.mxu0 0.0
    %100 = vmatpush1.msra.mxu0 0.0
    %101 = vmatprep.subr.mxu0 0.0
    %102 = vmatpush1.msra.mxu0 0.0
    %103 = vmatprep.subr.mxu0 0.0
    %104 = vmatpush1.msra.mxu0 0.0
    %105 = vmatprep.subr.mxu0 0.0
    %106 = vmatpush1.msra.mxu0 %v57
    %107 = vmatprep.subr.mxu0 0.0
    %108 = vmatpush2.msra.mxu0 0.0
    %109 = vmatprep.subr.mxu0 0.0
    %110 = vmatpush2.msra.mxu0 0.0
    %111 = vmatprep.subr.mxu0 0.0
    %112 = vmatpush2.msra.mxu0 0.0
    %113 = vmatprep.subr.mxu0 0.0
    %114 = vmatpush2.msra.mxu0 0.0
    %115 = vmatprep.subr.mxu0 0.0
    %116 = vmatpush2.msra.mxu0 0.0
    %117 = vmatprep.subr.mxu0 0.0
    %118 = vmatpush2.msra.mxu0 0.0
    %119 = vmatprep.subr.mxu0 0.0
    %120 = vmatpush2.msra.mxu0 0.0
    %121 = vmatprep.subr.mxu0 0.0
    %122 = vmatpush2.msra.mxu0 0.0
    %123 = vmatprep.subr.mxu0 0.0
    %124 = vmatpush2.msra.mxu0 0.0
    %125 = vmatprep.subr.mxu0 0.0
    %126 = vmatpush2.msra.mxu0 0.0
    %127 = vmatprep.subr.mxu0 0.0
    %128 = vmatpush2.msra.mxu0 0.0
    %129 = vmatprep.subr.mxu0 0.0
    %130 = vmatpush2.msra.mxu0 0.0
    %131 = vmatprep.subr.mxu0 0.0
    %132 = vmatpush2.msra.mxu0 0.0
    %133 = vmatprep.subr.mxu0 0.0
    %134 = vmatpush2.msra.mxu0 0.0
    %135 = vmatprep.subr.mxu0 0.0
    %136 = vmatpush2.msra.mxu0 0.0
    %137 = vmatprep.subr.mxu0 0.0
    %138 = vmatpush2.msra.mxu0 0.0
    %139 = vmatprep.mubr.f32.mxu0 0.0
    %140 = vmatmul.mubr.f32.gmra.mxu0 %v64
    %v141 = vpop.f32.mrf.mxu0
    %v142 = vadd.f32 0.0, %v141
    %v143 = vpop.f32.mrf.mxu0
    %144 = vmatprep.mubr.f32.mxu0 0.0
    %145 = vmatmul.mubr.f32.gmra.mxu0 %v67
    %v146 = vpop.f32.mrf.mxu0
    %v147 = vadd.f32 0.0, %v146
    %v148 = vpop.f32.mrf.mxu0
    %149 = vmatprep.mubr.f32.mxu0 0.0
    %150 = vmatmul.mubr.f32.gmra.mxu0 %v70
    %v151 = vpop.f32.mrf.mxu0
    %v152 = vadd.f32 0.0, %v151
    %v153 = vpop.f32.mrf.mxu0
    %154 = vmatprep.mubr.f32.mxu0 0.0
    %155 = vmatmul.mubr.f32.gmra.mxu0 %v73
    %v156 = vpop.f32.mrf.mxu0
    %v157 = vadd.f32 0.0, %v156
    %v158 = vpop.f32.mrf.mxu0
    %159 = vdwg.mxu0
    %v161 = vsel %vm62, %v38, 0
    %v164 = vsel %vm62, %v39, 0
    %v167 = vsel %vm62, %v40, 0
    %v170 = vsel %vm62, %v41, 0
    %172 = vmatprep.subr.mxu0 0.0
    %173 = vmatpush1.msra.mxu0 0.0
    %174 = vmatprep.subr.mxu0 0.0
    %175 = vmatpush1.msra.mxu0 0.0
    %176 = vmatprep.subr.mxu0 0.0
    %177 = vmatpush1.msra.mxu0 0.0
    %178 = vmatprep.subr.mxu0 0.0
    %179 = vmatpush1.msra.mxu0 0.0
    %180 = vmatprep.subr.mxu0 0.0
    %181 = vmatpush1.msra.mxu0 0.0
    %182 = vmatprep.subr.mxu0 0.0
    %183 = vmatpush1.msra.mxu0 0.0
    %184 = vmatprep.subr.mxu0 0.0
    %185 = vmatpush1.msra.mxu0 0.0
    %186 = vmatprep.subr.mxu0 0.0
    %187 = vmatpush1.msra.mxu0 0.0
    %188 = vmatprep.subr.mxu0 0.0
    %189 = vmatpush1.msra.mxu0 0.0
    %190 = vmatprep.subr.mxu0 0.0
    %191 = vmatpush1.msra.mxu0 0.0
    %192 = vmatprep.subr.mxu0 0.0
    %193 = vmatpush1.msra.mxu0 0.0
    %194 = vmatprep.subr.mxu0 0.0
    %195 = vmatpush1.msra.mxu0 0.0
    %196 = vmatprep.subr.mxu0 0.0
    %197 = vmatpush1.msra.mxu0 0.0
    %198 = vmatprep.subr.mxu0 0.0
    %199 = vmatpush1.msra.mxu0 0.0
    %200 = vmatprep.subr.mxu0 0.0
    %201 = vmatpush1.msra.mxu0 0.0
    %202 = vmatprep.subr.mxu0 0.0
    %203 = vmatpush1.msra.mxu0 %v37
    %204 = vmatprep.subr.mxu0 0.0
    %205 = vmatpush2.msra.mxu0 0.0
    %206 = vmatprep.subr.mxu0 0.0
    %207 = vmatpush2.msra.mxu0 0.0
    %208 = vmatprep.subr.mxu0 0.0
    %209 = vmatpush2.msra.mxu0 0.0
    %210 = vmatprep.subr.mxu0 0.0
    %211 = vmatpush2.msra.mxu0 0.0
    %212 = vmatprep.subr.mxu0 0.0
    %213 = vmatpush2.msra.mxu0 0.0
    %214 = vmatprep.subr.mxu0 0.0
    %215 = vmatpush2.msra.mxu0 0.0
    %216 = vmatprep.subr.mxu0 0.0
    %217 = vmatpush2.msra.mxu0 0.0
    %218 = vmatprep.subr.mxu0 0.0
    %219 = vmatpush2.msra.mxu0 0.0
    %220 = vmatprep.subr.mxu0 0.0
    %221 = vmatpush2.msra.mxu0 0.0
    %222 = vmatprep.subr.mxu0 0.0
    %223 = vmatpush2.msra.mxu0 0.0
    %224 = vmatprep.subr.mxu0 0.0
    %225 = vmatpush2.msra.mxu0 0.0
    %226 = vmatprep.subr.mxu0 0.0
    %227 = vmatpush2.msra.mxu0 0.0
    %228 = vmatprep.subr.mxu0 0.0
    %229 = vmatpush2.msra.mxu0 0.0
    %230 = vmatprep.subr.mxu0 0.0
    %231 = vmatpush2.msra.mxu0 0.0
    %232 = vmatprep.subr.mxu0 0.0
    %233 = vmatpush2.msra.mxu0 0.0
    %234 = vmatprep.subr.mxu0 0.0
    %235 = vmatpush2.msra.mxu0 0.0
    %236 = vmatprep.mubr.f32.mxu0 0.0
    %237 = vmatmul.mubr.f32.gmra.mxu0 %v161
    %v238 = vpop.f32.mrf.mxu0
    %v239 = vadd.f32 %v142, %v238
    %v240 = vpop.f32.mrf.mxu0
    %241 = vmatprep.mubr.f32.mxu0 0.0
    %242 = vmatmul.mubr.f32.gmra.mxu0 %v164
    %v243 = vpop.f32.mrf.mxu0
    %v244 = vadd.f32 %v147, %v243
    %v245 = vpop.f32.mrf.mxu0
    %246 = vmatprep.mubr.f32.mxu0 0.0
    %247 = vmatmul.mubr.f32.gmra.mxu0 %v167
    %v248 = vpop.f32.mrf.mxu0
    %v249 = vadd.f32 %v152, %v248
    %v250 = vpop.f32.mrf.mxu0
    %251 = vmatprep.mubr.f32.mxu0 0.0
    %252 = vmatmul.mubr.f32.gmra.mxu0 %v170
    %v253 = vpop.f32.mrf.mxu0
    %v254 = vadd.f32 %v157, %v253
    %v255 = vpop.f32.mrf.mxu0
    %256 = vdwg.mxu0
    %v257 = vld [vmem:[%s2 + $0x40] sm:$0xff]
    %v258 = vld [vmem:[%s2 + $0x48] sm:$0xff]
    %v259 = vld [vmem:[%s2 + $0x50] sm:$0xff]
    %v260 = vld [vmem:[%s2 + $0x58] sm:$0xff]
    %261 = vrot.lane.b32.xlu0 %v29, 126
    %v262 = vpop.permute.xlu0 %261
    %263 = vrot.lane.b32.xlu0 %v30, 126
    %v264 = vpop.permute.xlu0 %263
    %vm265 = vcmask 1031168
    %v266 = vsel %vm265, %v262, %v264
    %v269 = vsel %vm62, %v257, 0
    %v272 = vsel %vm62, %v258, 0
    %v275 = vsel %vm62, %v259, 0
    %v278 = vsel %vm62, %v260, 0
    %280 = vmatprep.subr.mxu0 0.0
    %281 = vmatpush1.msra.mxu0 0.0
    %282 = vmatprep.subr.mxu0 0.0
    %283 = vmatpush1.msra.mxu0 0.0
    %284 = vmatprep.subr.mxu0 0.0
    %285 = vmatpush1.msra.mxu0 0.0
    %286 = vmatprep.subr.mxu0 0.0
    %287 = vmatpush1.msra.mxu0 0.0
    %288 = vmatprep.subr.mxu0 0.0
    %289 = vmatpush1.msra.mxu0 0.0
    %290 = vmatprep.subr.mxu0 0.0
    %291 = vmatpush1.msra.mxu0 0.0
    %292 = vmatprep.subr.mxu0 0.0
    %293 = vmatpush1.msra.mxu0 0.0
    %294 = vmatprep.subr.mxu0 0.0
    %295 = vmatpush1.msra.mxu0 0.0
    %296 = vmatprep.subr.mxu0 0.0
    %297 = vmatpush1.msra.mxu0 0.0
    %298 = vmatprep.subr.mxu0 0.0
    %299 = vmatpush1.msra.mxu0 0.0
    %300 = vmatprep.subr.mxu0 0.0
    %301 = vmatpush1.msra.mxu0 0.0
    %302 = vmatprep.subr.mxu0 0.0
    %303 = vmatpush1.msra.mxu0 0.0
    %304 = vmatprep.subr.mxu0 0.0
    %305 = vmatpush1.msra.mxu0 0.0
    %306 = vmatprep.subr.mxu0 0.0
    %307 = vmatpush1.msra.mxu0 0.0
    %308 = vmatprep.subr.mxu0 0.0
    %309 = vmatpush1.msra.mxu0 0.0
    %310 = vmatprep.subr.mxu0 0.0
    %311 = vmatpush1.msra.mxu0 %v266
    %312 = vmatprep.subr.mxu0 0.0
    %313 = vmatpush2.msra.mxu0 0.0
    %314 = vmatprep.subr.mxu0 0.0
    %315 = vmatpush2.msra.mxu0 0.0
    %316 = vmatprep.subr.mxu0 0.0
    %317 = vmatpush2.msra.mxu0 0.0
    %318 = vmatprep.subr.mxu0 0.0
    %319 = vmatpush2.msra.mxu0 0.0
    %320 = vmatprep.subr.mxu0 0.0
    %321 = vmatpush2.msra.mxu0 0.0
    %322 = vmatprep.subr.mxu0 0.0
    %323 = vmatpush2.msra.mxu0 0.0
    %324 = vmatprep.subr.mxu0 0.0
    %325 = vmatpush2.msra.mxu0 0.0
    %326 = vmatprep.subr.mxu0 0.0
    %327 = vmatpush2.msra.mxu0 0.0
    %328 = vmatprep.subr.mxu0 0.0
    %329 = vmatpush2.msra.mxu0 0.0
    %330 = vmatprep.subr.mxu0 0.0
    %331 = vmatpush2.msra.mxu0 0.0
    %332 = vmatprep.subr.mxu0 0.0
    %333 = vmatpush2.msra.mxu0 0.0
    %334 = vmatprep.subr.mxu0 0.0
    %335 = vmatpush2.msra.mxu0 0.0
    %336 = vmatprep.subr.mxu0 0.0
    %337 = vmatpush2.msra.mxu0 0.0
    %338 = vmatprep.subr.mxu0 0.0
    %339 = vmatpush2.msra.mxu0 0.0
    %340 = vmatprep.subr.mxu0 0.0
    %341 = vmatpush2.msra.mxu0 0.0
    %342 = vmatprep.subr.mxu0 0.0
    %343 = vmatpush2.msra.mxu0 0.0
    %344 = vmatprep.mubr.f32.mxu0 0.0
    %345 = vmatmul.mubr.f32.gmra.mxu0 %v269
    %v346 = vpop.f32.mrf.mxu0
    %v347 = vadd.f32 0.0, %v346
    %v348 = vpop.f32.mrf.mxu0
    %349 = vmatprep.mubr.f32.mxu0 0.0
    %350 = vmatmul.mubr.f32.gmra.mxu0 %v272
    %v351 = vpop.f32.mrf.mxu0
    %v352 = vadd.f32 0.0, %v351
    %v353 = vpop.f32.mrf.mxu0
    %354 = vmatprep.mubr.f32.mxu0 0.0
    %355 = vmatmul.mubr.f32.gmra.mxu0 %v275
    %v356 = vpop.f32.mrf.mxu0
    %v357 = vadd.f32 0.0, %v356
    %v358 = vpop.f32.mrf.mxu0
    %359 = vmatprep.mubr.f32.mxu0 0.0
    %360 = vmatmul.mubr.f32.gmra.mxu0 %v278
    %v361 = vpop.f32.mrf.mxu0
    %v362 = vadd.f32 0.0, %v361
    %v363 = vpop.f32.mrf.mxu0
    %364 = vdwg.mxu0
    %v365 = vadd.f32 %v239, %v347
    %v366 = vadd.f32 %v244, %v352
    %v367 = vadd.f32 %v249, %v357
    %v368 = vadd.f32 %v254, %v362
    %v369 = vsel %vm22, 1, 0
    %v370 = vlaneseq
    %v371 = vshrl.u32 %v370, 7
    %v372 = vsub.s32 0, %v371
    %v373 = vrot.slane %v369, %v372
    %vm374 = vcmp.eq.s32.totalorder %v373, 1
    %375 = vrot.lane.b32.xlu0 %v29, 125
    %v376 = vpop.permute.xlu0 %375
    %377 = vrot.lane.b32.xlu0 %v30, 125
    %v378 = vpop.permute.xlu0 %377
    %vm379 = vcmask 1022976
    %v380 = vsel %vm379, %v376, %v378
    %v382 = vsel %vm374, %v380, 0.0
    %v383 = vld [vmem:[%s2 + $0x60] sm:$0xff]
    %v384 = vld [vmem:[%s2 + $0x68] sm:$0xff]
    %v385 = vld [vmem:[%s2 + $0x70] sm:$0xff]
    %v386 = vld [vmem:[%s2 + $0x78] sm:$0xff]
    %v388 = vsel %vm62, %v383, 0
    %v391 = vsel %vm62, %v384, 0
    %v394 = vsel %vm62, %v385, 0
    %v397 = vsel %vm62, %v386, 0
    %399 = vmatprep.subr.mxu0 0.0
    %400 = vmatpush1.msra.mxu0 0.0
    %401 = vmatprep.subr.mxu0 0.0
    %402 = vmatpush1.msra.mxu0 0.0
    %403 = vmatprep.subr.mxu0 0.0
    %404 = vmatpush1.msra.mxu0 0.0
    %405 = vmatprep.subr.mxu0 0.0
    %406 = vmatpush1.msra.mxu0 0.0
    %407 = vmatprep.subr.mxu0 0.0
    %408 = vmatpush1.msra.mxu0 0.0
    %409 = vmatprep.subr.mxu0 0.0
    %410 = vmatpush1.msra.mxu0 0.0
    %411 = vmatprep.subr.mxu0 0.0
    %412 = vmatpush1.msra.mxu0 0.0
    %413 = vmatprep.subr.mxu0 0.0
    %414 = vmatpush1.msra.mxu0 0.0
    %415 = vmatprep.subr.mxu0 0.0
    %416 = vmatpush1.msra.mxu0 0.0
    %417 = vmatprep.subr.mxu0 0.0
    %418 = vmatpush1.msra.mxu0 0.0
    %419 = vmatprep.subr.mxu0 0.0
    %420 = vmatpush1.msra.mxu0 0.0
    %421 = vmatprep.subr.mxu0 0.0
    %422 = vmatpush1.msra.mxu0 0.0
    %423 = vmatprep.subr.mxu0 0.0
    %424 = vmatpush1.msra.mxu0 0.0
    %425 = vmatprep.subr.mxu0 0.0
    %426 = vmatpush1.msra.mxu0 0.0
    %427 = vmatprep.subr.mxu0 0.0
    %428 = vmatpush1.msra.mxu0 0.0
    %429 = vmatprep.subr.mxu0 0.0
    %430 = vmatpush1.msra.mxu0 %v382
    %431 = vmatprep.subr.mxu0 0.0
    %432 = vmatpush2.msra.mxu0 0.0
    %433 = vmatprep.subr.mxu0 0.0
    %434 = vmatpush2.msra.mxu0 0.0
    %435 = vmatprep.subr.mxu0 0.0
    %436 = vmatpush2.msra.mxu0 0.0
    %437 = vmatprep.subr.mxu0 0.0
    %438 = vmatpush2.msra.mxu0 0.0
    %439 = vmatprep.subr.mxu0 0.0
    %440 = vmatpush2.msra.mxu0 0.0
    %441 = vmatprep.subr.mxu0 0.0
    %442 = vmatpush2.msra.mxu0 0.0
    %443 = vmatprep.subr.mxu0 0.0
    %444 = vmatpush2.msra.mxu0 0.0
    %445 = vmatprep.subr.mxu0 0.0
    %446 = vmatpush2.msra.mxu0 0.0
    %447 = vmatprep.subr.mxu0 0.0
    %448 = vmatpush2.msra.mxu0 0.0
    %449 = vmatprep.subr.mxu0 0.0
    %450 = vmatpush2.msra.mxu0 0.0
    %451 = vmatprep.subr.mxu0 0.0
    %452 = vmatpush2.msra.mxu0 0.0
    %453 = vmatprep.subr.mxu0 0.0
    %454 = vmatpush2.msra.mxu0 0.0
    %455 = vmatprep.subr.mxu0 0.0
    %456 = vmatpush2.msra.mxu0 0.0
    %457 = vmatprep.subr.mxu0 0.0
    %458 = vmatpush2.msra.mxu0 0.0
    %459 = vmatprep.subr.mxu0 0.0
    %460 = vmatpush2.msra.mxu0 0.0
    %461 = vmatprep.subr.mxu0 0.0
    %462 = vmatpush2.msra.mxu0 0.0
    %463 = vmatprep.mubr.f32.mxu0 0.0
    %464 = vmatmul.mubr.f32.gmra.mxu0 %v388
    %v465 = vpop.f32.mrf.mxu0
    %v466 = vadd.f32 0.0, %v465
    %v467 = vpop.f32.mrf.mxu0
    %468 = vmatprep.mubr.f32.mxu0 0.0
    %469 = vmatmul.mubr.f32.gmra.mxu0 %v391
    %v470 = vpop.f32.mrf.mxu0
    %v471 = vadd.f32 0.0, %v470
    %v472 = vpop.f32.mrf.mxu0
    %473 = vmatprep.mubr.f32.mxu0 0.0
    %474 = vmatmul.mubr.f32.gmra.mxu0 %v394
    %v475 = vpop.f32.mrf.mxu0
    %v476 = vadd.f32 0.0, %v475
    %v477 = vpop.f32.mrf.mxu0
    %478 = vmatprep.mubr.f32.mxu0 0.0
    %479 = vmatmul.mubr.f32.gmra.mxu0 %v397
    %v480 = vpop.f32.mrf.mxu0
    %v481 = vadd.f32 0.0, %v480
    %v482 = vpop.f32.mrf.mxu0
    %483 = vdwg.mxu0
    %v484 = vadd.f32 %v365, %v466
    %v485 = vadd.f32 %v366, %v471
    %v486 = vadd.f32 %v367, %v476
    %v487 = vadd.f32 %v368, %v481
    %v488 = vsel %vm23, 1, 0
    %v489 = vlaneseq
    %v490 = vshrl.u32 %v489, 7
    %v491 = vsub.s32 0, %v490
    %v492 = vrot.slane %v488, %v491
    %vm493 = vcmp.eq.s32.totalorder %v492, 1
    %494 = vrot.lane.b32.xlu0 %v29, 124
    %v495 = vpop.permute.xlu0 %494
    %496 = vrot.lane.b32.xlu0 %v30, 124
    %v497 = vpop.permute.xlu0 %496
    %vm498 = vcmask 1014784
    %v499 = vsel %vm498, %v495, %v497
    %v501 = vsel %vm493, %v499, 0.0
    %v502 = vld [vmem:[%s2 + $0x80] sm:$0xff]
    %v503 = vld [vmem:[%s2 + $0x88] sm:$0xff]
    %v504 = vld [vmem:[%s2 + $0x90] sm:$0xff]
    %v505 = vld [vmem:[%s2 + $0x98] sm:$0xff]
    %v507 = vsel %vm62, %v502, 0
    %v510 = vsel %vm62, %v503, 0
    %v513 = vsel %vm62, %v504, 0
    %v516 = vsel %vm62, %v505, 0
    %518 = vmatprep.subr.mxu0 0.0
    %519 = vmatpush1.msra.mxu0 0.0
    %520 = vmatprep.subr.mxu0 0.0
    %521 = vmatpush1.msra.mxu0 0.0
    %522 = vmatprep.subr.mxu0 0.0
    %523 = vmatpush1.msra.mxu0 0.0
    %524 = vmatprep.subr.mxu0 0.0
    %525 = vmatpush1.msra.mxu0 0.0
    %526 = vmatprep.subr.mxu0 0.0
    %527 = vmatpush1.msra.mxu0 0.0
    %528 = vmatprep.subr.mxu0 0.0
    %529 = vmatpush1.msra.mxu0 0.0
    %530 = vmatprep.subr.mxu0 0.0
    %531 = vmatpush1.msra.mxu0 0.0
    %532 = vmatprep.subr.mxu0 0.0
    %533 = vmatpush1.msra.mxu0 0.0
    %534 = vmatprep.subr.mxu0 0.0
    %535 = vmatpush1.msra.mxu0 0.0
    %536 = vmatprep.subr.mxu0 0.0
    %537 = vmatpush1.msra.mxu0 0.0
    %538 = vmatprep.subr.mxu0 0.0
    %539 = vmatpush1.msra.mxu0 0.0
    %540 = vmatprep.subr.mxu0 0.0
    %541 = vmatpush1.msra.mxu0 0.0
    %542 = vmatprep.subr.mxu0 0.0
    %543 = vmatpush1.msra.mxu0 0.0
    %544 = vmatprep.subr.mxu0 0.0
    %545 = vmatpush1.msra.mxu0 0.0
    %546 = vmatprep.subr.mxu0 0.0
    %547 = vmatpush1.msra.mxu0 0.0
    %548 = vmatprep.subr.mxu0 0.0
    %549 = vmatpush1.msra.mxu0 %v501
    %550 = vmatprep.subr.mxu0 0.0
    %551 = vmatpush2.msra.mxu0 0.0
    %552 = vmatprep.subr.mxu0 0.0
    %553 = vmatpush2.msra.mxu0 0.0
    %554 = vmatprep.subr.mxu0 0.0
    %555 = vmatpush2.msra.mxu0 0.0
    %556 = vmatprep.subr.mxu0 0.0
    %557 = vmatpush2.msra.mxu0 0.0
    %558 = vmatprep.subr.mxu0 0.0
    %559 = vmatpush2.msra.mxu0 0.0
    %560 = vmatprep.subr.mxu0 0.0
    %561 = vmatpush2.msra.mxu0 0.0
    %562 = vmatprep.subr.mxu0 0.0
    %563 = vmatpush2.msra.mxu0 0.0
    %564 = vmatprep.subr.mxu0 0.0
    %565 = vmatpush2.msra.mxu0 0.0
    %566 = vmatprep.subr.mxu0 0.0
    %567 = vmatpush2.msra.mxu0 0.0
    %568 = vmatprep.subr.mxu0 0.0
    %569 = vmatpush2.msra.mxu0 0.0
    %570 = vmatprep.subr.mxu0 0.0
    %571 = vmatpush2.msra.mxu0 0.0
    %572 = vmatprep.subr.mxu0 0.0
    %573 = vmatpush2.msra.mxu0 0.0
    %574 = vmatprep.subr.mxu0 0.0
    %575 = vmatpush2.msra.mxu0 0.0
    %576 = vmatprep.subr.mxu0 0.0
    %577 = vmatpush2.msra.mxu0 0.0
    %578 = vmatprep.subr.mxu0 0.0
    %579 = vmatpush2.msra.mxu0 0.0
    %580 = vmatprep.subr.mxu0 0.0
    %581 = vmatpush2.msra.mxu0 0.0
    %582 = vmatprep.mubr.f32.mxu0 0.0
    %583 = vmatmul.mubr.f32.gmra.mxu0 %v507
    %v584 = vpop.f32.mrf.mxu0
    %v585 = vadd.f32 0.0, %v584
    %v586 = vpop.f32.mrf.mxu0
    %587 = vmatprep.mubr.f32.mxu0 0.0
    %588 = vmatmul.mubr.f32.gmra.mxu0 %v510
    %v589 = vpop.f32.mrf.mxu0
    %v590 = vadd.f32 0.0, %v589
    %v591 = vpop.f32.mrf.mxu0
    %592 = vmatprep.mubr.f32.mxu0 0.0
    %593 = vmatmul.mubr.f32.gmra.mxu0 %v513
    %v594 = vpop.f32.mrf.mxu0
    %v595 = vadd.f32 0.0, %v594
    %v596 = vpop.f32.mrf.mxu0
    %597 = vmatprep.mubr.f32.mxu0 0.0
    %598 = vmatmul.mubr.f32.gmra.mxu0 %v516
    %v599 = vpop.f32.mrf.mxu0
    %v600 = vadd.f32 0.0, %v599
    %v601 = vpop.f32.mrf.mxu0
    %602 = vdwg.mxu0
    %v603 = vadd.f32 %v484, %v585
    %v604 = vadd.f32 %v485, %v590
    %v605 = vadd.f32 %v486, %v595
    %v606 = vadd.f32 %v487, %v600
    %v607 = vld [vmem:[%s3] sm:$0xff]
    %v608 = vld [vmem:[%s3 + $0x8] sm:$0xff]
    %v609 = vld [vmem:[%s3 + $0x10] sm:$0xff]
    %v610 = vld [vmem:[%s3 + $0x18] sm:$0xff]
    %612 = vset.pattern.permute.xlu0 0
    %613 = vperm.xlu0 %612, %v607
    %v614 = vpop.permute.xlu0 %613
    %617 = vset.pattern.permute.xlu0 0
    %618 = vperm.xlu0 %617, %v608
    %v619 = vpop.permute.xlu0 %618
    %622 = vset.pattern.permute.xlu0 0
    %623 = vperm.xlu0 %622, %v609
    %v624 = vpop.permute.xlu0 %623
    %627 = vset.pattern.permute.xlu0 0
    %628 = vperm.xlu0 %627, %v610
    %v629 = vpop.permute.xlu0 %628
    %v631 = vadd.f32 %v603, %v614
    %v632 = vadd.f32 %v604, %v619
    %v633 = vadd.f32 %v605, %v624
    %v634 = vadd.f32 %v606, %v629
    %vm635 = vcmp.gt.f32.partialorder %v631, 0.0
    %vm636 = vcmp.gt.f32.partialorder %v632, 0.0
    %vm637 = vcmp.gt.f32.partialorder %v633, 0.0
    %vm638 = vcmp.gt.f32.partialorder %v634, 0.0
    %v639 = vmin.f32 %v631, 0.0
    %v640 = vmin.f32 %v632, 0.0
    %v641 = vmin.f32 %v633, 0.0
    %v642 = vmin.f32 %v634, 0.0
    %v643 = vmul.f32 %v639, 1.442695
    %v644 = vpow.pop %v643
    %v645 = vmul.f32 %v640, 1.442695
    %v646 = vpow.pop %v645
    %v647 = vmul.f32 %v641, 1.442695
    %v648 = vpow.pop %v647
    %v649 = vmul.f32 %v642, 1.442695
    %v650 = vpow.pop %v649
    %v651 = vsub.f32 %v644, 1.0
    %v652 = vsub.f32 %v646, 1.0
    %v653 = vsub.f32 %v648, 1.0
    %v654 = vsub.f32 %v650, 1.0
    %v655 = vsel %vm635, %v631, %v651
    %v656 = vsel %vm636, %v632, %v652
    %v657 = vsel %vm637, %v633, %v653
    %v658 = vsel %vm638, %v634, %v654
    %663 = vrot.lane.b32.xlu0 %v655, 2
    %v664 = vpop.permute.xlu0 %663
    %665 = vrot.lane.b32.xlu0 %v656, 2
    %v666 = vpop.permute.xlu0 %665
    %667 = vrot.lane.b32.xlu0 %v657, 2
    %v668 = vpop.permute.xlu0 %667
    %669 = vrot.lane.b32.xlu0 %v658, 2
    %v670 = vpop.permute.xlu0 %669
    %v675 = vsel %vm28, 0.0, %v664
    %v676 = vsel %vm28, 0.0, %v666
    %v677 = vsel %vm28, 0.0, %v668
    %v678 = vsel %vm28, 0.0, %v670
    %v679 = vsel %vm28, %v664, 0.0
    %v680 = vsel %vm28, %v666, 0.0
    %v681 = vsel %vm28, %v668, 0.0
    %v682 = vsel %vm28, %v670, 0.0
    %v683 = vsel %vm36, %v675, 0.0
    %v684 = vsel %vm36, %v676, 0.0
    %v685 = vsel %vm36, %v677, 0.0
    %v686 = vsel %vm36, %v678, 0.0
    %v687 = vld [vmem:[%s2 + $0xa0] sm:$0xff]
    %v688 = vld [vmem:[%s2 + $0xa8] sm:$0xff]
    %v689 = vld [vmem:[%s2 + $0xb0] sm:$0xff]
    %v690 = vld [vmem:[%s2 + $0xb8] sm:$0xff]
    %699 = vrot.lane.b32.xlu0 %v675, 127
    %v700 = vpop.permute.xlu0 %699
    %701 = vrot.lane.b32.xlu0 %v679, 127
    %v702 = vpop.permute.xlu0 %701
    %703 = vrot.lane.b32.xlu0 %v676, 127
    %v704 = vpop.permute.xlu0 %703
    %705 = vrot.lane.b32.xlu0 %v680, 127
    %v706 = vpop.permute.xlu0 %705
    %707 = vrot.lane.b32.xlu0 %v677, 127
    %v708 = vpop.permute.xlu0 %707
    %709 = vrot.lane.b32.xlu0 %v681, 127
    %v710 = vpop.permute.xlu0 %709
    %711 = vrot.lane.b32.xlu0 %v678, 127
    %v712 = vpop.permute.xlu0 %711
    %713 = vrot.lane.b32.xlu0 %v682, 127
    %v714 = vpop.permute.xlu0 %713
    %v715 = vsel %vm54, %v700, %v702
    %v716 = vsel %vm54, %v704, %v706
    %v717 = vsel %vm54, %v708, %v710
    %v718 = vsel %vm54, %v712, %v714
    %v723 = vsel %vm47, %v715, 0.0
    %v724 = vsel %vm47, %v716, 0.0
    %v725 = vsel %vm47, %v717, 0.0
    %v726 = vsel %vm47, %v718, 0.0
    %v727 = vld [vmem:[%s2 + $0xc0] sm:$0xff]
    %v728 = vld [vmem:[%s2 + $0xc8] sm:$0xff]
    %v729 = vld [vmem:[%s2 + $0xd0] sm:$0xff]
    %v730 = vld [vmem:[%s2 + $0xd8] sm:$0xff]
    %vm731 = vcmask 261120
    %v733 = vsel %vm731, %v727, 0
    %v736 = vsel %vm731, %v728, 0
    %v739 = vsel %vm731, %v729, 0
    %v742 = vsel %vm731, %v730, 0
    %744 = vmatprep.subr.mxu0 0.0
    %745 = vmatpush1.msra.mxu0 0.0
    %746 = vmatprep.subr.mxu0 0.0
    %747 = vmatpush1.msra.mxu0 0.0
    %748 = vmatprep.subr.mxu0 0.0
    %749 = vmatpush1.msra.mxu0 0.0
    %750 = vmatprep.subr.mxu0 0.0
    %751 = vmatpush1.msra.mxu0 0.0
    %752 = vmatprep.subr.mxu0 0.0
    %753 = vmatpush1.msra.mxu0 0.0
    %754 = vmatprep.subr.mxu0 0.0
    %755 = vmatpush1.msra.mxu0 0.0
    %756 = vmatprep.subr.mxu0 0.0
    %757 = vmatpush1.msra.mxu0 0.0
    %758 = vmatprep.subr.mxu0 0.0
    %759 = vmatpush1.msra.mxu0 0.0
    %760 = vmatprep.subr.mxu0 0.0
    %761 = vmatpush1.msra.mxu0 0.0
    %762 = vmatprep.subr.mxu0 0.0
    %763 = vmatpush1.msra.mxu0 0.0
    %764 = vmatprep.subr.mxu0 0.0
    %765 = vmatpush1.msra.mxu0 0.0
    %766 = vmatprep.subr.mxu0 0.0
    %767 = vmatpush1.msra.mxu0 0.0
    %768 = vmatprep.subr.mxu0 0.0
    %769 = vmatpush1.msra.mxu0 %v726
    %770 = vmatprep.subr.mxu0 0.0
    %771 = vmatpush1.msra.mxu0 %v725
    %772 = vmatprep.subr.mxu0 0.0
    %773 = vmatpush1.msra.mxu0 %v724
    %774 = vmatprep.subr.mxu0 0.0
    %775 = vmatpush1.msra.mxu0 %v723
    %776 = vmatprep.subr.mxu0 0.0
    %777 = vmatpush2.msra.mxu0 0.0
    %778 = vmatprep.subr.mxu0 0.0
    %779 = vmatpush2.msra.mxu0 0.0
    %780 = vmatprep.subr.mxu0 0.0
    %781 = vmatpush2.msra.mxu0 0.0
    %782 = vmatprep.subr.mxu0 0.0
    %783 = vmatpush2.msra.mxu0 0.0
    %784 = vmatprep.subr.mxu0 0.0
    %785 = vmatpush2.msra.mxu0 0.0
    %786 = vmatprep.subr.mxu0 0.0
    %787 = vmatpush2.msra.mxu0 0.0
    %788 = vmatprep.subr.mxu0 0.0
    %789 = vmatpush2.msra.mxu0 0.0
    %790 = vmatprep.subr.mxu0 0.0
    %791 = vmatpush2.msra.mxu0 0.0
    %792 = vmatprep.subr.mxu0 0.0
    %793 = vmatpush2.msra.mxu0 0.0
    %794 = vmatprep.subr.mxu0 0.0
    %795 = vmatpush2.msra.mxu0 0.0
    %796 = vmatprep.subr.mxu0 0.0
    %797 = vmatpush2.msra.mxu0 0.0
    %798 = vmatprep.subr.mxu0 0.0
    %799 = vmatpush2.msra.mxu0 0.0
    %800 = vmatprep.subr.mxu0 0.0
    %801 = vmatpush2.msra.mxu0 0.0
    %802 = vmatprep.subr.mxu0 0.0
    %803 = vmatpush2.msra.mxu0 0.0
    %804 = vmatprep.subr.mxu0 0.0
    %805 = vmatpush2.msra.mxu0 0.0
    %806 = vmatprep.subr.mxu0 0.0
    %807 = vmatpush2.msra.mxu0 0.0
    %808 = vmatprep.mubr.f32.mxu0 0.0
    %809 = vmatmul.mubr.f32.gmra.mxu0 %v733
    %v810 = vpop.f32.mrf.mxu0
    %v811 = vadd.f32 0.0, %v810
    %v812 = vpop.f32.mrf.mxu0
    %813 = vmatprep.mubr.f32.mxu0 0.0
    %814 = vmatmul.mubr.f32.gmra.mxu0 %v736
    %v815 = vpop.f32.mrf.mxu0
    %v816 = vadd.f32 0.0, %v815
    %v817 = vpop.f32.mrf.mxu0
    %818 = vmatprep.mubr.f32.mxu0 0.0
    %819 = vmatmul.mubr.f32.gmra.mxu0 %v739
    %v820 = vpop.f32.mrf.mxu0
    %v821 = vadd.f32 0.0, %v820
    %v822 = vpop.f32.mrf.mxu0
    %823 = vmatprep.mubr.f32.mxu0 0.0
    %824 = vmatmul.mubr.f32.gmra.mxu0 %v742
    %v825 = vpop.f32.mrf.mxu0
    %v826 = vadd.f32 0.0, %v825
    %v827 = vpop.f32.mrf.mxu0
    %828 = vdwg.mxu0
    %v830 = vsel %vm731, %v687, 0
    %v833 = vsel %vm731, %v688, 0
    %v836 = vsel %vm731, %v689, 0
    %v839 = vsel %vm731, %v690, 0
    %841 = vmatprep.subr.mxu0 0.0
    %842 = vmatpush1.msra.mxu0 0.0
    %843 = vmatprep.subr.mxu0 0.0
    %844 = vmatpush1.msra.mxu0 0.0
    %845 = vmatprep.subr.mxu0 0.0
    %846 = vmatpush1.msra.mxu0 0.0
    %847 = vmatprep.subr.mxu0 0.0
    %848 = vmatpush1.msra.mxu0 0.0
    %849 = vmatprep.subr.mxu0 0.0
    %850 = vmatpush1.msra.mxu0 0.0
    %851 = vmatprep.subr.mxu0 0.0
    %852 = vmatpush1.msra.mxu0 0.0
    %853 = vmatprep.subr.mxu0 0.0
    %854 = vmatpush1.msra.mxu0 0.0
    %855 = vmatprep.subr.mxu0 0.0
    %856 = vmatpush1.msra.mxu0 0.0
    %857 = vmatprep.subr.mxu0 0.0
    %858 = vmatpush1.msra.mxu0 0.0
    %859 = vmatprep.subr.mxu0 0.0
    %860 = vmatpush1.msra.mxu0 0.0
    %861 = vmatprep.subr.mxu0 0.0
    %862 = vmatpush1.msra.mxu0 0.0
    %863 = vmatprep.subr.mxu0 0.0
    %864 = vmatpush1.msra.mxu0 0.0
    %865 = vmatprep.subr.mxu0 0.0
    %866 = vmatpush1.msra.mxu0 %v686
    %867 = vmatprep.subr.mxu0 0.0
    %868 = vmatpush1.msra.mxu0 %v685
    %869 = vmatprep.subr.mxu0 0.0
    %870 = vmatpush1.msra.mxu0 %v684
    %871 = vmatprep.subr.mxu0 0.0
    %872 = vmatpush1.msra.mxu0 %v683
    %873 = vmatprep.subr.mxu0 0.0
    %874 = vmatpush2.msra.mxu0 0.0
    %875 = vmatprep.subr.mxu0 0.0
    %876 = vmatpush2.msra.mxu0 0.0
    %877 = vmatprep.subr.mxu0 0.0
    %878 = vmatpush2.msra.mxu0 0.0
    %879 = vmatprep.subr.mxu0 0.0
    %880 = vmatpush2.msra.mxu0 0.0
    %881 = vmatprep.subr.mxu0 0.0
    %882 = vmatpush2.msra.mxu0 0.0
    %883 = vmatprep.subr.mxu0 0.0
    %884 = vmatpush2.msra.mxu0 0.0
    %885 = vmatprep.subr.mxu0 0.0
    %886 = vmatpush2.msra.mxu0 0.0
    %887 = vmatprep.subr.mxu0 0.0
    %888 = vmatpush2.msra.mxu0 0.0
    %889 = vmatprep.subr.mxu0 0.0
    %890 = vmatpush2.msra.mxu0 0.0
    %891 = vmatprep.subr.mxu0 0.0
    %892 = vmatpush2.msra.mxu0 0.0
    %893 = vmatprep.subr.mxu0 0.0
    %894 = vmatpush2.msra.mxu0 0.0
    %895 = vmatprep.subr.mxu0 0.0
    %896 = vmatpush2.msra.mxu0 0.0
    %897 = vmatprep.subr.mxu0 0.0
    %898 = vmatpush2.msra.mxu0 0.0
    %899 = vmatprep.subr.mxu0 0.0
    %900 = vmatpush2.msra.mxu0 0.0
    %901 = vmatprep.subr.mxu0 0.0
    %902 = vmatpush2.msra.mxu0 0.0
    %903 = vmatprep.subr.mxu0 0.0
    %904 = vmatpush2.msra.mxu0 0.0
    %905 = vmatprep.mubr.f32.mxu0 0.0
    %906 = vmatmul.mubr.f32.gmra.mxu0 %v830
    %v907 = vpop.f32.mrf.mxu0
    %v908 = vadd.f32 %v811, %v907
    %v909 = vpop.f32.mrf.mxu0
    %910 = vmatprep.mubr.f32.mxu0 0.0
    %911 = vmatmul.mubr.f32.gmra.mxu0 %v833
    %v912 = vpop.f32.mrf.mxu0
    %v913 = vadd.f32 %v816, %v912
    %v914 = vpop.f32.mrf.mxu0
    %915 = vmatprep.mubr.f32.mxu0 0.0
    %916 = vmatmul.mubr.f32.gmra.mxu0 %v836
    %v917 = vpop.f32.mrf.mxu0
    %v918 = vadd.f32 %v821, %v917
    %v919 = vpop.f32.mrf.mxu0
    %920 = vmatprep.mubr.f32.mxu0 0.0
    %921 = vmatmul.mubr.f32.gmra.mxu0 %v839
    %v922 = vpop.f32.mrf.mxu0
    %v923 = vadd.f32 %v826, %v922
    %v924 = vpop.f32.mrf.mxu0
    %925 = vdwg.mxu0
    %v926 = vld [vmem:[%s2 + $0xe0] sm:$0xff]
    %v927 = vld [vmem:[%s2 + $0xe8] sm:$0xff]
    %v928 = vld [vmem:[%s2 + $0xf0] sm:$0xff]
    %v929 = vld [vmem:[%s2 + $0xf8] sm:$0xff]
    %930 = vrot.lane.b32.xlu0 %v675, 126
    %v931 = vpop.permute.xlu0 %930
    %932 = vrot.lane.b32.xlu0 %v679, 126
    %v933 = vpop.permute.xlu0 %932
    %934 = vrot.lane.b32.xlu0 %v676, 126
    %v935 = vpop.permute.xlu0 %934
    %936 = vrot.lane.b32.xlu0 %v680, 126
    %v937 = vpop.permute.xlu0 %936
    %938 = vrot.lane.b32.xlu0 %v677, 126
    %v939 = vpop.permute.xlu0 %938
    %940 = vrot.lane.b32.xlu0 %v681, 126
    %v941 = vpop.permute.xlu0 %940
    %942 = vrot.lane.b32.xlu0 %v678, 126
    %v943 = vpop.permute.xlu0 %942
    %944 = vrot.lane.b32.xlu0 %v682, 126
    %v945 = vpop.permute.xlu0 %944
    %v946 = vsel %vm265, %v931, %v933
    %v947 = vsel %vm265, %v935, %v937
    %v948 = vsel %vm265, %v939, %v941
    %v949 = vsel %vm265, %v943, %v945
    %v955 = vsel %vm731, %v926, 0
    %v958 = vsel %vm731, %v927, 0
    %v961 = vsel %vm731, %v928, 0
    %v964 = vsel %vm731, %v929, 0
    %966 = vmatprep.subr.mxu0 0.0
    %967 = vmatpush1.msra.mxu0 0.0
    %968 = vmatprep.subr.mxu0 0.0
    %969 = vmatpush1.msra.mxu0 0.0
    %970 = vmatprep.subr.mxu0 0.0
    %971 = vmatpush1.msra.mxu0 0.0
    %972 = vmatprep.subr.mxu0 0.0
    %973 = vmatpush1.msra.mxu0 0.0
    %974 = vmatprep.subr.mxu0 0.0
    %975 = vmatpush1.msra.mxu0 0.0
    %976 = vmatprep.subr.mxu0 0.0
    %977 = vmatpush1.msra.mxu0 0.0
    %978 = vmatprep.subr.mxu0 0.0
    %979 = vmatpush1.msra.mxu0 0.0
    %980 = vmatprep.subr.mxu0 0.0
    %981 = vmatpush1.msra.mxu0 0.0
    %982 = vmatprep.subr.mxu0 0.0
    %983 = vmatpush1.msra.mxu0 0.0
    %984 = vmatprep.subr.mxu0 0.0
    %985 = vmatpush1.msra.mxu0 0.0
    %986 = vmatprep.subr.mxu0 0.0
    %987 = vmatpush1.msra.mxu0 0.0
    %988 = vmatprep.subr.mxu0 0.0
    %989 = vmatpush1.msra.mxu0 0.0
    %990 = vmatprep.subr.mxu0 0.0
    %991 = vmatpush1.msra.mxu0 %v949
    %992 = vmatprep.subr.mxu0 0.0
    %993 = vmatpush1.msra.mxu0 %v948
    %994 = vmatprep.subr.mxu0 0.0
    %995 = vmatpush1.msra.mxu0 %v947
    %996 = vmatprep.subr.mxu0 0.0
    %997 = vmatpush1.msra.mxu0 %v946
    %998 = vmatprep.subr.mxu0 0.0
    %999 = vmatpush2.msra.mxu0 0.0
    %1000 = vmatprep.subr.mxu0 0.0
    %1001 = vmatpush2.msra.mxu0 0.0
    %1002 = vmatprep.subr.mxu0 0.0
    %1003 = vmatpush2.msra.mxu0 0.0
    %1004 = vmatprep.subr.mxu0 0.0
    %1005 = vmatpush2.msra.mxu0 0.0
    %1006 = vmatprep.subr.mxu0 0.0
    %1007 = vmatpush2.msra.mxu0 0.0
    %1008 = vmatprep.subr.mxu0 0.0
    %1009 = vmatpush2.msra.mxu0 0.0
    %1010 = vmatprep.subr.mxu0 0.0
    %1011 = vmatpush2.msra.mxu0 0.0
    %1012 = vmatprep.subr.mxu0 0.0
    %1013 = vmatpush2.msra.mxu0 0.0
    %1014 = vmatprep.subr.mxu0 0.0
    %1015 = vmatpush2.msra.mxu0 0.0
    %1016 = vmatprep.subr.mxu0 0.0
    %1017 = vmatpush2.msra.mxu0 0.0
    %1018 = vmatprep.subr.mxu0 0.0
    %1019 = vmatpush2.msra.mxu0 0.0
    %1020 = vmatprep.subr.mxu0 0.0
    %1021 = vmatpush2.msra.mxu0 0.0
    %1022 = vmatprep.subr.mxu0 0.0
    %1023 = vmatpush2.msra.mxu0 0.0
    %1024 = vmatprep.subr.mxu0 0.0
    %1025 = vmatpush2.msra.mxu0 0.0
    %1026 = vmatprep.subr.mxu0 0.0
    %1027 = vmatpush2.msra.mxu0 0.0
    %1028 = vmatprep.subr.mxu0 0.0
    %1029 = vmatpush2.msra.mxu0 0.0
    %1030 = vmatprep.mubr.f32.mxu0 0.0
    %1031 = vmatmul.mubr.f32.gmra.mxu0 %v955
    %v1032 = vpop.f32.mrf.mxu0
    %v1033 = vadd.f32 0.0, %v1032
    %v1034 = vpop.f32.mrf.mxu0
    %1035 = vmatprep.mubr.f32.mxu0 0.0
    %1036 = vmatmul.mubr.f32.gmra.mxu0 %v958
    %v1037 = vpop.f32.mrf.mxu0
    %v1038 = vadd.f32 0.0, %v1037
    %v1039 = vpop.f32.mrf.mxu0
    %1040 = vmatprep.mubr.f32.mxu0 0.0
    %1041 = vmatmul.mubr.f32.gmra.mxu0 %v961
    %v1042 = vpop.f32.mrf.mxu0
    %v1043 = vadd.f32 0.0, %v1042
    %v1044 = vpop.f32.mrf.mxu0
    %1045 = vmatprep.mubr.f32.mxu0 0.0
    %1046 = vmatmul.mubr.f32.gmra.mxu0 %v964
    %v1047 = vpop.f32.mrf.mxu0
    %v1048 = vadd.f32 0.0, %v1047
    %v1049 = vpop.f32.mrf.mxu0
    %1050 = vdwg.mxu0
    %v1051 = vadd.f32 %v908, %v1033
    %v1052 = vadd.f32 %v913, %v1038
    %v1053 = vadd.f32 %v918, %v1043
    %v1054 = vadd.f32 %v923, %v1048
    %1055 = vrot.lane.b32.xlu0 %v675, 125
    %v1056 = vpop.permute.xlu0 %1055
    %1057 = vrot.lane.b32.xlu0 %v679, 125
    %v1058 = vpop.permute.xlu0 %1057
    %1059 = vrot.lane.b32.xlu0 %v676, 125
    %v1060 = vpop.permute.xlu0 %1059
    %1061 = vrot.lane.b32.xlu0 %v680, 125
    %v1062 = vpop.permute.xlu0 %1061
    %1063 = vrot.lane.b32.xlu0 %v677, 125
    %v1064 = vpop.permute.xlu0 %1063
    %1065 = vrot.lane.b32.xlu0 %v681, 125
    %v1066 = vpop.permute.xlu0 %1065
    %1067 = vrot.lane.b32.xlu0 %v678, 125
    %v1068 = vpop.permute.xlu0 %1067
    %1069 = vrot.lane.b32.xlu0 %v682, 125
    %v1070 = vpop.permute.xlu0 %1069
    %v1071 = vsel %vm379, %v1056, %v1058
    %v1072 = vsel %vm379, %v1060, %v1062
    %v1073 = vsel %vm379, %v1064, %v1066
    %v1074 = vsel %vm379, %v1068, %v1070
    %v1079 = vsel %vm374, %v1071, 0.0
    %v1080 = vsel %vm374, %v1072, 0.0
    %v1081 = vsel %vm374, %v1073, 0.0
    %v1082 = vsel %vm374, %v1074, 0.0
    %v1083 = vld [vmem:[%s2 + $0x100] sm:$0xff]
    %v1084 = vld [vmem:[%s2 + $0x108] sm:$0xff]
    %v1085 = vld [vmem:[%s2 + $0x110] sm:$0xff]
    %v1086 = vld [vmem:[%s2 + $0x118] sm:$0xff]
    %v1088 = vsel %vm731, %v1083, 0
    %v1091 = vsel %vm731, %v1084, 0
    %v1094 = vsel %vm731, %v1085, 0
    %v1097 = vsel %vm731, %v1086, 0
    %1099 = vmatprep.subr.mxu0 0.0
    %1100 = vmatpush1.msra.mxu0 0.0
    %1101 = vmatprep.subr.mxu0 0.0
    %1102 = vmatpush1.msra.mxu0 0.0
    %1103 = vmatprep.subr.mxu0 0.0
    %1104 = vmatpush1.msra.mxu0 0.0
    %1105 = vmatprep.subr.mxu0 0.0
    %1106 = vmatpush1.msra.mxu0 0.0
    %1107 = vmatprep.subr.mxu0 0.0
    %1108 = vmatpush1.msra.mxu0 0.0
    %1109 = vmatprep.subr.mxu0 0.0
    %1110 = vmatpush1.msra.mxu0 0.0
    %1111 = vmatprep.subr.mxu0 0.0
    %1112 = vmatpush1.msra.mxu0 0.0
    %1113 = vmatprep.subr.mxu0 0.0
    %1114 = vmatpush1.msra.mxu0 0.0
    %1115 = vmatprep.subr.mxu0 0.0
    %1116 = vmatpush1.msra.mxu0 0.0
    %1117 = vmatprep.subr.mxu0 0.0
    %1118 = vmatpush1.msra.mxu0 0.0
    %1119 = vmatprep.subr.mxu0 0.0
    %1120 = vmatpush1.msra.mxu0 0.0
    %1121 = vmatprep.subr.mxu0 0.0
    %1122 = vmatpush1.msra.mxu0 0.0
    %1123 = vmatprep.subr.mxu0 0.0
    %1124 = vmatpush1.msra.mxu0 %v1082
    %1125 = vmatprep.subr.mxu0 0.0
    %1126 = vmatpush1.msra.mxu0 %v1081
    %1127 = vmatprep.subr.mxu0 0.0
    %1128 = vmatpush1.msra.mxu0 %v1080
    %1129 = vmatprep.subr.mxu0 0.0
    %1130 = vmatpush1.msra.mxu0 %v1079
    %1131 = vmatprep.subr.mxu0 0.0
    %1132 = vmatpush2.msra.mxu0 0.0
    %1133 = vmatprep.subr.mxu0 0.0
    %1134 = vmatpush2.msra.mxu0 0.0
    %1135 = vmatprep.subr.mxu0 0.0
    %1136 = vmatpush2.msra.mxu0 0.0
    %1137 = vmatprep.subr.mxu0 0.0
    %1138 = vmatpush2.msra.mxu0 0.0
    %1139 = vmatprep.subr.mxu0 0.0
    %1140 = vmatpush2.msra.mxu0 0.0
    %1141 = vmatprep.subr.mxu0 0.0
    %1142 = vmatpush2.msra.mxu0 0.0
    %1143 = vmatprep.subr.mxu0 0.0
    %1144 = vmatpush2.msra.mxu0 0.0
    %1145 = vmatprep.subr.mxu0 0.0
    %1146 = vmatpush2.msra.mxu0 0.0
    %1147 = vmatprep.subr.mxu0 0.0
    %1148 = vmatpush2.msra.mxu0 0.0
    %1149 = vmatprep.subr.mxu0 0.0
    %1150 = vmatpush2.msra.mxu0 0.0
    %1151 = vmatprep.subr.mxu0 0.0
    %1152 = vmatpush2.msra.mxu0 0.0
    %1153 = vmatprep.subr.mxu0 0.0
    %1154 = vmatpush2.msra.mxu0 0.0
    %1155 = vmatprep.subr.mxu0 0.0
    %1156 = vmatpush2.msra.mxu0 0.0
    %1157 = vmatprep.subr.mxu0 0.0
    %1158 = vmatpush2.msra.mxu0 0.0
    %1159 = vmatprep.subr.mxu0 0.0
    %1160 = vmatpush2.msra.mxu0 0.0
    %1161 = vmatprep.subr.mxu0 0.0
    %1162 = vmatpush2.msra.mxu0 0.0
    %1163 = vmatprep.mubr.f32.mxu0 0.0
    %1164 = vmatmul.mubr.f32.gmra.mxu0 %v1088
    %v1165 = vpop.f32.mrf.mxu0
    %v1166 = vadd.f32 0.0, %v1165
    %v1167 = vpop.f32.mrf.mxu0
    %1168 = vmatprep.mubr.f32.mxu0 0.0
    %1169 = vmatmul.mubr.f32.gmra.mxu0 %v1091
    %v1170 = vpop.f32.mrf.mxu0
    %v1171 = vadd.f32 0.0, %v1170
    %v1172 = vpop.f32.mrf.mxu0
    %1173 = vmatprep.mubr.f32.mxu0 0.0
    %1174 = vmatmul.mubr.f32.gmra.mxu0 %v1094
    %v1175 = vpop.f32.mrf.mxu0
    %v1176 = vadd.f32 0.0, %v1175
    %v1177 = vpop.f32.mrf.mxu0
    %1178 = vmatprep.mubr.f32.mxu0 0.0
    %1179 = vmatmul.mubr.f32.gmra.mxu0 %v1097
    %v1180 = vpop.f32.mrf.mxu0
    %v1181 = vadd.f32 0.0, %v1180
    %v1182 = vpop.f32.mrf.mxu0
    %1183 = vdwg.mxu0
    %v1184 = vadd.f32 %v1051, %v1166
    %v1185 = vadd.f32 %v1052, %v1171
    %v1186 = vadd.f32 %v1053, %v1176
    %v1187 = vadd.f32 %v1054, %v1181
    %1188 = vrot.lane.b32.xlu0 %v675, 124
    %v1189 = vpop.permute.xlu0 %1188
    %1190 = vrot.lane.b32.xlu0 %v679, 124
    %v1191 = vpop.permute.xlu0 %1190
    %1192 = vrot.lane.b32.xlu0 %v676, 124
    %v1193 = vpop.permute.xlu0 %1192
    %1194 = vrot.lane.b32.xlu0 %v680, 124
    %v1195 = vpop.permute.xlu0 %1194
    %1196 = vrot.lane.b32.xlu0 %v677, 124
    %v1197 = vpop.permute.xlu0 %1196
    %1198 = vrot.lane.b32.xlu0 %v681, 124
    %v1199 = vpop.permute.xlu0 %1198
    %1200 = vrot.lane.b32.xlu0 %v678, 124
    %v1201 = vpop.permute.xlu0 %1200
    %1202 = vrot.lane.b32.xlu0 %v682, 124
    %v1203 = vpop.permute.xlu0 %1202
    %v1204 = vsel %vm498, %v1189, %v1191
    %v1205 = vsel %vm498, %v1193, %v1195
    %v1206 = vsel %vm498, %v1197, %v1199
    %v1207 = vsel %vm498, %v1201, %v1203
    %v1212 = vsel %vm493, %v1204, 0.0
    %v1213 = vsel %vm493, %v1205, 0.0
    %v1214 = vsel %vm493, %v1206, 0.0
    %v1215 = vsel %vm493, %v1207, 0.0
    %v1216 = vld [vmem:[%s2 + $0x120] sm:$0xff]
    %v1217 = vld [vmem:[%s2 + $0x128] sm:$0xff]
    %v1218 = vld [vmem:[%s2 + $0x130] sm:$0xff]
    %v1219 = vld [vmem:[%s2 + $0x138] sm:$0xff]
    %v1221 = vsel %vm731, %v1216, 0
    %v1224 = vsel %vm731, %v1217, 0
    %v1227 = vsel %vm731, %v1218, 0
    %v1230 = vsel %vm731, %v1219, 0
    %1232 = vmatprep.subr.mxu0 0.0
    %1233 = vmatpush1.msra.mxu0 0.0
    %1234 = vmatprep.subr.mxu0 0.0
    %1235 = vmatpush1.msra.mxu0 0.0
    %1236 = vmatprep.subr.mxu0 0.0
    %1237 = vmatpush1.msra.mxu0 0.0
    %1238 = vmatprep.subr.mxu0 0.0
    %1239 = vmatpush1.msra.mxu0 0.0
    %1240 = vmatprep.subr.mxu0 0.0
    %1241 = vmatpush1.msra.mxu0 0.0
    %1242 = vmatprep.subr.mxu0 0.0
    %1243 = vmatpush1.msra.mxu0 0.0
    %1244 = vmatprep.subr.mxu0 0.0
    %1245 = vmatpush1.msra.mxu0 0.0
    %1246 = vmatprep.subr.mxu0 0.0
    %1247 = vmatpush1.msra.mxu0 0.0
    %1248 = vmatprep.subr.mxu0 0.0
    %1249 = vmatpush1.msra.mxu0 0.0
    %1250 = vmatprep.subr.mxu0 0.0
    %1251 = vmatpush1.msra.mxu0 0.0
    %1252 = vmatprep.subr.mxu0 0.0
    %1253 = vmatpush1.msra.mxu0 0.0
    %1254 = vmatprep.subr.mxu0 0.0
    %1255 = vmatpush1.msra.mxu0 0.0
    %1256 = vmatprep.subr.mxu0 0.0
    %1257 = vmatpush1.msra.mxu0 %v1215
    %1258 = vmatprep.subr.mxu0 0.0
    %1259 = vmatpush1.msra.mxu0 %v1214
    %1260 = vmatprep.subr.mxu0 0.0
    %1261 = vmatpush1.msra.mxu0 %v1213
    %1262 = vmatprep.subr.mxu0 0.0
    %1263 = vmatpush1.msra.mxu0 %v1212
    %1264 = vmatprep.subr.mxu0 0.0
    %1265 = vmatpush2.msra.mxu0 0.0
    %1266 = vmatprep.subr.mxu0 0.0
    %1267 = vmatpush2.msra.mxu0 0.0
    %1268 = vmatprep.subr.mxu0 0.0
    %1269 = vmatpush2.msra.mxu0 0.0
    %1270 = vmatprep.subr.mxu0 0.0
    %1271 = vmatpush2.msra.mxu0 0.0
    %1272 = vmatprep.subr.mxu0 0.0
    %1273 = vmatpush2.msra.mxu0 0.0
    %1274 = vmatprep.subr.mxu0 0.0
    %1275 = vmatpush2.msra.mxu0 0.0
    %1276 = vmatprep.subr.mxu0 0.0
    %1277 = vmatpush2.msra.mxu0 0.0
    %1278 = vmatprep.subr.mxu0 0.0
    %1279 = vmatpush2.msra.mxu0 0.0
    %1280 = vmatprep.subr.mxu0 0.0
    %1281 = vmatpush2.msra.mxu0 0.0
    %1282 = vmatprep.subr.mxu0 0.0
    %1283 = vmatpush2.msra.mxu0 0.0
    %1284 = vmatprep.subr.mxu0 0.0
    %1285 = vmatpush2.msra.mxu0 0.0
    %1286 = vmatprep.subr.mxu0 0.0
    %1287 = vmatpush2.msra.mxu0 0.0
    %1288 = vmatprep.subr.mxu0 0.0
    %1289 = vmatpush2.msra.mxu0 0.0
    %1290 = vmatprep.subr.mxu0 0.0
    %1291 = vmatpush2.msra.mxu0 0.0
    %1292 = vmatprep.subr.mxu0 0.0
    %1293 = vmatpush2.msra.mxu0 0.0
    %1294 = vmatprep.subr.mxu0 0.0
    %1295 = vmatpush2.msra.mxu0 0.0
    %1296 = vmatprep.mubr.f32.mxu0 0.0
    %1297 = vmatmul.mubr.f32.gmra.mxu0 %v1221
    %v1298 = vpop.f32.mrf.mxu0
    %v1299 = vadd.f32 0.0, %v1298
    %v1300 = vpop.f32.mrf.mxu0
    %1301 = vmatprep.mubr.f32.mxu0 0.0
    %1302 = vmatmul.mubr.f32.gmra.mxu0 %v1224
    %v1303 = vpop.f32.mrf.mxu0
    %v1304 = vadd.f32 0.0, %v1303
    %v1305 = vpop.f32.mrf.mxu0
    %1306 = vmatprep.mubr.f32.mxu0 0.0
    %1307 = vmatmul.mubr.f32.gmra.mxu0 %v1227
    %v1308 = vpop.f32.mrf.mxu0
    %v1309 = vadd.f32 0.0, %v1308
    %v1310 = vpop.f32.mrf.mxu0
    %1311 = vmatprep.mubr.f32.mxu0 0.0
    %1312 = vmatmul.mubr.f32.gmra.mxu0 %v1230
    %v1313 = vpop.f32.mrf.mxu0
    %v1314 = vadd.f32 0.0, %v1313
    %v1315 = vpop.f32.mrf.mxu0
    %1316 = vdwg.mxu0
    %v1317 = vadd.f32 %v1184, %v1299
    %v1318 = vadd.f32 %v1185, %v1304
    %v1319 = vadd.f32 %v1186, %v1309
    %v1320 = vadd.f32 %v1187, %v1314
    %1321 = vset.pattern.permute.xlu0 1
    %1322 = vperm.xlu0 %1321, %v607
    %v1323 = vpop.permute.xlu0 %1322
    %1325 = vset.pattern.permute.xlu0 1
    %1326 = vperm.xlu0 %1325, %v608
    %v1327 = vpop.permute.xlu0 %1326
    %1329 = vset.pattern.permute.xlu0 1
    %1330 = vperm.xlu0 %1329, %v609
    %v1331 = vpop.permute.xlu0 %1330
    %1333 = vset.pattern.permute.xlu0 1
    %1334 = vperm.xlu0 %1333, %v610
    %v1335 = vpop.permute.xlu0 %1334
    %v1337 = vadd.f32 %v1317, %v1323
    %v1338 = vadd.f32 %v1318, %v1327
    %v1339 = vadd.f32 %v1319, %v1331
    %v1340 = vadd.f32 %v1320, %v1335
    %vm1341 = vcmp.gt.f32.partialorder %v1337, 0.0
    %vm1342 = vcmp.gt.f32.partialorder %v1338, 0.0
    %vm1343 = vcmp.gt.f32.partialorder %v1339, 0.0
    %vm1344 = vcmp.gt.f32.partialorder %v1340, 0.0
    %v1345 = vmin.f32 %v1337, 0.0
    %v1346 = vmin.f32 %v1338, 0.0
    %v1347 = vmin.f32 %v1339, 0.0
    %v1348 = vmin.f32 %v1340, 0.0
    %v1349 = vmul.f32 %v1345, 1.442695
    %v1350 = vpow.pop %v1349
    %v1351 = vmul.f32 %v1346, 1.442695
    %v1352 = vpow.pop %v1351
    %v1353 = vmul.f32 %v1347, 1.442695
    %v1354 = vpow.pop %v1353
    %v1355 = vmul.f32 %v1348, 1.442695
    %v1356 = vpow.pop %v1355
    %v1357 = vsub.f32 %v1350, 1.0
    %v1358 = vsub.f32 %v1352, 1.0
    %v1359 = vsub.f32 %v1354, 1.0
    %v1360 = vsub.f32 %v1356, 1.0
    %v1361 = vsel %vm1341, %v1337, %v1357
    %v1362 = vsel %vm1342, %v1338, %v1358
    %v1363 = vsel %vm1343, %v1339, %v1359
    %v1364 = vsel %vm1344, %v1340, %v1360
    %1365 = vset.pattern.permute.xlu0 2
    %1366 = vperm.xlu0 %1365, %v607
    %v1367 = vpop.permute.xlu0 %1366
    %1369 = vset.pattern.permute.xlu0 2
    %1370 = vperm.xlu0 %1369, %v608
    %v1371 = vpop.permute.xlu0 %1370
    %1373 = vset.pattern.permute.xlu0 2
    %1374 = vperm.xlu0 %1373, %v609
    %v1375 = vpop.permute.xlu0 %1374
    %1377 = vset.pattern.permute.xlu0 2
    %1378 = vperm.xlu0 %1377, %v610
    %v1379 = vpop.permute.xlu0 %1378
    %v1381 = vmul.f32 %v1361, %v1367
    %v1382 = vmul.f32 %v1362, %v1371
    %v1383 = vmul.f32 %v1363, %v1375
    %v1384 = vmul.f32 %v1364, %v1379
    %1385 = vset.pattern.permute.xlu0 3
    %1386 = vperm.xlu0 %1385, %v607
    %v1387 = vpop.permute.xlu0 %1386
    %1389 = vset.pattern.permute.xlu0 3
    %1390 = vperm.xlu0 %1389, %v608
    %v1391 = vpop.permute.xlu0 %1390
    %1393 = vset.pattern.permute.xlu0 3
    %1394 = vperm.xlu0 %1393, %v609
    %v1395 = vpop.permute.xlu0 %1394
    %1397 = vset.pattern.permute.xlu0 3
    %1398 = vperm.xlu0 %1397, %v610
    %v1399 = vpop.permute.xlu0 %1398
    %v1401 = vadd.f32 %v1381, %v1387
    %v1402 = vadd.f32 %v1382, %v1391
    %v1403 = vadd.f32 %v1383, %v1395
    %v1404 = vadd.f32 %v1384, %v1399
    %1409 = vrot.lane.b32.xlu0 %v1401, 2
    %v1410 = vpop.permute.xlu0 %1409
    %1411 = vrot.lane.b32.xlu0 %v1402, 2
    %v1412 = vpop.permute.xlu0 %1411
    %1413 = vrot.lane.b32.xlu0 %v1403, 2
    %v1414 = vpop.permute.xlu0 %1413
    %1415 = vrot.lane.b32.xlu0 %v1404, 2
    %v1416 = vpop.permute.xlu0 %1415
    %v1421 = vsel %vm28, 0.0, %v1410
    %v1422 = vsel %vm28, 0.0, %v1412
    %v1423 = vsel %vm28, 0.0, %v1414
    %v1424 = vsel %vm28, 0.0, %v1416
    %v1425 = vsel %vm28, %v1410, 0.0
    %v1426 = vsel %vm28, %v1412, 0.0
    %v1427 = vsel %vm28, %v1414, 0.0
    %v1428 = vsel %vm28, %v1416, 0.0
    %v1429 = vsel %vm36, %v1421, 0.0
    %v1430 = vsel %vm36, %v1422, 0.0
    %v1431 = vsel %vm36, %v1423, 0.0
    %v1432 = vsel %vm36, %v1424, 0.0
    %v1433 = vld [vmem:[%s2 + $0x140] sm:$0xff]
    %v1434 = vld [vmem:[%s2 + $0x148] sm:$0xff]
    %v1435 = vld [vmem:[%s2 + $0x150] sm:$0xff]
    %v1436 = vld [vmem:[%s2 + $0x158] sm:$0xff]
    %1445 = vrot.lane.b32.xlu0 %v1421, 127
    %v1446 = vpop.permute.xlu0 %1445
    %1447 = vrot.lane.b32.xlu0 %v1425, 127
    %v1448 = vpop.permute.xlu0 %1447
    %1449 = vrot.lane.b32.xlu0 %v1422, 127
    %v1450 = vpop.permute.xlu0 %1449
    %1451 = vrot.lane.b32.xlu0 %v1426, 127
    %v1452 = vpop.permute.xlu0 %1451
    %1453 = vrot.lane.b32.xlu0 %v1423, 127
    %v1454 = vpop.permute.xlu0 %1453
    %1455 = vrot.lane.b32.xlu0 %v1427, 127
    %v1456 = vpop.permute.xlu0 %1455
    %1457 = vrot.lane.b32.xlu0 %v1424, 127
    %v1458 = vpop.permute.xlu0 %1457
    %1459 = vrot.lane.b32.xlu0 %v1428, 127
    %v1460 = vpop.permute.xlu0 %1459
    %v1461 = vsel %vm54, %v1446, %v1448
    %v1462 = vsel %vm54, %v1450, %v1452
    %v1463 = vsel %vm54, %v1454, %v1456
    %v1464 = vsel %vm54, %v1458, %v1460
    %v1469 = vsel %vm47, %v1461, 0.0
    %v1470 = vsel %vm47, %v1462, 0.0
    %v1471 = vsel %vm47, %v1463, 0.0
    %v1472 = vsel %vm47, %v1464, 0.0
    %v1473 = vld [vmem:[%s2 + $0x160] sm:$0xff]
    %v1474 = vld [vmem:[%s2 + $0x168] sm:$0xff]
    %v1475 = vld [vmem:[%s2 + $0x170] sm:$0xff]
    %v1476 = vld [vmem:[%s2 + $0x178] sm:$0xff]
    %v1478 = vsel %vm731, %v1473, 0
    %v1481 = vsel %vm731, %v1474, 0
    %v1484 = vsel %vm731, %v1475, 0
    %v1487 = vsel %vm731, %v1476, 0
    %1489 = vmatprep.subr.mxu0 0.0
    %1490 = vmatpush1.msra.mxu0 0.0
    %1491 = vmatprep.subr.mxu0 0.0
    %1492 = vmatpush1.msra.mxu0 0.0
    %1493 = vmatprep.subr.mxu0 0.0
    %1494 = vmatpush1.msra.mxu0 0.0
    %1495 = vmatprep.subr.mxu0 0.0
    %1496 = vmatpush1.msra.mxu0 0.0
    %1497 = vmatprep.subr.mxu0 0.0
    %1498 = vmatpush1.msra.mxu0 0.0
    %1499 = vmatprep.subr.mxu0 0.0
    %1500 = vmatpush1.msra.mxu0 0.0
    %1501 = vmatprep.subr.mxu0 0.0
    %1502 = vmatpush1.msra.mxu0 0.0
    %1503 = vmatprep.subr.mxu0 0.0
    %1504 = vmatpush1.msra.mxu0 0.0
    %1505 = vmatprep.subr.mxu0 0.0
    %1506 = vmatpush1.msra.mxu0 0.0
    %1507 = vmatprep.subr.mxu0 0.0
    %1508 = vmatpush1.msra.mxu0 0.0
    %1509 = vmatprep.subr.mxu0 0.0
    %1510 = vmatpush1.msra.mxu0 0.0
    %1511 = vmatprep.subr.mxu0 0.0
    %1512 = vmatpush1.msra.mxu0 0.0
    %1513 = vmatprep.subr.mxu0 0.0
    %1514 = vmatpush1.msra.mxu0 %v1472
    %1515 = vmatprep.subr.mxu0 0.0
    %1516 = vmatpush1.msra.mxu0 %v1471
    %1517 = vmatprep.subr.mxu0 0.0
    %1518 = vmatpush1.msra.mxu0 %v1470
    %1519 = vmatprep.subr.mxu0 0.0
    %1520 = vmatpush1.msra.mxu0 %v1469
    %1521 = vmatprep.subr.mxu0 0.0
    %1522 = vmatpush2.msra.mxu0 0.0
    %1523 = vmatprep.subr.mxu0 0.0
    %1524 = vmatpush2.msra.mxu0 0.0
    %1525 = vmatprep.subr.mxu0 0.0
    %1526 = vmatpush2.msra.mxu0 0.0
    %1527 = vmatprep.subr.mxu0 0.0
    %1528 = vmatpush2.msra.mxu0 0.0
    %1529 = vmatprep.subr.mxu0 0.0
    %1530 = vmatpush2.msra.mxu0 0.0
    %1531 = vmatprep.subr.mxu0 0.0
    %1532 = vmatpush2.msra.mxu0 0.0
    %1533 = vmatprep.subr.mxu0 0.0
    %1534 = vmatpush2.msra.mxu0 0.0
    %1535 = vmatprep.subr.mxu0 0.0
    %1536 = vmatpush2.msra.mxu0 0.0
    %1537 = vmatprep.subr.mxu0 0.0
    %1538 = vmatpush2.msra.mxu0 0.0
    %1539 = vmatprep.subr.mxu0 0.0
    %1540 = vmatpush2.msra.mxu0 0.0
    %1541 = vmatprep.subr.mxu0 0.0
    %1542 = vmatpush2.msra.mxu0 0.0
    %1543 = vmatprep.subr.mxu0 0.0
    %1544 = vmatpush2.msra.mxu0 0.0
    %1545 = vmatprep.subr.mxu0 0.0
    %1546 = vmatpush2.msra.mxu0 0.0
    %1547 = vmatprep.subr.mxu0 0.0
    %1548 = vmatpush2.msra.mxu0 0.0
    %1549 = vmatprep.subr.mxu0 0.0
    %1550 = vmatpush2.msra.mxu0 0.0
    %1551 = vmatprep.subr.mxu0 0.0
    %1552 = vmatpush2.msra.mxu0 0.0
    %1553 = vmatprep.mubr.f32.mxu0 0.0
    %1554 = vmatmul.mubr.f32.gmra.mxu0 %v1478
    %v1555 = vpop.f32.mrf.mxu0
    %v1556 = vadd.f32 0.0, %v1555
    %v1557 = vpop.f32.mrf.mxu0
    %1558 = vmatprep.mubr.f32.mxu0 0.0
    %1559 = vmatmul.mubr.f32.gmra.mxu0 %v1481
    %v1560 = vpop.f32.mrf.mxu0
    %v1561 = vadd.f32 0.0, %v1560
    %v1562 = vpop.f32.mrf.mxu0
    %1563 = vmatprep.mubr.f32.mxu0 0.0
    %1564 = vmatmul.mubr.f32.gmra.mxu0 %v1484
    %v1565 = vpop.f32.mrf.mxu0
    %v1566 = vadd.f32 0.0, %v1565
    %v1567 = vpop.f32.mrf.mxu0
    %1568 = vmatprep.mubr.f32.mxu0 0.0
    %1569 = vmatmul.mubr.f32.gmra.mxu0 %v1487
    %v1570 = vpop.f32.mrf.mxu0
    %v1571 = vadd.f32 0.0, %v1570
    %v1572 = vpop.f32.mrf.mxu0
    %1573 = vdwg.mxu0
    %v1575 = vsel %vm731, %v1433, 0
    %v1578 = vsel %vm731, %v1434, 0
    %v1581 = vsel %vm731, %v1435, 0
    %v1584 = vsel %vm731, %v1436, 0
    %1586 = vmatprep.subr.mxu0 0.0
    %1587 = vmatpush1.msra.mxu0 0.0
    %1588 = vmatprep.subr.mxu0 0.0
    %1589 = vmatpush1.msra.mxu0 0.0
    %1590 = vmatprep.subr.mxu0 0.0
    %1591 = vmatpush1.msra.mxu0 0.0
    %1592 = vmatprep.subr.mxu0 0.0
    %1593 = vmatpush1.msra.mxu0 0.0
    %1594 = vmatprep.subr.mxu0 0.0
    %1595 = vmatpush1.msra.mxu0 0.0
    %1596 = vmatprep.subr.mxu0 0.0
    %1597 = vmatpush1.msra.mxu0 0.0
    %1598 = vmatprep.subr.mxu0 0.0
    %1599 = vmatpush1.msra.mxu0 0.0
    %1600 = vmatprep.subr.mxu0 0.0
    %1601 = vmatpush1.msra.mxu0 0.0
    %1602 = vmatprep.subr.mxu0 0.0
    %1603 = vmatpush1.msra.mxu0 0.0
    %1604 = vmatprep.subr.mxu0 0.0
    %1605 = vmatpush1.msra.mxu0 0.0
    %1606 = vmatprep.subr.mxu0 0.0
    %1607 = vmatpush1.msra.mxu0 0.0
    %1608 = vmatprep.subr.mxu0 0.0
    %1609 = vmatpush1.msra.mxu0 0.0
    %1610 = vmatprep.subr.mxu0 0.0
    %1611 = vmatpush1.msra.mxu0 %v1432
    %1612 = vmatprep.subr.mxu0 0.0
    %1613 = vmatpush1.msra.mxu0 %v1431
    %1614 = vmatprep.subr.mxu0 0.0
    %1615 = vmatpush1.msra.mxu0 %v1430
    %1616 = vmatprep.subr.mxu0 0.0
    %1617 = vmatpush1.msra.mxu0 %v1429
    %1618 = vmatprep.subr.mxu0 0.0
    %1619 = vmatpush2.msra.mxu0 0.0
    %1620 = vmatprep.subr.mxu0 0.0
    %1621 = vmatpush2.msra.mxu0 0.0
    %1622 = vmatprep.subr.mxu0 0.0
    %1623 = vmatpush2.msra.mxu0 0.0
    %1624 = vmatprep.subr.mxu0 0.0
    %1625 = vmatpush2.msra.mxu0 0.0
    %1626 = vmatprep.subr.mxu0 0.0
    %1627 = vmatpush2.msra.mxu0 0.0
    %1628 = vmatprep.subr.mxu0 0.0
    %1629 = vmatpush2.msra.mxu0 0.0
    %1630 = vmatprep.subr.mxu0 0.0
    %1631 = vmatpush2.msra.mxu0 0.0
    %1632 = vmatprep.subr.mxu0 0.0
    %1633 = vmatpush2.msra.mxu0 0.0
    %1634 = vmatprep.subr.mxu0 0.0
    %1635 = vmatpush2.msra.mxu0 0.0
    %1636 = vmatprep.subr.mxu0 0.0
    %1637 = vmatpush2.msra.mxu0 0.0
    %1638 = vmatprep.subr.mxu0 0.0
    %1639 = vmatpush2.msra.mxu0 0.0
    %1640 = vmatprep.subr.mxu0 0.0
    %1641 = vmatpush2.msra.mxu0 0.0
    %1642 = vmatprep.subr.mxu0 0.0
    %1643 = vmatpush2.msra.mxu0 0.0
    %1644 = vmatprep.subr.mxu0 0.0
    %1645 = vmatpush2.msra.mxu0 0.0
    %1646 = vmatprep.subr.mxu0 0.0
    %1647 = vmatpush2.msra.mxu0 0.0
    %1648 = vmatprep.subr.mxu0 0.0
    %1649 = vmatpush2.msra.mxu0 0.0
    %1650 = vmatprep.mubr.f32.mxu0 0.0
    %1651 = vmatmul.mubr.f32.gmra.mxu0 %v1575
    %v1652 = vpop.f32.mrf.mxu0
    %v1653 = vadd.f32 %v1556, %v1652
    %v1654 = vpop.f32.mrf.mxu0
    %1655 = vmatprep.mubr.f32.mxu0 0.0
    %1656 = vmatmul.mubr.f32.gmra.mxu0 %v1578
    %v1657 = vpop.f32.mrf.mxu0
    %v1658 = vadd.f32 %v1561, %v1657
    %v1659 = vpop.f32.mrf.mxu0
    %1660 = vmatprep.mubr.f32.mxu0 0.0
    %1661 = vmatmul.mubr.f32.gmra.mxu0 %v1581
    %v1662 = vpop.f32.mrf.mxu0
    %v1663 = vadd.f32 %v1566, %v1662
    %v1664 = vpop.f32.mrf.mxu0
    %1665 = vmatprep.mubr.f32.mxu0 0.0
    %1666 = vmatmul.mubr.f32.gmra.mxu0 %v1584
    %v1667 = vpop.f32.mrf.mxu0
    %v1668 = vadd.f32 %v1571, %v1667
    %v1669 = vpop.f32.mrf.mxu0
    %1670 = vdwg.mxu0
    %v1671 = vld [vmem:[%s2 + $0x180] sm:$0xff]
    %v1672 = vld [vmem:[%s2 + $0x188] sm:$0xff]
    %v1673 = vld [vmem:[%s2 + $0x190] sm:$0xff]
    %v1674 = vld [vmem:[%s2 + $0x198] sm:$0xff]
    %1675 = vrot.lane.b32.xlu0 %v1421, 126
    %v1676 = vpop.permute.xlu0 %1675
    %1677 = vrot.lane.b32.xlu0 %v1425, 126
    %v1678 = vpop.permute.xlu0 %1677
    %1679 = vrot.lane.b32.xlu0 %v1422, 126
    %v1680 = vpop.permute.xlu0 %1679
    %1681 = vrot.lane.b32.xlu0 %v1426, 126
    %v1682 = vpop.permute.xlu0 %1681
    %1683 = vrot.lane.b32.xlu0 %v1423, 126
    %v1684 = vpop.permute.xlu0 %1683
    %1685 = vrot.lane.b32.xlu0 %v1427, 126
    %v1686 = vpop.permute.xlu0 %1685
    %1687 = vrot.lane.b32.xlu0 %v1424, 126
    %v1688 = vpop.permute.xlu0 %1687
    %1689 = vrot.lane.b32.xlu0 %v1428, 126
    %v1690 = vpop.permute.xlu0 %1689
    %v1691 = vsel %vm265, %v1676, %v1678
    %v1692 = vsel %vm265, %v1680, %v1682
    %v1693 = vsel %vm265, %v1684, %v1686
    %v1694 = vsel %vm265, %v1688, %v1690
    %v1700 = vsel %vm731, %v1671, 0
    %v1703 = vsel %vm731, %v1672, 0
    %v1706 = vsel %vm731, %v1673, 0
    %v1709 = vsel %vm731, %v1674, 0
    %1711 = vmatprep.subr.mxu0 0.0
    %1712 = vmatpush1.msra.mxu0 0.0
    %1713 = vmatprep.subr.mxu0 0.0
    %1714 = vmatpush1.msra.mxu0 0.0
    %1715 = vmatprep.subr.mxu0 0.0
    %1716 = vmatpush1.msra.mxu0 0.0
    %1717 = vmatprep.subr.mxu0 0.0
    %1718 = vmatpush1.msra.mxu0 0.0
    %1719 = vmatprep.subr.mxu0 0.0
    %1720 = vmatpush1.msra.mxu0 0.0
    %1721 = vmatprep.subr.mxu0 0.0
    %1722 = vmatpush1.msra.mxu0 0.0
    %1723 = vmatprep.subr.mxu0 0.0
    %1724 = vmatpush1.msra.mxu0 0.0
    %1725 = vmatprep.subr.mxu0 0.0
    %1726 = vmatpush1.msra.mxu0 0.0
    %1727 = vmatprep.subr.mxu0 0.0
    %1728 = vmatpush1.msra.mxu0 0.0
    %1729 = vmatprep.subr.mxu0 0.0
    %1730 = vmatpush1.msra.mxu0 0.0
    %1731 = vmatprep.subr.mxu0 0.0
    %1732 = vmatpush1.msra.mxu0 0.0
    %1733 = vmatprep.subr.mxu0 0.0
    %1734 = vmatpush1.msra.mxu0 0.0
    %1735 = vmatprep.subr.mxu0 0.0
    %1736 = vmatpush1.msra.mxu0 %v1694
    %1737 = vmatprep.subr.mxu0 0.0
    %1738 = vmatpush1.msra.mxu0 %v1693
    %1739 = vmatprep.subr.mxu0 0.0
    %1740 = vmatpush1.msra.mxu0 %v1692
    %1741 = vmatprep.subr.mxu0 0.0
    %1742 = vmatpush1.msra.mxu0 %v1691
    %1743 = vmatprep.subr.mxu0 0.0
    %1744 = vmatpush2.msra.mxu0 0.0
    %1745 = vmatprep.subr.mxu0 0.0
    %1746 = vmatpush2.msra.mxu0 0.0
    %1747 = vmatprep.subr.mxu0 0.0
    %1748 = vmatpush2.msra.mxu0 0.0
    %1749 = vmatprep.subr.mxu0 0.0
    %1750 = vmatpush2.msra.mxu0 0.0
    %1751 = vmatprep.subr.mxu0 0.0
    %1752 = vmatpush2.msra.mxu0 0.0
    %1753 = vmatprep.subr.mxu0 0.0
    %1754 = vmatpush2.msra.mxu0 0.0
    %1755 = vmatprep.subr.mxu0 0.0
    %1756 = vmatpush2.msra.mxu0 0.0
    %1757 = vmatprep.subr.mxu0 0.0
    %1758 = vmatpush2.msra.mxu0 0.0
    %1759 = vmatprep.subr.mxu0 0.0
    %1760 = vmatpush2.msra.mxu0 0.0
    %1761 = vmatprep.subr.mxu0 0.0
    %1762 = vmatpush2.msra.mxu0 0.0
    %1763 = vmatprep.subr.mxu0 0.0
    %1764 = vmatpush2.msra.mxu0 0.0
    %1765 = vmatprep.subr.mxu0 0.0
    %1766 = vmatpush2.msra.mxu0 0.0
    %1767 = vmatprep.subr.mxu0 0.0
    %1768 = vmatpush2.msra.mxu0 0.0
    %1769 = vmatprep.subr.mxu0 0.0
    %1770 = vmatpush2.msra.mxu0 0.0
    %1771 = vmatprep.subr.mxu0 0.0
    %1772 = vmatpush2.msra.mxu0 0.0
    %1773 = vmatprep.subr.mxu0 0.0
    %1774 = vmatpush2.msra.mxu0 0.0
    %1775 = vmatprep.mubr.f32.mxu0 0.0
    %1776 = vmatmul.mubr.f32.gmra.mxu0 %v1700
    %v1777 = vpop.f32.mrf.mxu0
    %v1778 = vadd.f32 0.0, %v1777
    %v1779 = vpop.f32.mrf.mxu0
    %1780 = vmatprep.mubr.f32.mxu0 0.0
    %1781 = vmatmul.mubr.f32.gmra.mxu0 %v1703
    %v1782 = vpop.f32.mrf.mxu0
    %v1783 = vadd.f32 0.0, %v1782
    %v1784 = vpop.f32.mrf.mxu0
    %1785 = vmatprep.mubr.f32.mxu0 0.0
    %1786 = vmatmul.mubr.f32.gmra.mxu0 %v1706
    %v1787 = vpop.f32.mrf.mxu0
    %v1788 = vadd.f32 0.0, %v1787
    %v1789 = vpop.f32.mrf.mxu0
    %1790 = vmatprep.mubr.f32.mxu0 0.0
    %1791 = vmatmul.mubr.f32.gmra.mxu0 %v1709
    %v1792 = vpop.f32.mrf.mxu0
    %v1793 = vadd.f32 0.0, %v1792
    %v1794 = vpop.f32.mrf.mxu0
    %1795 = vdwg.mxu0
    %v1796 = vadd.f32 %v1653, %v1778
    %v1797 = vadd.f32 %v1658, %v1783
    %v1798 = vadd.f32 %v1663, %v1788
    %v1799 = vadd.f32 %v1668, %v1793
    %1800 = vrot.lane.b32.xlu0 %v1421, 125
    %v1801 = vpop.permute.xlu0 %1800
    %1802 = vrot.lane.b32.xlu0 %v1425, 125
    %v1803 = vpop.permute.xlu0 %1802
    %1804 = vrot.lane.b32.xlu0 %v1422, 125
    %v1805 = vpop.permute.xlu0 %1804
    %1806 = vrot.lane.b32.xlu0 %v1426, 125
    %v1807 = vpop.permute.xlu0 %1806
    %1808 = vrot.lane.b32.xlu0 %v1423, 125
    %v1809 = vpop.permute.xlu0 %1808
    %1810 = vrot.lane.b32.xlu0 %v1427, 125
    %v1811 = vpop.permute.xlu0 %1810
    %1812 = vrot.lane.b32.xlu0 %v1424, 125
    %v1813 = vpop.permute.xlu0 %1812
    %1814 = vrot.lane.b32.xlu0 %v1428, 125
    %v1815 = vpop.permute.xlu0 %1814
    %v1816 = vsel %vm379, %v1801, %v1803
    %v1817 = vsel %vm379, %v1805, %v1807
    %v1818 = vsel %vm379, %v1809, %v1811
    %v1819 = vsel %vm379, %v1813, %v1815
    %v1824 = vsel %vm374, %v1816, 0.0
    %v1825 = vsel %vm374, %v1817, 0.0
    %v1826 = vsel %vm374, %v1818, 0.0
    %v1827 = vsel %vm374, %v1819, 0.0
    %v1828 = vld [vmem:[%s2 + $0x1a0] sm:$0xff]
    %v1829 = vld [vmem:[%s2 + $0x1a8] sm:$0xff]
    %v1830 = vld [vmem:[%s2 + $0x1b0] sm:$0xff]
    %v1831 = vld [vmem:[%s2 + $0x1b8] sm:$0xff]
    %v1833 = vsel %vm731, %v1828, 0
    %v1836 = vsel %vm731, %v1829, 0
    %v1839 = vsel %vm731, %v1830, 0
    %v1842 = vsel %vm731, %v1831, 0
    %1844 = vmatprep.subr.mxu0 0.0
    %1845 = vmatpush1.msra.mxu0 0.0
    %1846 = vmatprep.subr.mxu0 0.0
    %1847 = vmatpush1.msra.mxu0 0.0
    %1848 = vmatprep.subr.mxu0 0.0
    %1849 = vmatpush1.msra.mxu0 0.0
    %1850 = vmatprep.subr.mxu0 0.0
    %1851 = vmatpush1.msra.mxu0 0.0
    %1852 = vmatprep.subr.mxu0 0.0
    %1853 = vmatpush1.msra.mxu0 0.0
    %1854 = vmatprep.subr.mxu0 0.0
    %1855 = vmatpush1.msra.mxu0 0.0
    %1856 = vmatprep.subr.mxu0 0.0
    %1857 = vmatpush1.msra.mxu0 0.0
    %1858 = vmatprep.subr.mxu0 0.0
    %1859 = vmatpush1.msra.mxu0 0.0
    %1860 = vmatprep.subr.mxu0 0.0
    %1861 = vmatpush1.msra.mxu0 0.0
    %1862 = vmatprep.subr.mxu0 0.0
    %1863 = vmatpush1.msra.mxu0 0.0
    %1864 = vmatprep.subr.mxu0 0.0
    %1865 = vmatpush1.msra.mxu0 0.0
    %1866 = vmatprep.subr.mxu0 0.0
    %1867 = vmatpush1.msra.mxu0 0.0
    %1868 = vmatprep.subr.mxu0 0.0
    %1869 = vmatpush1.msra.mxu0 %v1827
    %1870 = vmatprep.subr.mxu0 0.0
    %1871 = vmatpush1.msra.mxu0 %v1826
    %1872 = vmatprep.subr.mxu0 0.0
    %1873 = vmatpush1.msra.mxu0 %v1825
    %1874 = vmatprep.subr.mxu0 0.0
    %1875 = vmatpush1.msra.mxu0 %v1824
    %1876 = vmatprep.subr.mxu0 0.0
    %1877 = vmatpush2.msra.mxu0 0.0
    %1878 = vmatprep.subr.mxu0 0.0
    %1879 = vmatpush2.msra.mxu0 0.0
    %1880 = vmatprep.subr.mxu0 0.0
    %1881 = vmatpush2.msra.mxu0 0.0
    %1882 = vmatprep.subr.mxu0 0.0
    %1883 = vmatpush2.msra.mxu0 0.0
    %1884 = vmatprep.subr.mxu0 0.0
    %1885 = vmatpush2.msra.mxu0 0.0
    %1886 = vmatprep.subr.mxu0 0.0
    %1887 = vmatpush2.msra.mxu0 0.0
    %1888 = vmatprep.subr.mxu0 0.0
    %1889 = vmatpush2.msra.mxu0 0.0
    %1890 = vmatprep.subr.mxu0 0.0
    %1891 = vmatpush2.msra.mxu0 0.0
    %1892 = vmatprep.subr.mxu0 0.0
    %1893 = vmatpush2.msra.mxu0 0.0
    %1894 = vmatprep.subr.mxu0 0.0
    %1895 = vmatpush2.msra.mxu0 0.0
    %1896 = vmatprep.subr.mxu0 0.0
    %1897 = vmatpush2.msra.mxu0 0.0
    %1898 = vmatprep.subr.mxu0 0.0
    %1899 = vmatpush2.msra.mxu0 0.0
    %1900 = vmatprep.subr.mxu0 0.0
    %1901 = vmatpush2.msra.mxu0 0.0
    %1902 = vmatprep.subr.mxu0 0.0
    %1903 = vmatpush2.msra.mxu0 0.0
    %1904 = vmatprep.subr.mxu0 0.0
    %1905 = vmatpush2.msra.mxu0 0.0
    %1906 = vmatprep.subr.mxu0 0.0
    %1907 = vmatpush2.msra.mxu0 0.0
    %1908 = vmatprep.mubr.f32.mxu0 0.0
    %1909 = vmatmul.mubr.f32.gmra.mxu0 %v1833
    %v1910 = vpop.f32.mrf.mxu0
    %v1911 = vadd.f32 0.0, %v1910
    %v1912 = vpop.f32.mrf.mxu0
    %1913 = vmatprep.mubr.f32.mxu0 0.0
    %1914 = vmatmul.mubr.f32.gmra.mxu0 %v1836
    %v1915 = vpop.f32.mrf.mxu0
    %v1916 = vadd.f32 0.0, %v1915
    %v1917 = vpop.f32.mrf.mxu0
    %1918 = vmatprep.mubr.f32.mxu0 0.0
    %1919 = vmatmul.mubr.f32.gmra.mxu0 %v1839
    %v1920 = vpop.f32.mrf.mxu0
    %v1921 = vadd.f32 0.0, %v1920
    %v1922 = vpop.f32.mrf.mxu0
    %1923 = vmatprep.mubr.f32.mxu0 0.0
    %1924 = vmatmul.mubr.f32.gmra.mxu0 %v1842
    %v1925 = vpop.f32.mrf.mxu0
    %v1926 = vadd.f32 0.0, %v1925
    %v1927 = vpop.f32.mrf.mxu0
    %1928 = vdwg.mxu0
    %v1929 = vadd.f32 %v1796, %v1911
    %v1930 = vadd.f32 %v1797, %v1916
    %v1931 = vadd.f32 %v1798, %v1921
    %v1932 = vadd.f32 %v1799, %v1926
    %1933 = vrot.lane.b32.xlu0 %v1421, 124
    %v1934 = vpop.permute.xlu0 %1933
    %1935 = vrot.lane.b32.xlu0 %v1425, 124
    %v1936 = vpop.permute.xlu0 %1935
    %1937 = vrot.lane.b32.xlu0 %v1422, 124
    %v1938 = vpop.permute.xlu0 %1937
    %1939 = vrot.lane.b32.xlu0 %v1426, 124
    %v1940 = vpop.permute.xlu0 %1939
    %1941 = vrot.lane.b32.xlu0 %v1423, 124
    %v1942 = vpop.permute.xlu0 %1941
    %1943 = vrot.lane.b32.xlu0 %v1427, 124
    %v1944 = vpop.permute.xlu0 %1943
    %1945 = vrot.lane.b32.xlu0 %v1424, 124
    %v1946 = vpop.permute.xlu0 %1945
    %1947 = vrot.lane.b32.xlu0 %v1428, 124
    %v1948 = vpop.permute.xlu0 %1947
    %v1949 = vsel %vm498, %v1934, %v1936
    %v1950 = vsel %vm498, %v1938, %v1940
    %v1951 = vsel %vm498, %v1942, %v1944
    %v1952 = vsel %vm498, %v1946, %v1948
    %v1957 = vsel %vm493, %v1949, 0.0
    %v1958 = vsel %vm493, %v1950, 0.0
    %v1959 = vsel %vm493, %v1951, 0.0
    %v1960 = vsel %vm493, %v1952, 0.0
    %v1961 = vld [vmem:[%s2 + $0x1c0] sm:$0xff]
    %v1962 = vld [vmem:[%s2 + $0x1c8] sm:$0xff]
    %v1963 = vld [vmem:[%s2 + $0x1d0] sm:$0xff]
    %v1964 = vld [vmem:[%s2 + $0x1d8] sm:$0xff]
    %v1966 = vsel %vm731, %v1961, 0
    %v1969 = vsel %vm731, %v1962, 0
    %v1972 = vsel %vm731, %v1963, 0
    %v1975 = vsel %vm731, %v1964, 0
    %1977 = vmatprep.subr.mxu0 0.0
    %1978 = vmatpush1.msra.mxu0 0.0
    %1979 = vmatprep.subr.mxu0 0.0
    %1980 = vmatpush1.msra.mxu0 0.0
    %1981 = vmatprep.subr.mxu0 0.0
    %1982 = vmatpush1.msra.mxu0 0.0
    %1983 = vmatprep.subr.mxu0 0.0
    %1984 = vmatpush1.msra.mxu0 0.0
    %1985 = vmatprep.subr.mxu0 0.0
    %1986 = vmatpush1.msra.mxu0 0.0
    %1987 = vmatprep.subr.mxu0 0.0
    %1988 = vmatpush1.msra.mxu0 0.0
    %1989 = vmatprep.subr.mxu0 0.0
    %1990 = vmatpush1.msra.mxu0 0.0
    %1991 = vmatprep.subr.mxu0 0.0
    %1992 = vmatpush1.msra.mxu0 0.0
    %1993 = vmatprep.subr.mxu0 0.0
    %1994 = vmatpush1.msra.mxu0 0.0
    %1995 = vmatprep.subr.mxu0 0.0
    %1996 = vmatpush1.msra.mxu0 0.0
    %1997 = vmatprep.subr.mxu0 0.0
    %1998 = vmatpush1.msra.mxu0 0.0
    %1999 = vmatprep.subr.mxu0 0.0
    %2000 = vmatpush1.msra.mxu0 0.0
    %2001 = vmatprep.subr.mxu0 0.0
    %2002 = vmatpush1.msra.mxu0 %v1960
    %2003 = vmatprep.subr.mxu0 0.0
    %2004 = vmatpush1.msra.mxu0 %v1959
    %2005 = vmatprep.subr.mxu0 0.0
    %2006 = vmatpush1.msra.mxu0 %v1958
    %2007 = vmatprep.subr.mxu0 0.0
    %2008 = vmatpush1.msra.mxu0 %v1957
    %2009 = vmatprep.subr.mxu0 0.0
    %2010 = vmatpush2.msra.mxu0 0.0
    %2011 = vmatprep.subr.mxu0 0.0
    %2012 = vmatpush2.msra.mxu0 0.0
    %2013 = vmatprep.subr.mxu0 0.0
    %2014 = vmatpush2.msra.mxu0 0.0
    %2015 = vmatprep.subr.mxu0 0.0
    %2016 = vmatpush2.msra.mxu0 0.0
    %2017 = vmatprep.subr.mxu0 0.0
    %2018 = vmatpush2.msra.mxu0 0.0
    %2019 = vmatprep.subr.mxu0 0.0
    %2020 = vmatpush2.msra.mxu0 0.0
    %2021 = vmatprep.subr.mxu0 0.0
    %2022 = vmatpush2.msra.mxu0 0.0
    %2023 = vmatprep.subr.mxu0 0.0
    %2024 = vmatpush2.msra.mxu0 0.0
    %2025 = vmatprep.subr.mxu0 0.0
    %2026 = vmatpush2.msra.mxu0 0.0
    %2027 = vmatprep.subr.mxu0 0.0
    %2028 = vmatpush2.msra.mxu0 0.0
    %2029 = vmatprep.subr.mxu0 0.0
    %2030 = vmatpush2.msra.mxu0 0.0
    %2031 = vmatprep.subr.mxu0 0.0
    %2032 = vmatpush2.msra.mxu0 0.0
    %2033 = vmatprep.subr.mxu0 0.0
    %2034 = vmatpush2.msra.mxu0 0.0
    %2035 = vmatprep.subr.mxu0 0.0
    %2036 = vmatpush2.msra.mxu0 0.0
    %2037 = vmatprep.subr.mxu0 0.0
    %2038 = vmatpush2.msra.mxu0 0.0
    %2039 = vmatprep.subr.mxu0 0.0
    %2040 = vmatpush2.msra.mxu0 0.0
    %2041 = vmatprep.mubr.f32.mxu0 0.0
    %2042 = vmatmul.mubr.f32.gmra.mxu0 %v1966
    %v2043 = vpop.f32.mrf.mxu0
    %v2044 = vadd.f32 0.0, %v2043
    %v2045 = vpop.f32.mrf.mxu0
    %2046 = vmatprep.mubr.f32.mxu0 0.0
    %2047 = vmatmul.mubr.f32.gmra.mxu0 %v1969
    %v2048 = vpop.f32.mrf.mxu0
    %v2049 = vadd.f32 0.0, %v2048
    %v2050 = vpop.f32.mrf.mxu0
    %2051 = vmatprep.mubr.f32.mxu0 0.0
    %2052 = vmatmul.mubr.f32.gmra.mxu0 %v1972
    %v2053 = vpop.f32.mrf.mxu0
    %v2054 = vadd.f32 0.0, %v2053
    %v2055 = vpop.f32.mrf.mxu0
    %2056 = vmatprep.mubr.f32.mxu0 0.0
    %2057 = vmatmul.mubr.f32.gmra.mxu0 %v1975
    %v2058 = vpop.f32.mrf.mxu0
    %v2059 = vadd.f32 0.0, %v2058
    %v2060 = vpop.f32.mrf.mxu0
    %2061 = vdwg.mxu0
    %v2062 = vadd.f32 %v1929, %v2044
    %v2063 = vadd.f32 %v1930, %v2049
    %v2064 = vadd.f32 %v1931, %v2054
    %v2065 = vadd.f32 %v1932, %v2059
    %2066 = vset.pattern.permute.xlu0 4
    %2067 = vperm.xlu0 %2066, %v607
    %v2068 = vpop.permute.xlu0 %2067
    %2070 = vset.pattern.permute.xlu0 4
    %2071 = vperm.xlu0 %2070, %v608
    %v2072 = vpop.permute.xlu0 %2071
    %2074 = vset.pattern.permute.xlu0 4
    %2075 = vperm.xlu0 %2074, %v609
    %v2076 = vpop.permute.xlu0 %2075
    %2078 = vset.pattern.permute.xlu0 4
    %2079 = vperm.xlu0 %2078, %v610
    %v2080 = vpop.permute.xlu0 %2079
    %v2082 = vadd.f32 %v2062, %v2068
    %v2083 = vadd.f32 %v2063, %v2072
    %v2084 = vadd.f32 %v2064, %v2076
    %v2085 = vadd.f32 %v2065, %v2080
    %vm2086 = vcmp.gt.f32.partialorder %v2082, 0.0
    %vm2087 = vcmp.gt.f32.partialorder %v2083, 0.0
    %vm2088 = vcmp.gt.f32.partialorder %v2084, 0.0
    %vm2089 = vcmp.gt.f32.partialorder %v2085, 0.0
    %v2090 = vmin.f32 %v2082, 0.0
    %v2091 = vmin.f32 %v2083, 0.0
    %v2092 = vmin.f32 %v2084, 0.0
    %v2093 = vmin.f32 %v2085, 0.0
    %v2094 = vmul.f32 %v2090, 1.442695
    %v2095 = vpow.pop %v2094
    %v2096 = vmul.f32 %v2091, 1.442695
    %v2097 = vpow.pop %v2096
    %v2098 = vmul.f32 %v2092, 1.442695
    %v2099 = vpow.pop %v2098
    %v2100 = vmul.f32 %v2093, 1.442695
    %v2101 = vpow.pop %v2100
    %v2102 = vsub.f32 %v2095, 1.0
    %v2103 = vsub.f32 %v2097, 1.0
    %v2104 = vsub.f32 %v2099, 1.0
    %v2105 = vsub.f32 %v2101, 1.0
    %v2106 = vsel %vm2086, %v2082, %v2102
    %v2107 = vsel %vm2087, %v2083, %v2103
    %v2108 = vsel %vm2088, %v2084, %v2104
    %v2109 = vsel %vm2089, %v2085, %v2105
    %2110 = vset.pattern.permute.xlu0 5
    %2111 = vperm.xlu0 %2110, %v607
    %v2112 = vpop.permute.xlu0 %2111
    %2114 = vset.pattern.permute.xlu0 5
    %2115 = vperm.xlu0 %2114, %v608
    %v2116 = vpop.permute.xlu0 %2115
    %2118 = vset.pattern.permute.xlu0 5
    %2119 = vperm.xlu0 %2118, %v609
    %v2120 = vpop.permute.xlu0 %2119
    %2122 = vset.pattern.permute.xlu0 5
    %2123 = vperm.xlu0 %2122, %v610
    %v2124 = vpop.permute.xlu0 %2123
    %v2126 = vmul.f32 %v2106, %v2112
    %v2127 = vmul.f32 %v2107, %v2116
    %v2128 = vmul.f32 %v2108, %v2120
    %v2129 = vmul.f32 %v2109, %v2124
    %2130 = vset.pattern.permute.xlu0 6
    %2131 = vperm.xlu0 %2130, %v607
    %v2132 = vpop.permute.xlu0 %2131
    %2134 = vset.pattern.permute.xlu0 6
    %2135 = vperm.xlu0 %2134, %v608
    %v2136 = vpop.permute.xlu0 %2135
    %2138 = vset.pattern.permute.xlu0 6
    %2139 = vperm.xlu0 %2138, %v609
    %v2140 = vpop.permute.xlu0 %2139
    %2142 = vset.pattern.permute.xlu0 6
    %2143 = vperm.xlu0 %2142, %v610
    %v2144 = vpop.permute.xlu0 %2143
    %v2146 = vadd.f32 %v2126, %v2132
    %v2147 = vadd.f32 %v2127, %v2136
    %v2148 = vadd.f32 %v2128, %v2140
    %v2149 = vadd.f32 %v2129, %v2144
    %2154 = vrot.lane.b32.xlu0 %v2146, 1
    %v2155 = vpop.permute.xlu0 %2154
    %2156 = vrot.lane.b32.xlu0 %v2147, 1
    %v2157 = vpop.permute.xlu0 %2156
    %2158 = vrot.lane.b32.xlu0 %v2148, 1
    %v2159 = vpop.permute.xlu0 %2158
    %2160 = vrot.lane.b32.xlu0 %v2149, 1
    %v2161 = vpop.permute.xlu0 %2160
    %vm2166 = vcmask 7168
    %v2167 = vsel %vm2166, 0.0, %v2155
    %v2168 = vsel %vm2166, 0.0, %v2157
    %v2169 = vsel %vm2166, 0.0, %v2159
    %v2170 = vsel %vm2166, 0.0, %v2161
    %v2171 = vsel %vm2166, %v2155, 0.0
    %v2172 = vsel %vm2166, %v2157, 0.0
    %v2173 = vsel %vm2166, %v2159, 0.0
    %v2174 = vsel %vm2166, %v2161, 0.0
    %v2175 = vsel %vm47, %v2167, 0.0
    %v2176 = vsel %vm47, %v2168, 0.0
    %v2177 = vsel %vm47, %v2169, 0.0
    %v2178 = vsel %vm47, %v2170, 0.0
    %v2179 = vld [vmem:[%s2 + $0x1e0] sm:$0xff]
    %v2180 = vld [vmem:[%s2 + $0x1e8] sm:$0xff]
    %v2181 = vld [vmem:[%s2 + $0x1f0] sm:$0xff]
    %v2182 = vld [vmem:[%s2 + $0x1f8] sm:$0xff]
    %2191 = vrot.lane.b32.xlu0 %v2167, 127
    %v2192 = vpop.permute.xlu0 %2191
    %2193 = vrot.lane.b32.xlu0 %v2171, 127
    %v2194 = vpop.permute.xlu0 %2193
    %2195 = vrot.lane.b32.xlu0 %v2168, 127
    %v2196 = vpop.permute.xlu0 %2195
    %2197 = vrot.lane.b32.xlu0 %v2172, 127
    %v2198 = vpop.permute.xlu0 %2197
    %2199 = vrot.lane.b32.xlu0 %v2169, 127
    %v2200 = vpop.permute.xlu0 %2199
    %2201 = vrot.lane.b32.xlu0 %v2173, 127
    %v2202 = vpop.permute.xlu0 %2201
    %2203 = vrot.lane.b32.xlu0 %v2170, 127
    %v2204 = vpop.permute.xlu0 %2203
    %2205 = vrot.lane.b32.xlu0 %v2174, 127
    %v2206 = vpop.permute.xlu0 %2205
    %v2207 = vsel %vm54, %v2192, %v2194
    %v2208 = vsel %vm54, %v2196, %v2198
    %v2209 = vsel %vm54, %v2200, %v2202
    %v2210 = vsel %vm54, %v2204, %v2206
    %v2216 = vsel %vm731, %v2181, 0
    %v2219 = vsel %vm731, %v2182, 0
    %2221 = vmatprep.subr.mxu0 0.0
    %2222 = vmatpush1.msra.mxu0 0.0
    %2223 = vmatprep.subr.mxu0 0.0
    %2224 = vmatpush1.msra.mxu0 0.0
    %2225 = vmatprep.subr.mxu0 0.0
    %2226 = vmatpush1.msra.mxu0 0.0
    %2227 = vmatprep.subr.mxu0 0.0
    %2228 = vmatpush1.msra.mxu0 0.0
    %2229 = vmatprep.subr.mxu0 0.0
    %2230 = vmatpush1.msra.mxu0 0.0
    %2231 = vmatprep.subr.mxu0 0.0
    %2232 = vmatpush1.msra.mxu0 0.0
    %2233 = vmatprep.subr.mxu0 0.0
    %2234 = vmatpush1.msra.mxu0 0.0
    %2235 = vmatprep.subr.mxu0 0.0
    %2236 = vmatpush1.msra.mxu0 0.0
    %2237 = vmatprep.subr.mxu0 0.0
    %2238 = vmatpush1.msra.mxu0 0.0
    %2239 = vmatprep.subr.mxu0 0.0
    %2240 = vmatpush1.msra.mxu0 0.0
    %2241 = vmatprep.subr.mxu0 0.0
    %2242 = vmatpush1.msra.mxu0 0.0
    %2243 = vmatprep.subr.mxu0 0.0
    %2244 = vmatpush1.msra.mxu0 0.0
    %2245 = vmatprep.subr.mxu0 0.0
    %2246 = vmatpush1.msra.mxu0 %v2210
    %2247 = vmatprep.subr.mxu0 0.0
    %2248 = vmatpush1.msra.mxu0 %v2209
    %2249 = vmatprep.subr.mxu0 0.0
    %2250 = vmatpush1.msra.mxu0 %v2208
    %2251 = vmatprep.subr.mxu0 0.0
    %2252 = vmatpush1.msra.mxu0 %v2207
    %2253 = vmatprep.subr.mxu0 0.0
    %2254 = vmatpush2.msra.mxu0 0.0
    %2255 = vmatprep.subr.mxu0 0.0
    %2256 = vmatpush2.msra.mxu0 0.0
    %2257 = vmatprep.subr.mxu0 0.0
    %2258 = vmatpush2.msra.mxu0 0.0
    %2259 = vmatprep.subr.mxu0 0.0
    %2260 = vmatpush2.msra.mxu0 0.0
    %2261 = vmatprep.subr.mxu0 0.0
    %2262 = vmatpush2.msra.mxu0 0.0
    %2263 = vmatprep.subr.mxu0 0.0
    %2264 = vmatpush2.msra.mxu0 0.0
    %2265 = vmatprep.subr.mxu0 0.0
    %2266 = vmatpush2.msra.mxu0 0.0
    %2267 = vmatprep.subr.mxu0 0.0
    %2268 = vmatpush2.msra.mxu0 0.0
    %2269 = vmatprep.subr.mxu0 0.0
    %2270 = vmatpush2.msra.mxu0 0.0
    %2271 = vmatprep.subr.mxu0 0.0
    %2272 = vmatpush2.msra.mxu0 0.0
    %2273 = vmatprep.subr.mxu0 0.0
    %2274 = vmatpush2.msra.mxu0 0.0
    %2275 = vmatprep.subr.mxu0 0.0
    %2276 = vmatpush2.msra.mxu0 0.0
    %2277 = vmatprep.subr.mxu0 0.0
    %2278 = vmatpush2.msra.mxu0 0.0
    %2279 = vmatprep.subr.mxu0 0.0
    %2280 = vmatpush2.msra.mxu0 0.0
    %2281 = vmatprep.subr.mxu0 0.0
    %2282 = vmatpush2.msra.mxu0 0.0
    %2283 = vmatprep.subr.mxu0 0.0
    %2284 = vmatpush2.msra.mxu0 0.0
    %2285 = vmatprep.mubr.f32.mxu0 0.0
    %2286 = vmatmul.mubr.f32.gmra.mxu0 %v2216
    %v2287 = vpop.f32.mrf.mxu0
    %v2288 = vadd.f32 0.0, %v2287
    %v2289 = vpop.f32.mrf.mxu0
    %2290 = vmatprep.mubr.f32.mxu0 0.0
    %2291 = vmatmul.mubr.f32.gmra.mxu0 %v2219
    %v2292 = vpop.f32.mrf.mxu0
    %v2293 = vadd.f32 0.0, %v2292
    %v2294 = vpop.f32.mrf.mxu0
    %2295 = vdwg.mxu0
    %v2297 = vsel %vm731, %v2179, 0
    %v2300 = vsel %vm731, %v2180, 0
    %2302 = vmatprep.subr.mxu0 0.0
    %2303 = vmatpush1.msra.mxu0 0.0
    %2304 = vmatprep.subr.mxu0 0.0
    %2305 = vmatpush1.msra.mxu0 0.0
    %2306 = vmatprep.subr.mxu0 0.0
    %2307 = vmatpush1.msra.mxu0 0.0
    %2308 = vmatprep.subr.mxu0 0.0
    %2309 = vmatpush1.msra.mxu0 0.0
    %2310 = vmatprep.subr.mxu0 0.0
    %2311 = vmatpush1.msra.mxu0 0.0
    %2312 = vmatprep.subr.mxu0 0.0
    %2313 = vmatpush1.msra.mxu0 0.0
    %2314 = vmatprep.subr.mxu0 0.0
    %2315 = vmatpush1.msra.mxu0 0.0
    %2316 = vmatprep.subr.mxu0 0.0
    %2317 = vmatpush1.msra.mxu0 0.0
    %2318 = vmatprep.subr.mxu0 0.0
    %2319 = vmatpush1.msra.mxu0 0.0
    %2320 = vmatprep.subr.mxu0 0.0
    %2321 = vmatpush1.msra.mxu0 0.0
    %2322 = vmatprep.subr.mxu0 0.0
    %2323 = vmatpush1.msra.mxu0 0.0
    %2324 = vmatprep.subr.mxu0 0.0
    %2325 = vmatpush1.msra.mxu0 0.0
    %2326 = vmatprep.subr.mxu0 0.0
    %2327 = vmatpush1.msra.mxu0 %v2178
    %2328 = vmatprep.subr.mxu0 0.0
    %2329 = vmatpush1.msra.mxu0 %v2177
    %2330 = vmatprep.subr.mxu0 0.0
    %2331 = vmatpush1.msra.mxu0 %v2176
    %2332 = vmatprep.subr.mxu0 0.0
    %2333 = vmatpush1.msra.mxu0 %v2175
    %2334 = vmatprep.subr.mxu0 0.0
    %2335 = vmatpush2.msra.mxu0 0.0
    %2336 = vmatprep.subr.mxu0 0.0
    %2337 = vmatpush2.msra.mxu0 0.0
    %2338 = vmatprep.subr.mxu0 0.0
    %2339 = vmatpush2.msra.mxu0 0.0
    %2340 = vmatprep.subr.mxu0 0.0
    %2341 = vmatpush2.msra.mxu0 0.0
    %2342 = vmatprep.subr.mxu0 0.0
    %2343 = vmatpush2.msra.mxu0 0.0
    %2344 = vmatprep.subr.mxu0 0.0
    %2345 = vmatpush2.msra.mxu0 0.0
    %2346 = vmatprep.subr.mxu0 0.0
    %2347 = vmatpush2.msra.mxu0 0.0
    %2348 = vmatprep.subr.mxu0 0.0
    %2349 = vmatpush2.msra.mxu0 0.0
    %2350 = vmatprep.subr.mxu0 0.0
    %2351 = vmatpush2.msra.mxu0 0.0
    %2352 = vmatprep.subr.mxu0 0.0
    %2353 = vmatpush2.msra.mxu0 0.0
    %2354 = vmatprep.subr.mxu0 0.0
    %2355 = vmatpush2.msra.mxu0 0.0
    %2356 = vmatprep.subr.mxu0 0.0
    %2357 = vmatpush2.msra.mxu0 0.0
    %2358 = vmatprep.subr.mxu0 0.0
    %2359 = vmatpush2.msra.mxu0 0.0
    %2360 = vmatprep.subr.mxu0 0.0
    %2361 = vmatpush2.msra.mxu0 0.0
    %2362 = vmatprep.subr.mxu0 0.0
    %2363 = vmatpush2.msra.mxu0 0.0
    %2364 = vmatprep.subr.mxu0 0.0
    %2365 = vmatpush2.msra.mxu0 0.0
    %2366 = vmatprep.mubr.f32.mxu0 0.0
    %2367 = vmatmul.mubr.f32.gmra.mxu0 %v2297
    %v2368 = vpop.f32.mrf.mxu0
    %v2369 = vadd.f32 %v2288, %v2368
    %v2370 = vpop.f32.mrf.mxu0
    %2371 = vmatprep.mubr.f32.mxu0 0.0
    %2372 = vmatmul.mubr.f32.gmra.mxu0 %v2300
    %v2373 = vpop.f32.mrf.mxu0
    %v2374 = vadd.f32 %v2293, %v2373
    %v2375 = vpop.f32.mrf.mxu0
    %2376 = vdwg.mxu0
    %2377 = vrot.lane.b32.xlu0 %v2167, 126
    %v2378 = vpop.permute.xlu0 %2377
    %2379 = vrot.lane.b32.xlu0 %v2171, 126
    %v2380 = vpop.permute.xlu0 %2379
    %2381 = vrot.lane.b32.xlu0 %v2168, 126
    %v2382 = vpop.permute.xlu0 %2381
    %2383 = vrot.lane.b32.xlu0 %v2172, 126
    %v2384 = vpop.permute.xlu0 %2383
    %2385 = vrot.lane.b32.xlu0 %v2169, 126
    %v2386 = vpop.permute.xlu0 %2385
    %2387 = vrot.lane.b32.xlu0 %v2173, 126
    %v2388 = vpop.permute.xlu0 %2387
    %2389 = vrot.lane.b32.xlu0 %v2170, 126
    %v2390 = vpop.permute.xlu0 %2389
    %2391 = vrot.lane.b32.xlu0 %v2174, 126
    %v2392 = vpop.permute.xlu0 %2391
    %v2393 = vsel %vm265, %v2378, %v2380
    %v2394 = vsel %vm265, %v2382, %v2384
    %v2395 = vsel %vm265, %v2386, %v2388
    %v2396 = vsel %vm265, %v2390, %v2392
    %v2401 = vsel %vm374, %v2393, 0.0
    %v2402 = vsel %vm374, %v2394, 0.0
    %v2403 = vsel %vm374, %v2395, 0.0
    %v2404 = vsel %vm374, %v2396, 0.0
    %v2405 = vld [vmem:[%s2 + $0x200] sm:$0xff]
    %v2406 = vld [vmem:[%s2 + $0x208] sm:$0xff]
    %v2408 = vsel %vm731, %v2405, 0
    %v2411 = vsel %vm731, %v2406, 0
    %2413 = vmatprep.subr.mxu0 0.0
    %2414 = vmatpush1.msra.mxu0 0.0
    %2415 = vmatprep.subr.mxu0 0.0
    %2416 = vmatpush1.msra.mxu0 0.0
    %2417 = vmatprep.subr.mxu0 0.0
    %2418 = vmatpush1.msra.mxu0 0.0
    %2419 = vmatprep.subr.mxu0 0.0
    %2420 = vmatpush1.msra.mxu0 0.0
    %2421 = vmatprep.subr.mxu0 0.0
    %2422 = vmatpush1.msra.mxu0 0.0
    %2423 = vmatprep.subr.mxu0 0.0
    %2424 = vmatpush1.msra.mxu0 0.0
    %2425 = vmatprep.subr.mxu0 0.0
    %2426 = vmatpush1.msra.mxu0 0.0
    %2427 = vmatprep.subr.mxu0 0.0
    %2428 = vmatpush1.msra.mxu0 0.0
    %2429 = vmatprep.subr.mxu0 0.0
    %2430 = vmatpush1.msra.mxu0 0.0
    %2431 = vmatprep.subr.mxu0 0.0
    %2432 = vmatpush1.msra.mxu0 0.0
    %2433 = vmatprep.subr.mxu0 0.0
    %2434 = vmatpush1.msra.mxu0 0.0
    %2435 = vmatprep.subr.mxu0 0.0
    %2436 = vmatpush1.msra.mxu0 0.0
    %2437 = vmatprep.subr.mxu0 0.0
    %2438 = vmatpush1.msra.mxu0 %v2404
    %2439 = vmatprep.subr.mxu0 0.0
    %2440 = vmatpush1.msra.mxu0 %v2403
    %2441 = vmatprep.subr.mxu0 0.0
    %2442 = vmatpush1.msra.mxu0 %v2402
    %2443 = vmatprep.subr.mxu0 0.0
    %2444 = vmatpush1.msra.mxu0 %v2401
    %2445 = vmatprep.subr.mxu0 0.0
    %2446 = vmatpush2.msra.mxu0 0.0
    %2447 = vmatprep.subr.mxu0 0.0
    %2448 = vmatpush2.msra.mxu0 0.0
    %2449 = vmatprep.subr.mxu0 0.0
    %2450 = vmatpush2.msra.mxu0 0.0
    %2451 = vmatprep.subr.mxu0 0.0
    %2452 = vmatpush2.msra.mxu0 0.0
    %2453 = vmatprep.subr.mxu0 0.0
    %2454 = vmatpush2.msra.mxu0 0.0
    %2455 = vmatprep.subr.mxu0 0.0
    %2456 = vmatpush2.msra.mxu0 0.0
    %2457 = vmatprep.subr.mxu0 0.0
    %2458 = vmatpush2.msra.mxu0 0.0
    %2459 = vmatprep.subr.mxu0 0.0
    %2460 = vmatpush2.msra.mxu0 0.0
    %2461 = vmatprep.subr.mxu0 0.0
    %2462 = vmatpush2.msra.mxu0 0.0
    %2463 = vmatprep.subr.mxu0 0.0
    %2464 = vmatpush2.msra.mxu0 0.0
    %2465 = vmatprep.subr.mxu0 0.0
    %2466 = vmatpush2.msra.mxu0 0.0
    %2467 = vmatprep.subr.mxu0 0.0
    %2468 = vmatpush2.msra.mxu0 0.0
    %2469 = vmatprep.subr.mxu0 0.0
    %2470 = vmatpush2.msra.mxu0 0.0
    %2471 = vmatprep.subr.mxu0 0.0
    %2472 = vmatpush2.msra.mxu0 0.0
    %2473 = vmatprep.subr.mxu0 0.0
    %2474 = vmatpush2.msra.mxu0 0.0
    %2475 = vmatprep.subr.mxu0 0.0
    %2476 = vmatpush2.msra.mxu0 0.0
    %2477 = vmatprep.mubr.f32.mxu0 0.0
    %2478 = vmatmul.mubr.f32.gmra.mxu0 %v2408
    %v2479 = vpop.f32.mrf.mxu0
    %v2480 = vadd.f32 0.0, %v2479
    %v2481 = vpop.f32.mrf.mxu0
    %2482 = vmatprep.mubr.f32.mxu0 0.0
    %2483 = vmatmul.mubr.f32.gmra.mxu0 %v2411
    %v2484 = vpop.f32.mrf.mxu0
    %v2485 = vadd.f32 0.0, %v2484
    %v2486 = vpop.f32.mrf.mxu0
    %2487 = vdwg.mxu0
    %v2488 = vadd.f32 %v2369, %v2480
    %v2489 = vadd.f32 %v2374, %v2485
    %v2490 = vld [vmem:[%s3] sm:$0xff]
    %v2491 = vld [vmem:[%s3 + $0x8] sm:$0xff]
    %2493 = vset.pattern.permute.xlu0 7
    %2494 = vperm.xlu0 %2493, %v2490
    %v2495 = vpop.permute.xlu0 %2494
    %2498 = vset.pattern.permute.xlu0 7
    %2499 = vperm.xlu0 %2498, %v2491
    %v2500 = vpop.permute.xlu0 %2499
    %v2502 = vadd.f32 %v2488, %v2495
    %v2503 = vadd.f32 %v2489, %v2500
    %vm2504 = vcmp.gt.f32.partialorder %v2502, 0.0
    %vm2505 = vcmp.gt.f32.partialorder %v2503, 0.0
    %v2506 = vmin.f32 %v2502, 0.0
    %v2507 = vmin.f32 %v2503, 0.0
    %v2508 = vmul.f32 %v2506, 1.442695
    %v2509 = vpow.pop %v2508
    %v2510 = vmul.f32 %v2507, 1.442695
    %v2511 = vpow.pop %v2510
    %v2512 = vsub.f32 %v2509, 1.0
    %v2513 = vsub.f32 %v2511, 1.0
    %v2514 = vsel %vm2504, %v2502, %v2512
    %v2515 = vsel %vm2505, %v2503, %v2513
    %2516 = vset.pattern.permute.xlu0 8
    %2517 = vperm.xlu0 %2516, %v2490
    %v2518 = vpop.permute.xlu0 %2517
    %2520 = vset.pattern.permute.xlu0 8
    %2521 = vperm.xlu0 %2520, %v2491
    %v2522 = vpop.permute.xlu0 %2521
    %v2524 = vmul.f32 %v2514, %v2518
    %v2525 = vmul.f32 %v2515, %v2522
    %2526 = vset.pattern.permute.xlu0 9
    %2527 = vperm.xlu0 %2526, %v2490
    %v2528 = vpop.permute.xlu0 %2527
    %2530 = vset.pattern.permute.xlu0 9
    %2531 = vperm.xlu0 %2530, %v2491
    %v2532 = vpop.permute.xlu0 %2531
    %v2534 = vadd.f32 %v2524, %v2528
    %v2535 = vadd.f32 %v2525, %v2532
    %2538 = vrot.lane.b32.xlu0 %v2534, 1
    %v2539 = vpop.permute.xlu0 %2538
    %2540 = vrot.lane.b32.xlu0 %v2535, 1
    %v2541 = vpop.permute.xlu0 %2540
    %v2544 = vsel %vm2166, 0.0, %v2539
    %v2545 = vsel %vm2166, 0.0, %v2541
    %v2546 = vsel %vm2166, %v2539, 0.0
    %v2547 = vsel %vm2166, %v2541, 0.0
    %v2548 = vsel %vm47, %v2544, 0.0
    %v2549 = vsel %vm47, %v2545, 0.0
    %v2550 = vld [vmem:[%s2 + $0x210] sm:$0xff]
    %v2551 = vld [vmem:[%s2 + $0x218] sm:$0xff]
    %2556 = vrot.lane.b32.xlu0 %v2544, 127
    %v2557 = vpop.permute.xlu0 %2556
    %2558 = vrot.lane.b32.xlu0 %v2546, 127
    %v2559 = vpop.permute.xlu0 %2558
    %2560 = vrot.lane.b32.xlu0 %v2545, 127
    %v2561 = vpop.permute.xlu0 %2560
    %2562 = vrot.lane.b32.xlu0 %v2547, 127
    %v2563 = vpop.permute.xlu0 %2562
    %v2564 = vsel %vm54, %v2557, %v2559
    %v2565 = vsel %vm54, %v2561, %v2563
    %vm2568 = vcmask 130048
    %v2570 = vsel %vm2568, %v2551, 0
    %2572 = vmatprep.subr.mxu0 0.0
    %2573 = vmatpush1.msra.mxu0 0.0
    %2574 = vmatprep.subr.mxu0 0.0
    %2575 = vmatpush1.msra.mxu0 0.0
    %2576 = vmatprep.subr.mxu0 0.0
    %2577 = vmatpush1.msra.mxu0 0.0
    %2578 = vmatprep.subr.mxu0 0.0
    %2579 = vmatpush1.msra.mxu0 0.0
    %2580 = vmatprep.subr.mxu0 0.0
    %2581 = vmatpush1.msra.mxu0 0.0
    %2582 = vmatprep.subr.mxu0 0.0
    %2583 = vmatpush1.msra.mxu0 0.0
    %2584 = vmatprep.subr.mxu0 0.0
    %2585 = vmatpush1.msra.mxu0 0.0
    %2586 = vmatprep.subr.mxu0 0.0
    %2587 = vmatpush1.msra.mxu0 0.0
    %2588 = vmatprep.subr.mxu0 0.0
    %2589 = vmatpush1.msra.mxu0 0.0
    %2590 = vmatprep.subr.mxu0 0.0
    %2591 = vmatpush1.msra.mxu0 0.0
    %2592 = vmatprep.subr.mxu0 0.0
    %2593 = vmatpush1.msra.mxu0 0.0
    %2594 = vmatprep.subr.mxu0 0.0
    %2595 = vmatpush1.msra.mxu0 0.0
    %2596 = vmatprep.subr.mxu0 0.0
    %2597 = vmatpush1.msra.mxu0 0.0
    %2598 = vmatprep.subr.mxu0 0.0
    %2599 = vmatpush1.msra.mxu0 0.0
    %2600 = vmatprep.subr.mxu0 0.0
    %2601 = vmatpush1.msra.mxu0 %v2565
    %2602 = vmatprep.subr.mxu0 0.0
    %2603 = vmatpush1.msra.mxu0 %v2564
    %2604 = vmatprep.subr.mxu0 0.0
    %2605 = vmatpush2.msra.mxu0 0.0
    %2606 = vmatprep.subr.mxu0 0.0
    %2607 = vmatpush2.msra.mxu0 0.0
    %2608 = vmatprep.subr.mxu0 0.0
    %2609 = vmatpush2.msra.mxu0 0.0
    %2610 = vmatprep.subr.mxu0 0.0
    %2611 = vmatpush2.msra.mxu0 0.0
    %2612 = vmatprep.subr.mxu0 0.0
    %2613 = vmatpush2.msra.mxu0 0.0
    %2614 = vmatprep.subr.mxu0 0.0
    %2615 = vmatpush2.msra.mxu0 0.0
    %2616 = vmatprep.subr.mxu0 0.0
    %2617 = vmatpush2.msra.mxu0 0.0
    %2618 = vmatprep.subr.mxu0 0.0
    %2619 = vmatpush2.msra.mxu0 0.0
    %2620 = vmatprep.subr.mxu0 0.0
    %2621 = vmatpush2.msra.mxu0 0.0
    %2622 = vmatprep.subr.mxu0 0.0
    %2623 = vmatpush2.msra.mxu0 0.0
    %2624 = vmatprep.subr.mxu0 0.0
    %2625 = vmatpush2.msra.mxu0 0.0
    %2626 = vmatprep.subr.mxu0 0.0
    %2627 = vmatpush2.msra.mxu0 0.0
    %2628 = vmatprep.subr.mxu0 0.0
    %2629 = vmatpush2.msra.mxu0 0.0
    %2630 = vmatprep.subr.mxu0 0.0
    %2631 = vmatpush2.msra.mxu0 0.0
    %2632 = vmatprep.subr.mxu0 0.0
    %2633 = vmatpush2.msra.mxu0 0.0
    %2634 = vmatprep.subr.mxu0 0.0
    %2635 = vmatpush2.msra.mxu0 0.0
    %2636 = vmatprep.mubr.f32.mxu0 0.0
    %2637 = vmatmul.mubr.f32.gmra.mxu0 %v2570
    %v2638 = vpop.f32.mrf.mxu0
    %v2639 = vadd.f32 0.0, %v2638
    %v2640 = vpop.f32.mrf.mxu0
    %2641 = vdwg.mxu0
    %v2643 = vsel %vm2568, %v2550, 0
    %2645 = vmatprep.subr.mxu0 0.0
    %2646 = vmatpush1.msra.mxu0 0.0
    %2647 = vmatprep.subr.mxu0 0.0
    %2648 = vmatpush1.msra.mxu0 0.0
    %2649 = vmatprep.subr.mxu0 0.0
    %2650 = vmatpush1.msra.mxu0 0.0
    %2651 = vmatprep.subr.mxu0 0.0
    %2652 = vmatpush1.msra.mxu0 0.0
    %2653 = vmatprep.subr.mxu0 0.0
    %2654 = vmatpush1.msra.mxu0 0.0
    %2655 = vmatprep.subr.mxu0 0.0
    %2656 = vmatpush1.msra.mxu0 0.0
    %2657 = vmatprep.subr.mxu0 0.0
    %2658 = vmatpush1.msra.mxu0 0.0
    %2659 = vmatprep.subr.mxu0 0.0
    %2660 = vmatpush1.msra.mxu0 0.0
    %2661 = vmatprep.subr.mxu0 0.0
    %2662 = vmatpush1.msra.mxu0 0.0
    %2663 = vmatprep.subr.mxu0 0.0
    %2664 = vmatpush1.msra.mxu0 0.0
    %2665 = vmatprep.subr.mxu0 0.0
    %2666 = vmatpush1.msra.mxu0 0.0
    %2667 = vmatprep.subr.mxu0 0.0
    %2668 = vmatpush1.msra.mxu0 0.0
    %2669 = vmatprep.subr.mxu0 0.0
    %2670 = vmatpush1.msra.mxu0 0.0
    %2671 = vmatprep.subr.mxu0 0.0
    %2672 = vmatpush1.msra.mxu0 0.0
    %2673 = vmatprep.subr.mxu0 0.0
    %2674 = vmatpush1.msra.mxu0 %v2549
    %2675 = vmatprep.subr.mxu0 0.0
    %2676 = vmatpush1.msra.mxu0 %v2548
    %2677 = vmatprep.subr.mxu0 0.0
    %2678 = vmatpush2.msra.mxu0 0.0
    %2679 = vmatprep.subr.mxu0 0.0
    %2680 = vmatpush2.msra.mxu0 0.0
    %2681 = vmatprep.subr.mxu0 0.0
    %2682 = vmatpush2.msra.mxu0 0.0
    %2683 = vmatprep.subr.mxu0 0.0
    %2684 = vmatpush2.msra.mxu0 0.0
    %2685 = vmatprep.subr.mxu0 0.0
    %2686 = vmatpush2.msra.mxu0 0.0
    %2687 = vmatprep.subr.mxu0 0.0
    %2688 = vmatpush2.msra.mxu0 0.0
    %2689 = vmatprep.subr.mxu0 0.0
    %2690 = vmatpush2.msra.mxu0 0.0
    %2691 = vmatprep.subr.mxu0 0.0
    %2692 = vmatpush2.msra.mxu0 0.0
    %2693 = vmatprep.subr.mxu0 0.0
    %2694 = vmatpush2.msra.mxu0 0.0
    %2695 = vmatprep.subr.mxu0 0.0
    %2696 = vmatpush2.msra.mxu0 0.0
    %2697 = vmatprep.subr.mxu0 0.0
    %2698 = vmatpush2.msra.mxu0 0.0
    %2699 = vmatprep.subr.mxu0 0.0
    %2700 = vmatpush2.msra.mxu0 0.0
    %2701 = vmatprep.subr.mxu0 0.0
    %2702 = vmatpush2.msra.mxu0 0.0
    %2703 = vmatprep.subr.mxu0 0.0
    %2704 = vmatpush2.msra.mxu0 0.0
    %2705 = vmatprep.subr.mxu0 0.0
    %2706 = vmatpush2.msra.mxu0 0.0
    %2707 = vmatprep.subr.mxu0 0.0
    %2708 = vmatpush2.msra.mxu0 0.0
    %2709 = vmatprep.mubr.f32.mxu0 0.0
    %2710 = vmatmul.mubr.f32.gmra.mxu0 %v2643
    %v2711 = vpop.f32.mrf.mxu0
    %v2712 = vadd.f32 %v2639, %v2711
    %v2713 = vpop.f32.mrf.mxu0
    %2714 = vdwg.mxu0
    %2715 = vrot.lane.b32.xlu0 %v2544, 126
    %v2716 = vpop.permute.xlu0 %2715
    %2717 = vrot.lane.b32.xlu0 %v2546, 126
    %v2718 = vpop.permute.xlu0 %2717
    %2719 = vrot.lane.b32.xlu0 %v2545, 126
    %v2720 = vpop.permute.xlu0 %2719
    %2721 = vrot.lane.b32.xlu0 %v2547, 126
    %v2722 = vpop.permute.xlu0 %2721
    %v2723 = vsel %vm265, %v2716, %v2718
    %v2724 = vsel %vm265, %v2720, %v2722
    %v2727 = vsel %vm374, %v2723, 0.0
    %v2728 = vsel %vm374, %v2724, 0.0
    %v2729 = vld [vmem:[%s2 + $0x220] sm:$0xff]
    %v2731 = vsel %vm2568, %v2729, 0
    %2733 = vmatprep.subr.mxu0 0.0
    %2734 = vmatpush1.msra.mxu0 0.0
    %2735 = vmatprep.subr.mxu0 0.0
    %2736 = vmatpush1.msra.mxu0 0.0
    %2737 = vmatprep.subr.mxu0 0.0
    %2738 = vmatpush1.msra.mxu0 0.0
    %2739 = vmatprep.subr.mxu0 0.0
    %2740 = vmatpush1.msra.mxu0 0.0
    %2741 = vmatprep.subr.mxu0 0.0
    %2742 = vmatpush1.msra.mxu0 0.0
    %2743 = vmatprep.subr.mxu0 0.0
    %2744 = vmatpush1.msra.mxu0 0.0
    %2745 = vmatprep.subr.mxu0 0.0
    %2746 = vmatpush1.msra.mxu0 0.0
    %2747 = vmatprep.subr.mxu0 0.0
    %2748 = vmatpush1.msra.mxu0 0.0
    %2749 = vmatprep.subr.mxu0 0.0
    %2750 = vmatpush1.msra.mxu0 0.0
    %2751 = vmatprep.subr.mxu0 0.0
    %2752 = vmatpush1.msra.mxu0 0.0
    %2753 = vmatprep.subr.mxu0 0.0
    %2754 = vmatpush1.msra.mxu0 0.0
    %2755 = vmatprep.subr.mxu0 0.0
    %2756 = vmatpush1.msra.mxu0 0.0
    %2757 = vmatprep.subr.mxu0 0.0
    %2758 = vmatpush1.msra.mxu0 0.0
    %2759 = vmatprep.subr.mxu0 0.0
    %2760 = vmatpush1.msra.mxu0 0.0
    %2761 = vmatprep.subr.mxu0 0.0
    %2762 = vmatpush1.msra.mxu0 %v2728
    %2763 = vmatprep.subr.mxu0 0.0
    %2764 = vmatpush1.msra.mxu0 %v2727
    %2765 = vmatprep.subr.mxu0 0.0
    %2766 = vmatpush2.msra.mxu0 0.0
    %2767 = vmatprep.subr.mxu0 0.0
    %2768 = vmatpush2.msra.mxu0 0.0
    %2769 = vmatprep.subr.mxu0 0.0
    %2770 = vmatpush2.msra.mxu0 0.0
    %2771 = vmatprep.subr.mxu0 0.0
    %2772 = vmatpush2.msra.mxu0 0.0
    %2773 = vmatprep.subr.mxu0 0.0
    %2774 = vmatpush2.msra.mxu0 0.0
    %2775 = vmatprep.subr.mxu0 0.0
    %2776 = vmatpush2.msra.mxu0 0.0
    %2777 = vmatprep.subr.mxu0 0.0
    %2778 = vmatpush2.msra.mxu0 0.0
    %2779 = vmatprep.subr.mxu0 0.0
    %2780 = vmatpush2.msra.mxu0 0.0
    %2781 = vmatprep.subr.mxu0 0.0
    %2782 = vmatpush2.msra.mxu0 0.0
    %2783 = vmatprep.subr.mxu0 0.0
    %2784 = vmatpush2.msra.mxu0 0.0
    %2785 = vmatprep.subr.mxu0 0.0
    %2786 = vmatpush2.msra.mxu0 0.0
    %2787 = vmatprep.subr.mxu0 0.0
    %2788 = vmatpush2.msra.mxu0 0.0
    %2789 = vmatprep.subr.mxu0 0.0
    %2790 = vmatpush2.msra.mxu0 0.0
    %2791 = vmatprep.subr.mxu0 0.0
    %2792 = vmatpush2.msra.mxu0 0.0
    %2793 = vmatprep.subr.mxu0 0.0
    %2794 = vmatpush2.msra.mxu0 0.0
    %2795 = vmatprep.subr.mxu0 0.0
    %2796 = vmatpush2.msra.mxu0 0.0
    %2797 = vmatprep.mubr.f32.mxu0 0.0
    %2798 = vmatmul.mubr.f32.gmra.mxu0 %v2731
    %v2799 = vpop.f32.mrf.mxu0
    %v2800 = vadd.f32 0.0, %v2799
    %v2801 = vpop.f32.mrf.mxu0
    %2802 = vdwg.mxu0
    %v2803 = vadd.f32 %v2712, %v2800
    %v2804 = vld [vmem:[%s3] sm:$0xff]
    %2806 = vset.pattern.permute.xlu0 10
    %2807 = vperm.xlu0 %2806, %v2804
    %v2808 = vpop.permute.xlu0 %2807
    %v2810 = vadd.f32 %v2803, %v2808
    %vm2811 = vcmp.gt.f32.partialorder %v2810, 0.0
    %v2812 = vmin.f32 %v2810, 0.0
    %v2813 = vmul.f32 %v2812, 1.442695
    %v2814 = vpow.pop %v2813
    %v2815 = vsub.f32 %v2814, 1.0
    %v2816 = vsel %vm2811, %v2810, %v2815
    %2817 = vset.pattern.permute.xlu0 11
    %2818 = vperm.xlu0 %2817, %v2804
    %v2819 = vpop.permute.xlu0 %2818
    %v2821 = vmul.f32 %v2816, %v2819
    %2822 = vset.pattern.permute.xlu0 12
    %2823 = vperm.xlu0 %2822, %v2804
    %v2824 = vpop.permute.xlu0 %2823
    %v2826 = vadd.f32 %v2821, %v2824
    %2828 = vrot.lane.b32.xlu0 %v2826, 1
    %v2829 = vpop.permute.xlu0 %2828
    %v2831 = vsel %vm2166, 0.0, %v2829
    %v2832 = vsel %vm2166, %v2829, 0.0
    %v2833 = vsel %vm47, %v2831, 0.0
    %v2834 = vld [vmem:[%s2 + $0x228] sm:$0xf]
    %v2835 = vld [vmem:[%s2 + $0x230] sm:$0xf]
    %2838 = vrot.lane.b32.xlu0 %v2831, 127
    %v2839 = vpop.permute.xlu0 %2838
    %2840 = vrot.lane.b32.xlu0 %v2832, 127
    %v2841 = vpop.permute.xlu0 %2840
    %v2842 = vsel %vm54, %v2839, %v2841
    %v2845 = vsel %vm62, %v2835, 0
    %2847 = vmatprep.subr.mxu0 0.0
    %2848 = vmatpush1.msra.mxu0 0.0
    %2849 = vmatprep.subr.mxu0 0.0
    %2850 = vmatpush1.msra.mxu0 0.0
    %2851 = vmatprep.subr.mxu0 0.0
    %2852 = vmatpush1.msra.mxu0 0.0
    %2853 = vmatprep.subr.mxu0 0.0
    %2854 = vmatpush1.msra.mxu0 0.0
    %2855 = vmatprep.subr.mxu0 0.0
    %2856 = vmatpush1.msra.mxu0 0.0
    %2857 = vmatprep.subr.mxu0 0.0
    %2858 = vmatpush1.msra.mxu0 0.0
    %2859 = vmatprep.subr.mxu0 0.0
    %2860 = vmatpush1.msra.mxu0 0.0
    %2861 = vmatprep.subr.mxu0 0.0
    %2862 = vmatpush1.msra.mxu0 0.0
    %2863 = vmatprep.subr.mxu0 0.0
    %2864 = vmatpush1.msra.mxu0 0.0
    %2865 = vmatprep.subr.mxu0 0.0
    %2866 = vmatpush1.msra.mxu0 0.0
    %2867 = vmatprep.subr.mxu0 0.0
    %2868 = vmatpush1.msra.mxu0 0.0
    %2869 = vmatprep.subr.mxu0 0.0
    %2870 = vmatpush1.msra.mxu0 0.0
    %2871 = vmatprep.subr.mxu0 0.0
    %2872 = vmatpush1.msra.mxu0 0.0
    %2873 = vmatprep.subr.mxu0 0.0
    %2874 = vmatpush1.msra.mxu0 0.0
    %2875 = vmatprep.subr.mxu0 0.0
    %2876 = vmatpush1.msra.mxu0 0.0
    %2877 = vmatprep.subr.mxu0 0.0
    %2878 = vmatpush1.msra.mxu0 %v2842
    %2879 = vmatprep.subr.mxu0 0.0
    %2880 = vmatpush2.msra.mxu0 0.0
    %2881 = vmatprep.subr.mxu0 0.0
    %2882 = vmatpush2.msra.mxu0 0.0
    %2883 = vmatprep.subr.mxu0 0.0
    %2884 = vmatpush2.msra.mxu0 0.0
    %2885 = vmatprep.subr.mxu0 0.0
    %2886 = vmatpush2.msra.mxu0 0.0
    %2887 = vmatprep.subr.mxu0 0.0
    %2888 = vmatpush2.msra.mxu0 0.0
    %2889 = vmatprep.subr.mxu0 0.0
    %2890 = vmatpush2.msra.mxu0 0.0
    %2891 = vmatprep.subr.mxu0 0.0
    %2892 = vmatpush2.msra.mxu0 0.0
    %2893 = vmatprep.subr.mxu0 0.0
    %2894 = vmatpush2.msra.mxu0 0.0
    %2895 = vmatprep.subr.mxu0 0.0
    %2896 = vmatpush2.msra.mxu0 0.0
    %2897 = vmatprep.subr.mxu0 0.0
    %2898 = vmatpush2.msra.mxu0 0.0
    %2899 = vmatprep.subr.mxu0 0.0
    %2900 = vmatpush2.msra.mxu0 0.0
    %2901 = vmatprep.subr.mxu0 0.0
    %2902 = vmatpush2.msra.mxu0 0.0
    %2903 = vmatprep.subr.mxu0 0.0
    %2904 = vmatpush2.msra.mxu0 0.0
    %2905 = vmatprep.subr.mxu0 0.0
    %2906 = vmatpush2.msra.mxu0 0.0
    %2907 = vmatprep.subr.mxu0 0.0
    %2908 = vmatpush2.msra.mxu0 0.0
    %2909 = vmatprep.subr.mxu0 0.0
    %2910 = vmatpush2.msra.mxu0 0.0
    %2911 = vmatprep.mubr.f32.mxu0 0.0
    %2912 = vmatmul.mubr.f32.gmra.mxu0 %v2845
    %v2913 = vpop.f32.mrf.mxu0
    %v2914 = vadd.f32 0.0, %v2913
    %v2915 = vpop.f32.mrf.mxu0
    %2916 = vdwg.mxu0
    %v2918 = vsel %vm62, %v2834, 0
    %2920 = vmatprep.subr.mxu0 0.0
    %2921 = vmatpush1.msra.mxu0 0.0
    %2922 = vmatprep.subr.mxu0 0.0
    %2923 = vmatpush1.msra.mxu0 0.0
    %2924 = vmatprep.subr.mxu0 0.0
    %2925 = vmatpush1.msra.mxu0 0.0
    %2926 = vmatprep.subr.mxu0 0.0
    %2927 = vmatpush1.msra.mxu0 0.0
    %2928 = vmatprep.subr.mxu0 0.0
    %2929 = vmatpush1.msra.mxu0 0.0
    %2930 = vmatprep.subr.mxu0 0.0
    %2931 = vmatpush1.msra.mxu0 0.0
    %2932 = vmatprep.subr.mxu0 0.0
    %2933 = vmatpush1.msra.mxu0 0.0
    %2934 = vmatprep.subr.mxu0 0.0
    %2935 = vmatpush1.msra.mxu0 0.0
    %2936 = vmatprep.subr.mxu0 0.0
    %2937 = vmatpush1.msra.mxu0 0.0
    %2938 = vmatprep.subr.mxu0 0.0
    %2939 = vmatpush1.msra.mxu0 0.0
    %2940 = vmatprep.subr.mxu0 0.0
    %2941 = vmatpush1.msra.mxu0 0.0
    %2942 = vmatprep.subr.mxu0 0.0
    %2943 = vmatpush1.msra.mxu0 0.0
    %2944 = vmatprep.subr.mxu0 0.0
    %2945 = vmatpush1.msra.mxu0 0.0
    %2946 = vmatprep.subr.mxu0 0.0
    %2947 = vmatpush1.msra.mxu0 0.0
    %2948 = vmatprep.subr.mxu0 0.0
    %2949 = vmatpush1.msra.mxu0 0.0
    %2950 = vmatprep.subr.mxu0 0.0
    %2951 = vmatpush1.msra.mxu0 %v2833
    %2952 = vmatprep.subr.mxu0 0.0
    %2953 = vmatpush2.msra.mxu0 0.0
    %2954 = vmatprep.subr.mxu0 0.0
    %2955 = vmatpush2.msra.mxu0 0.0
    %2956 = vmatprep.subr.mxu0 0.0
    %2957 = vmatpush2.msra.mxu0 0.0
    %2958 = vmatprep.subr.mxu0 0.0
    %2959 = vmatpush2.msra.mxu0 0.0
    %2960 = vmatprep.subr.mxu0 0.0
    %2961 = vmatpush2.msra.mxu0 0.0
    %2962 = vmatprep.subr.mxu0 0.0
    %2963 = vmatpush2.msra.mxu0 0.0
    %2964 = vmatprep.subr.mxu0 0.0
    %2965 = vmatpush2.msra.mxu0 0.0
    %2966 = vmatprep.subr.mxu0 0.0
    %2967 = vmatpush2.msra.mxu0 0.0
    %2968 = vmatprep.subr.mxu0 0.0
    %2969 = vmatpush2.msra.mxu0 0.0
    %2970 = vmatprep.subr.mxu0 0.0
    %2971 = vmatpush2.msra.mxu0 0.0
    %2972 = vmatprep.subr.mxu0 0.0
    %2973 = vmatpush2.msra.mxu0 0.0
    %2974 = vmatprep.subr.mxu0 0.0
    %2975 = vmatpush2.msra.mxu0 0.0
    %2976 = vmatprep.subr.mxu0 0.0
    %2977 = vmatpush2.msra.mxu0 0.0
    %2978 = vmatprep.subr.mxu0 0.0
    %2979 = vmatpush2.msra.mxu0 0.0
    %2980 = vmatprep.subr.mxu0 0.0
    %2981 = vmatpush2.msra.mxu0 0.0
    %2982 = vmatprep.subr.mxu0 0.0
    %2983 = vmatpush2.msra.mxu0 0.0
    %2984 = vmatprep.mubr.f32.mxu0 0.0
    %2985 = vmatmul.mubr.f32.gmra.mxu0 %v2918
    %v2986 = vpop.f32.mrf.mxu0
    %v2987 = vadd.f32 %v2914, %v2986
    %v2988 = vpop.f32.mrf.mxu0
    %2989 = vdwg.mxu0
    %2990 = vrot.lane.b32.xlu0 %v2831, 126
    %v2991 = vpop.permute.xlu0 %2990
    %2992 = vrot.lane.b32.xlu0 %v2832, 126
    %v2993 = vpop.permute.xlu0 %2992
    %v2994 = vsel %vm265, %v2991, %v2993
    %v2996 = vsel %vm374, %v2994, 0.0
    %v2997 = vld [vmem:[%s2 + $0x238] sm:$0xf]
    %v2999 = vsel %vm62, %v2997, 0
    %3001 = vmatprep.subr.mxu0 0.0
    %3002 = vmatpush1.msra.mxu0 0.0
    %3003 = vmatprep.subr.mxu0 0.0
    %3004 = vmatpush1.msra.mxu0 0.0
    %3005 = vmatprep.subr.mxu0 0.0
    %3006 = vmatpush1.msra.mxu0 0.0
    %3007 = vmatprep.subr.mxu0 0.0
    %3008 = vmatpush1.msra.mxu0 0.0
    %3009 = vmatprep.subr.mxu0 0.0
    %3010 = vmatpush1.msra.mxu0 0.0
    %3011 = vmatprep.subr.mxu0 0.0
    %3012 = vmatpush1.msra.mxu0 0.0
    %3013 = vmatprep.subr.mxu0 0.0
    %3014 = vmatpush1.msra.mxu0 0.0
    %3015 = vmatprep.subr.mxu0 0.0
    %3016 = vmatpush1.msra.mxu0 0.0
    %3017 = vmatprep.subr.mxu0 0.0
    %3018 = vmatpush1.msra.mxu0 0.0
    %3019 = vmatprep.subr.mxu0 0.0
    %3020 = vmatpush1.msra.mxu0 0.0
    %3021 = vmatprep.subr.mxu0 0.0
    %3022 = vmatpush1.msra.mxu0 0.0
    %3023 = vmatprep.subr.mxu0 0.0
    %3024 = vmatpush1.msra.mxu0 0.0
    %3025 = vmatprep.subr.mxu0 0.0
    %3026 = vmatpush1.msra.mxu0 0.0
    %3027 = vmatprep.subr.mxu0 0.0
    %3028 = vmatpush1.msra.mxu0 0.0
    %3029 = vmatprep.subr.mxu0 0.0
    %3030 = vmatpush1.msra.mxu0 0.0
    %3031 = vmatprep.subr.mxu0 0.0
    %3032 = vmatpush1.msra.mxu0 %v2996
    %3033 = vmatprep.subr.mxu0 0.0
    %3034 = vmatpush2.msra.mxu0 0.0
    %3035 = vmatprep.subr.mxu0 0.0
    %3036 = vmatpush2.msra.mxu0 0.0
    %3037 = vmatprep.subr.mxu0 0.0
    %3038 = vmatpush2.msra.mxu0 0.0
    %3039 = vmatprep.subr.mxu0 0.0
    %3040 = vmatpush2.msra.mxu0 0.0
    %3041 = vmatprep.subr.mxu0 0.0
    %3042 = vmatpush2.msra.mxu0 0.0
    %3043 = vmatprep.subr.mxu0 0.0
    %3044 = vmatpush2.msra.mxu0 0.0
    %3045 = vmatprep.subr.mxu0 0.0
    %3046 = vmatpush2.msra.mxu0 0.0
    %3047 = vmatprep.subr.mxu0 0.0
    %3048 = vmatpush2.msra.mxu0 0.0
    %3049 = vmatprep.subr.mxu0 0.0
    %3050 = vmatpush2.msra.mxu0 0.0
    %3051 = vmatprep.subr.mxu0 0.0
    %3052 = vmatpush2.msra.mxu0 0.0
    %3053 = vmatprep.subr.mxu0 0.0
    %3054 = vmatpush2.msra.mxu0 0.0
    %3055 = vmatprep.subr.mxu0 0.0
    %3056 = vmatpush2.msra.mxu0 0.0
    %3057 = vmatprep.subr.mxu0 0.0
    %3058 = vmatpush2.msra.mxu0 0.0
    %3059 = vmatprep.subr.mxu0 0.0
    %3060 = vmatpush2.msra.mxu0 0.0
    %3061 = vmatprep.subr.mxu0 0.0
    %3062 = vmatpush2.msra.mxu0 0.0
    %3063 = vmatprep.subr.mxu0 0.0
    %3064 = vmatpush2.msra.mxu0 0.0
    %3065 = vmatprep.mubr.f32.mxu0 0.0
    %3066 = vmatmul.mubr.f32.gmra.mxu0 %v2999
    %v3067 = vpop.f32.mrf.mxu0
    %v3068 = vadd.f32 0.0, %v3067
    %v3069 = vpop.f32.mrf.mxu0
    %3070 = vdwg.mxu0
    %v3071 = vadd.f32 %v2987, %v3068
    %v3072 = vld [vmem:[%s3] sm:$0xf]
    %3074 = vset.pattern.permute.xlu0 13
    %3075 = vperm.xlu0 %3074, %v3072
    %v3076 = vpop.permute.xlu0 %3075
    %v3078 = vadd.f32 %v3071, %v3076
    %3079 = vst [vmem:[#allocation2] sm:$0xf] %v3078
    // Predicated region
    $region18: #{tpu_custom_call.1} parent=1 // pred_check
      _
    $region19: #{tpu_custom_call.1} parent=1 // pred_check_branch
      %3081 = sbr.rel (0) target = $region21
    $region20: #{tpu_custom_call.1} parent=1 // pred_region
      %s3083 = ssub.s32 64, 64
      %3084 = vsyncadd [#allocation3], %s3083
      %s3086 = sshll.u32 [#allocation2], 4
      %s3087 = int_to_ptr.vmem [resolvable:$true] %s3086
      %3089 = dma.vmem_to_hbm [thread:$0]  %s3087, 64, %s4, [#allocation3]
    $region21: #{tpu_custom_call.1} parent=1 // pred_fallthru
      _
    // Predicated region
    $region22: #{tpu_custom_call.1} parent=1 // pred_check
      _
    $region23: #{tpu_custom_call.1} parent=1 // pred_check_branch
      %3091 = sbr.rel (0) target = $region25
    $region24: #{tpu_custom_call.1} parent=1 // pred_region
      %3092 = dma.done [#allocation3], 64
    $region25: #{tpu_custom_call.1} parent=1 // pred_fallthru
      _
    %3093 = vsyncpa [#allocation3], 1

</llo_original>
